<compile_context>
chip_gen: v5e
topology: v5e:2x2
jax: 0.10.0
libtpu: 0.0.40
codegen_flags: <defaults>
</compile_context>

<pallas_src>
import functools

import jax
import jax.numpy as jnp
from jax.experimental import pallas as pl
from jax.experimental.pallas import tpu as pltpu

# dtype fed to the MXU and used for activation streams (accumulation is f32).
MATMUL_DTYPE = jnp.bfloat16


def _round_up(x, m):
    return ((x + m - 1) // m) * m


def _vmem_capacity_bytes():
    """Per-core VMEM capacity; conservative (v7x-safe) fallback if unknown."""
    try:
        return int(getattr(pltpu.get_tpu_info(), "vmem_capacity_bytes", 64 << 20))
    except Exception:
        return 64 << 20


# ----------------------------------------------------------------------------
# Tiled matmul + bias kernel:  (N, K) @ (K, V) + b   (final Linear layer).
# ----------------------------------------------------------------------------
def _matmul_bias_kernel(x_ref, w_ref, b_ref, o_ref, acc_ref):
    k = pl.program_id(2)

    @pl.when(k == 0)
    def _():
        acc_ref[...] = jnp.zeros_like(acc_ref)

    acc_ref[...] += jnp.dot(
        x_ref[...].astype(MATMUL_DTYPE),
        w_ref[...].astype(MATMUL_DTYPE),
        preferred_element_type=jnp.float32)

    @pl.when(k == pl.num_programs(2) - 1)
    def _():
        o_ref[...] = (acc_ref[...] + b_ref[...]).astype(o_ref.dtype)


def linear(x, w, b, *, tm=256, tn=1024, tk=512, out_dtype=jnp.float32):
    """x: (N, K), w: (K, V), b: (V,) or (1, V)  ->  (N, V) out_dtype.

    Activations and weights are streamed in bf16 (halves the re-read of the
    activation block across vocab tiles); accumulation and bias add are f32.
    """
    N, K = x.shape
    V = w.shape[1]
    tm = min(tm, _round_up(N, 8))
    tk = min(tk, _round_up(K, 128))
    tn = min(tn, _round_up(V, 128))
    Np, Kp, Vp = _round_up(N, tm), _round_up(K, tk), _round_up(V, tn)

    xp = jnp.pad(x.astype(MATMUL_DTYPE), ((0, Np - N), (0, Kp - K)))
    wp = jnp.pad(w.astype(MATMUL_DTYPE), ((0, Kp - K), (0, Vp - V)))
    bp = jnp.pad(b.reshape(1, -1).astype(jnp.float32), ((0, 0), (0, Vp - V)))

    out = pl.pallas_call(
        _matmul_bias_kernel,
        out_shape=jax.ShapeDtypeStruct((Np, Vp), out_dtype),
        grid_spec=pltpu.PrefetchScalarGridSpec(
            num_scalar_prefetch=0,
            grid=(Np // tm, Vp // tn, Kp // tk),
            in_specs=[
                pl.BlockSpec((tm, tk), lambda i, j, k: (i, k)),
                pl.BlockSpec((tk, tn), lambda i, j, k: (k, j)),
                pl.BlockSpec((1, tn), lambda i, j, k: (0, j)),
            ],
            out_specs=pl.BlockSpec((tm, tn), lambda i, j, k: (i, j)),
            scratch_shapes=[pltpu.VMEM((tm, tn), jnp.float32)],
        ),
        compiler_params=pltpu.CompilerParams(
            dimension_semantics=("parallel", "parallel", "arbitrary")),
    )(xp, wp, bp)
    return out[:N, :V]


# ----------------------------------------------------------------------------
# Fused LSTM layer kernel.  Each grid step:
#   1) one MXU GEMM over the whole chunk: (Tc*tB, Ep) @ (Ep, 4Hp) + bias
#      into a VMEM gate scratch (f32),
#   2) Tc serial timesteps of per-gate h @ W_hh[:, g] + activations,
#      carrying h/c in VMEM scratch.
# Grid = (batch_tiles [parallel], time_chunks [arbitrary]).
# ----------------------------------------------------------------------------
def _lstm_layer_kernel(x_ref, wih_ref, whh_ref, b_ref, h0_ref, c0_ref,
                       out_ref, hN_ref, cN_ref,
                       gates_sc, h_sc, c_sc, *, t_real, needs_mask):
    c_idx = pl.program_id(1)
    Tc, tB, Ep = x_ref.shape
    Hp = h_sc.shape[-1]

    @pl.when(c_idx == 0)
    def _():
        h_sc[...] = h0_ref[...]
        c_sc[...] = c0_ref[...]

    # Fused input projection for the whole chunk (M = Tc*tB keeps MXU busy).
    xg = jnp.dot(x_ref[...].reshape(Tc * tB, Ep), wih_ref[...],
                 preferred_element_type=jnp.float32)
    gates_sc[...] = (xg + b_ref[...]).reshape(Tc, tB, 4 * Hp)

    def _sig(z):  # sigmoid via tanh: one EUP op instead of exp + reciprocal
        return 0.5 * jnp.tanh(0.5 * z) + 0.5

    def step(tt, carry):
        h, c = carry
        hb = h.astype(whh_ref.dtype)

        def gate(k):
            # Per-gate dot + lane-aligned slice of the precomputed x-gates:
            # keeps at most ~2 (tB, Hp) gate tiles live (low vreg pressure).
            return gates_sc[tt, :, k * Hp:(k + 1) * Hp] + jnp.dot(
                hb, whh_ref[:, k * Hp:(k + 1) * Hp],
                preferred_element_type=jnp.float32)

        i_g = _sig(gate(0))
        f_g = _sig(gate(1))
        g_g = jnp.tanh(gate(2))
        o_g = _sig(gate(3))
        c_new = f_g * c + i_g * g_g
        h_new = o_g * jnp.tanh(c_new)
        if needs_mask:  # only compiled in when Tc does not divide T
            valid = (c_idx * Tc + tt) < t_real
            h_new = jnp.where(valid, h_new, h)
            c_new = jnp.where(valid, c_new, c)
        out_ref[tt] = h_new.astype(out_ref.dtype)
        return (h_new, c_new)

    h, c = jax.lax.fori_loop(0, Tc, step, (h_sc[...], c_sc[...]), unroll=True)
    h_sc[...] = h
    c_sc[...] = c

    # Resident accumulator outputs: only write on the final chunk.
    @pl.when(c_idx == pl.num_programs(1) - 1)
    def _():
        hN_ref[...] = h
        cN_ref[...] = c


def _lstm_layer_vmem_bytes(Tc, tB, Ep, Hp):
    """Estimate VMEM use of one recurrence grid step (double-buffered blocks)."""
    bf, f4 = 2, 4
    n = 0
    n += 2 * Tc * tB * Ep * bf          # x chunk (bf16), double-buffered
    n += 2 * Ep * 4 * Hp * bf           # W_ih (resident, still 2 buffers)
    n += 2 * Hp * 4 * Hp * bf           # W_hh
    n += 2 * 4 * Hp * f4                # bias
    n += 2 * 2 * tB * Hp * f4           # h0, c0
    n += 2 * Tc * tB * Hp * bf          # out chunk (bf16)
    n += 2 * 2 * tB * Hp * f4           # hN, cN
    n += Tc * tB * 4 * Hp * f4          # gate scratch (f32)
    n += 2 * tB * Hp * f4               # h/c carries
    return n


def _choose_batch_tile(Bp):
    """Bp is a multiple of 8.  Pick a tile that divides Bp (no extra padding),
    is a multiple of 8, <= 128, and leaves >= 2 batch tiles when Bp >= 32 so
    the parallel batch axis can feed both TensorCores on v7x."""
    cap = 128
    if 32 <= Bp <= 128:
        cap = Bp // 2
    best = 8
    t = 8
    while t <= min(Bp, cap):
        if Bp % t == 0:
            best = t
        t += 8
    return best


def _choose_time_chunk(T, tB, in_dim, Hp, budget_bytes):
    """Largest Tc fitting the VMEM budget; prefer minimal time padding."""
    max_tc = 1
    for Tc in range(1, min(T, 32) + 1):
        if _lstm_layer_vmem_bytes(Tc, tB, in_dim, Hp) <= budget_bytes:
            max_tc = Tc
        else:
            break
    return min(range(1, max_tc + 1), key=lambda Tc: (_round_up(T, Tc), -Tc))


def lstm_layer(x, w_ih, w_hh, bias, h0, c0, *, tB, Tc, t_real, vmem_limit_bytes):
    """One fused LSTM layer.

    x     : (Tp, Bp, Ep) bf16   layer input (time-major, padded)
    w_ih  : (Ep, 4Hp) bf16      w_hh : (Hp, 4Hp) bf16     bias : (1, 4Hp) f32
    h0,c0 : (Bp, Hp) f32
    returns out (Tp, Bp, Hp) bf16, hN (Bp, Hp) f32, cN (Bp, Hp) f32
    """
    Tp, Bp, Ep = x.shape
    Hp = h0.shape[-1]
    n_bt = Bp // tB
    n_chunks = Tp // Tc
    needs_mask = (Tp != t_real)

    kernel = functools.partial(_lstm_layer_kernel,
                               t_real=t_real, needs_mask=needs_mask)

    # TODO(synk): mark W_ih/W_hh with pipeline_mode=pl.Buffered(1) (constant
    # index maps) to drop their second VMEM buffer on v7x once validated.
    grid_spec = pltpu.PrefetchScalarGridSpec(
        num_scalar_prefetch=0,
        grid=(n_bt, n_chunks),
        in_specs=[
            pl.BlockSpec((Tc, tB, Ep), lambda bi, c: (c, bi, 0)),     # x chunk
            pl.BlockSpec((Ep, 4 * Hp), lambda bi, c: (0, 0)),         # W_ih
            pl.BlockSpec((Hp, 4 * Hp), lambda bi, c: (0, 0)),         # W_hh
            pl.BlockSpec((1, 4 * Hp), lambda bi, c: (0, 0)),          # bias
            pl.BlockSpec((tB, Hp), lambda bi, c: (bi, 0)),            # h0
            pl.BlockSpec((tB, Hp), lambda bi, c: (bi, 0)),            # c0
        ],
        out_specs=[
            pl.BlockSpec((Tc, tB, Hp), lambda bi, c: (c, bi, 0)),     # out
            pl.BlockSpec((tB, Hp), lambda bi, c: (bi, 0)),            # h_final
            pl.BlockSpec((tB, Hp), lambda bi, c: (bi, 0)),            # c_final
        ],
        scratch_shapes=[
            pltpu.VMEM((Tc, tB, 4 * Hp), jnp.float32),                # gates
            pltpu.VMEM((tB, Hp), jnp.float32),                        # h carry
            pltpu.VMEM((tB, Hp), jnp.float32),                        # c carry
        ],
    )

    out, hN, cN = pl.pallas_call(
        kernel,
        grid_spec=grid_spec,
        out_shape=(
            jax.ShapeDtypeStruct((Tp, Bp, Hp), MATMUL_DTYPE),
            jax.ShapeDtypeStruct((Bp, Hp), jnp.float32),
            jax.ShapeDtypeStruct((Bp, Hp), jnp.float32),
        ),
        compiler_params=pltpu.CompilerParams(
            dimension_semantics=("parallel", "arbitrary"),  # time is sequential
            vmem_limit_bytes=int(vmem_limit_bytes)),
    )(x, w_ih, w_hh, bias, h0, c0)
    return out, hN, cN


# ----------------------------------------------------------------------------
# Per-gate padding helpers: keep the [i|f|g|o] gate layout lane-aligned after
# padding H -> Hp.  Zero padding keeps padded h/c columns exactly 0.
# ----------------------------------------------------------------------------
def _pad_gate_matrix(w, in_dim_p, H, Hp):
    in_dim = w.shape[0]
    w4 = w.reshape(in_dim, 4, H)
    w4 = jnp.pad(w4, ((0, in_dim_p - in_dim), (0, 0), (0, Hp - H)))
    return w4.reshape(in_dim_p, 4 * Hp)


def _pad_gate_bias(bias, H, Hp):
    b4 = bias.reshape(4, H)
    b4 = jnp.pad(b4, ((0, 0), (0, Hp - H)))
    return b4.reshape(1, 4 * Hp).astype(jnp.float32)


# ----------------------------------------------------------------------------
# Full model forward (mirrors Torch_LSTM.forward)
# ----------------------------------------------------------------------------
@jax.jit
def torch_lstm_forward(params, X_train, h0, c0):
    """X_train: (B, T) int32 token ids.  h0, c0: (num_layers, B, H)."""
    B, T = X_train.shape
    E = params["embedding"].shape[1]
    H = h0.shape[-1]

    # Padded / tiled sizes.
    Bp = _round_up(B, 8)
    tB = _choose_batch_tile(Bp)
    Ep = _round_up(E, 128)
    Hp = _round_up(H, 128)

    # Generation-aware VMEM budgeting for the recurrence kernel.
    vmem_cap = _vmem_capacity_bytes()
    budget = int(vmem_cap * 0.55)
    in_dim_max = max(Ep, Hp)
    Tc = _choose_time_chunk(T, tB, in_dim_max, Hp, budget)
    Tp = _round_up(T, Tc)
    usage = _lstm_layer_vmem_bytes(Tc, tB, in_dim_max, Hp)
    vmem_limit = int(min(vmem_cap * 0.92, max(usage * 1.25, 32 << 20)))

    # Embedding gather, time-major, directly in bf16 (halves HBM traffic).
    emb = params["embedding"].astype(MATMUL_DTYPE)
    x = jnp.take(emb, X_train.T, axis=0)                          # (T, B, E) bf16
    x = jnp.pad(x, ((0, Tp - T), (0, Bp - B), (0, Ep - E)))       # (Tp, Bp, Ep)

    h_finals, c_finals = [], []
    layer_in = x
    in_dim_p = Ep
    for l in range(len(params["lstm"])):
        w_ih, w_hh, bias = params["lstm"][l]
        w_ih_p = _pad_gate_matrix(w_ih, in_dim_p, H, Hp).astype(MATMUL_DTYPE)
        w_hh_p = _pad_gate_matrix(w_hh, Hp, H, Hp).astype(MATMUL_DTYPE)
        bias_p = _pad_gate_bias(bias, H, Hp)                      # (1, 4Hp) f32
        h0_p = jnp.pad(h0[l], ((0, Bp - B), (0, Hp - H)))
        c0_p = jnp.pad(c0[l], ((0, Bp - B), (0, Hp - H)))

        layer_in, hN, cN = lstm_layer(layer_in, w_ih_p, w_hh_p, bias_p,
                                      h0_p, c0_p, tB=tB, Tc=Tc, t_real=T,
                                      vmem_limit_bytes=vmem_limit)
        h_finals.append(hN[:B, :H])
        c_finals.append(cN[:B, :H])
        in_dim_p = Hp

    # batch_first flatten:  (Tp,Bp,Hp) bf16 -> (B,T,Hp) -> (B*T, Hp)
    out = jnp.transpose(layer_in[:T, :B, :], (1, 0, 2)).reshape(B * T, Hp)
    # Padded h columns are exactly 0, so zero-padded linear weight rows keep
    # the result identical.
    w_lin = jnp.pad(params["linear_w"], ((0, Hp - H), (0, 0)))
    logits = linear(out, w_lin, params["linear_b"])
    return logits, (jnp.stack(h_finals), jnp.stack(c_finals))


# ----------------------------------------------------------------------------
# Pure-JAX reference (correctness check).  matmul_dtype lets us match the
# kernel's bf16-on-MXU / f32-accumulate numerics closely.
# ----------------------------------------------------------------------------
def reference_forward(params, X_train, h0, c0, matmul_dtype=jnp.float32):
    def mm(a, b):
        return jnp.dot(a.astype(matmul_dtype), b.astype(matmul_dtype),
                       preferred_element_type=jnp.float32)

    x = jnp.take(params["embedding"], X_train, axis=0)            # (B, T, E)
    h_finals, c_finals = [], []
    layer_in = x
    for l in range(len(params["lstm"])):
        w_ih, w_hh, bias = params["lstm"][l]

        def step(carry, x_t):
            h, c = carry
            gates = mm(x_t, w_ih) + mm(h, w_hh) + bias[0]
            i, f, g, o = jnp.split(gates, 4, axis=-1)
            i = jax.nn.sigmoid(i); f = jax.nn.sigmoid(f)
            g = jnp.tanh(g);       o = jax.nn.sigmoid(o)
            c = f * c + i * g
            h = o * jnp.tanh(c)
            return (h, c), h

        (hN, cN), out_t = jax.lax.scan(step, (h0[l], c0[l]),
                                       jnp.transpose(layer_in, (1, 0, 2)))
        layer_in = jnp.transpose(out_t, (1, 0, 2))
        h_finals.append(hN)
        c_finals.append(cN)

    B, T, H = layer_in.shape
    out_flat = layer_in.reshape(B * T, H)
    logits = mm(out_flat, params["linear_w"]) + params["linear_b"]
    return logits, (jnp.stack(h_finals), jnp.stack(c_finals))


# ----------------------------------------------------------------------------
# Deterministic parameter init (mirrors nn.Embedding / nn.LSTM / nn.Linear shapes)
# ----------------------------------------------------------------------------
def init_params(key, vocab_size, embedding_dim, hidden_dim, num_layers):
    keys = jax.random.split(key, 4 + 4 * num_layers)
    scale = 1.0 / jnp.sqrt(hidden_dim)
    params = {}
    params["embedding"] = jax.random.normal(
        keys[0], (vocab_size, embedding_dim), jnp.float32)
    lstm_params = []
    for l in range(num_layers):
        in_dim = embedding_dim if l == 0 else hidden_dim
        k_ih, k_hh, k_bi, k_bh = keys[1 + 4 * l: 5 + 4 * l]
        w_ih = jax.random.uniform(k_ih, (in_dim, 4 * hidden_dim),
                                  jnp.float32, -scale, scale)
        w_hh = jax.random.uniform(k_hh, (hidden_dim, 4 * hidden_dim),
                                  jnp.float32, -scale, scale)
        b_ih = jax.random.uniform(k_bi, (4 * hidden_dim,), jnp.float32, -scale, scale)
        b_hh = jax.random.uniform(k_bh, (4 * hidden_dim,), jnp.float32, -scale, scale)
        bias = (b_ih + b_hh).reshape(1, 4 * hidden_dim)   # PyTorch adds both biases
        lstm_params.append((w_ih, w_hh, bias))
    params["lstm"] = lstm_params
    params["linear_w"] = jax.random.uniform(
        keys[-2], (hidden_dim, vocab_size), jnp.float32, -scale, scale)
    params["linear_b"] = jax.random.uniform(
        keys[-1], (vocab_size,), jnp.float32, -scale, scale)
    return params


if __name__ == "__main__":
    vocab_size, embedding_dim, hidden_dim, num_layers = 50, 32, 32, 2
    batch, seq = 2, 8

    key = jax.random.PRNGKey(0)
    k_p, k_x, k_h, k_c = jax.random.split(key, 4)

    params = init_params(k_p, vocab_size, embedding_dim, hidden_dim, num_layers)
    X_train = jax.random.randint(k_x, (batch, seq), 0, vocab_size, jnp.int32)
    h0 = jax.random.normal(k_h, (num_layers, batch, hidden_dim), jnp.float32)
    c0 = jax.random.normal(k_c, (num_layers, batch, hidden_dim), jnp.float32)

    logits, (hN, cN) = torch_lstm_forward(params, X_train, h0, c0)
    jax.block_until_ready((logits, hN, cN))

    # Reference with matching matmul dtype (tight check of kernel mechanics).
    ref_logits, (ref_h, ref_c) = reference_forward(params, X_train, h0, c0,
                                                   MATMUL_DTYPE)
    # Pure-f32 reference (original module semantics; loose bf16 tolerance).
    f32_logits, (f32_h, f32_c) = reference_forward(params, X_train, h0, c0,
                                                   jnp.float32)

    assert logits.shape == (batch * seq, vocab_size)
    assert hN.shape == (num_layers, batch, hidden_dim)
    assert cN.shape == (num_layers, batch, hidden_dim)

    assert jnp.allclose(logits, ref_logits, atol=5e-3, rtol=5e-3)
    assert jnp.allclose(hN, ref_h, atol=5e-3, rtol=5e-3)
    assert jnp.allclose(cN, ref_c, atol=5e-3, rtol=5e-3)

    assert jnp.allclose(logits, f32_logits, atol=5e-2, rtol=5e-2)
    assert jnp.allclose(hN, f32_h, atol=5e-2, rtol=5e-2)
    assert jnp.allclose(cN, f32_c, atol=5e-2, rtol=5e-2)

    print("KERNEL_OK")
</pallas_src>

<mosaic_0001>
module attributes {stable_mosaic.version = 11 : i64} {
  func.func @_matmul_bias_kernel(%arg0: i32, %arg1: i32, %arg2: i32, %arg3: memref<16x128xbf16, #tpu.memory_space<vmem>>, %arg4: memref<128x128xbf16, #tpu.memory_space<vmem>>, %arg5: memref<1x128xf32, #tpu.memory_space<vmem>>, %arg6: memref<16x128xf32, #tpu.memory_space<vmem>>, %arg7: memref<16x128xf32, #tpu.memory_space<vmem>>) attributes {dimension_semantics = [#tpu.dimension_semantics<parallel>, #tpu.dimension_semantics<parallel>, #tpu.dimension_semantics<arbitrary>], iteration_bounds = array<i64: 1, 1, 1>, scalar_prefetch = 0 : i64, scratch_operands = 1 : i64, tpu.core_type = #tpu.core_type<tc>, window_params = [{transform_indices = @transform_0, window_bounds = array<i64: 16, 128>}, {transform_indices = @transform_1, window_bounds = array<i64: 128, 128>}, {transform_indices = @transform_2, window_bounds = array<i64: 1, 128>}, {transform_indices = @transform_3, window_bounds = array<i64: 16, 128>}]} {
    %c0_i32 = arith.constant 0 : i32
    %0 = arith.cmpi eq, %arg2, %c0_i32 : i32
    %1 = arith.extui %0 : i1 to i32
    %c0_i32_0 = arith.constant 0 : i32
    %2 = arith.cmpi ne, %1, %c0_i32_0 : i32
    scf.if %2 {
      %cst_10 = arith.constant 0.000000e+00 : f32
      %12 = vector.broadcast %cst_10 : f32 to vector<16x128xf32>
      %c0_11 = arith.constant 0 : index
      %c0_12 = arith.constant 0 : index
      %13 = vector.load %arg7[%c0_11, %c0_12] : memref<16x128xf32, #tpu.memory_space<vmem>>, vector<16x128xf32>
      tpu.vector_store %arg7[%c0_11, %c0_12], %12 {strides = array<i32>} : memref<16x128xf32, #tpu.memory_space<vmem>>, vector<16x128xf32>,
    } else {
    }
    %c0 = arith.constant 0 : index
    %c0_1 = arith.constant 0 : index
    %3 = vector.load %arg7[%c0, %c0_1] : memref<16x128xf32, #tpu.memory_space<vmem>>, vector<16x128xf32>
    %c0_2 = arith.constant 0 : index
    %c0_3 = arith.constant 0 : index
    %4 = vector.load %arg3[%c0_2, %c0_3] : memref<16x128xbf16, #tpu.memory_space<vmem>>, vector<16x128xbf16>
    %c0_4 = arith.constant 0 : index
    %c0_5 = arith.constant 0 : index
    %5 = vector.load %arg4[%c0_4, %c0_5] : memref<128x128xbf16, #tpu.memory_space<vmem>>, vector<128x128xbf16>
    %cst = arith.constant dense<0.000000e+00> : vector<16x128xf32>
    %6 = tpu.matmul %4, %5, %cst {dimension_numbers = #tpu.dot_dimension_numbers<[1], [0], [0], [1], [0, 0, 1, 1], [], []>} : vector<16x128xbf16>, vector<128x128xbf16>, vector<16x128xf32> -> vector<16x128xf32>
    %7 = arith.addf %3, %6 : vector<16x128xf32>
    %c0_6 = arith.constant 0 : index
    %c0_7 = arith.constant 0 : index
    %8 = vector.load %arg7[%c0_6, %c0_7] : memref<16x128xf32, #tpu.memory_space<vmem>>, vector<16x128xf32>
    tpu.vector_store %arg7[%c0_6, %c0_7], %7 {strides = array<i32>} : memref<16x128xf32, #tpu.memory_space<vmem>>, vector<16x128xf32>,
    %c0_i32_8 = arith.constant 0 : i32
    %9 = arith.cmpi eq, %arg2, %c0_i32_8 : i32
    %10 = arith.extui %9 : i1 to i32
    %c0_i32_9 = arith.constant 0 : i32
    %11 = arith.cmpi ne, %10, %c0_i32_9 : i32
    scf.if %11 {
      %c0_10 = arith.constant 0 : index
      %c0_11 = arith.constant 0 : index
      %12 = vector.load %arg7[%c0_10, %c0_11] : memref<16x128xf32, #tpu.memory_space<vmem>>, vector<16x128xf32>
      %c0_12 = arith.constant 0 : index
      %c0_13 = arith.constant 0 : index
      %13 = vector.load %arg5[%c0_12, %c0_13] : memref<1x128xf32, #tpu.memory_space<vmem>>, vector<1x128xf32>
      %14 = vector.broadcast %13 : vector<1x128xf32> to vector<16x128xf32>
      %15 = arith.addf %12, %14 : vector<16x128xf32>
      %c0_14 = arith.constant 0 : index
      %c0_15 = arith.constant 0 : index
      %16 = vector.load %arg6[%c0_14, %c0_15] : memref<16x128xf32, #tpu.memory_space<vmem>>, vector<16x128xf32>
      tpu.vector_store %arg6[%c0_14, %c0_15], %15 {strides = array<i32>} : memref<16x128xf32, #tpu.memory_space<vmem>>, vector<16x128xf32>,
    } else {
    }
    return
  }
  func.func @transform_0(%arg0: i32, %arg1: i32, %arg2: i32) -> (i32, i32) {
    %c0_i32 = arith.constant 0 : i32
    return %arg0, %arg2 : i32, i32
  }
  func.func @transform_1(%arg0: i32, %arg1: i32, %arg2: i32) -> (i32, i32) {
    %c0_i32 = arith.constant 0 : i32
    return %arg2, %arg1 : i32, i32
  }
  func.func @transform_2(%arg0: i32, %arg1: i32, %arg2: i32) -> (i32, i32) {
    %c0_i32 = arith.constant 0 : i32
    %c0_i32_0 = arith.constant 0 : i32
    return %c0_i32, %arg1 : i32, i32
  }
  func.func @transform_3(%arg0: i32, %arg1: i32, %arg2: i32) -> (i32, i32) {
    %c0_i32 = arith.constant 0 : i32
    return %arg0, %arg1 : i32, i32
  }
}

module attributes {stable_mosaic.version = 11 : i64} {
  func.func @_lstm_layer_kernel(%arg0: i32, %arg1: i32, %arg2: memref<8x8x128xbf16, #tpu.memory_space<vmem>>, %arg3: memref<128x512xbf16, #tpu.memory_space<vmem>>, %arg4: memref<128x512xbf16, #tpu.memory_space<vmem>>, %arg5: memref<1x512xf32, #tpu.memory_space<vmem>>, %arg6: memref<8x128xf32, #tpu.memory_space<vmem>>, %arg7: memref<8x128xf32, #tpu.memory_space<vmem>>, %arg8: memref<8x8x128xbf16, #tpu.memory_space<vmem>>, %arg9: memref<8x128xf32, #tpu.memory_space<vmem>>, %arg10: memref<8x128xf32, #tpu.memory_space<vmem>>, %arg11: memref<8x8x512xf32, #tpu.memory_space<vmem>>, %arg12: memref<8x128xf32, #tpu.memory_space<vmem>>, %arg13: memref<8x128xf32, #tpu.memory_space<vmem>>) attributes {dimension_semantics = [#tpu.dimension_semantics<parallel>, #tpu.dimension_semantics<arbitrary>], iteration_bounds = array<i64: 1, 1>, scalar_prefetch = 0 : i64, scratch_operands = 3 : i64, tpu.core_type = #tpu.core_type<tc>, window_params = [{transform_indices = @transform_0, window_bounds = array<i64: 8, 8, 128>}, {pipeline_mode = #tpu.pipeline_mode<synchronous>, transform_indices = @transform_1, window_bounds = array<i64: 128, 512>}, {pipeline_mode = #tpu.pipeline_mode<synchronous>, transform_indices = @transform_2, window_bounds = array<i64: 128, 512>}, {pipeline_mode = #tpu.pipeline_mode<synchronous>, transform_indices = @transform_3, window_bounds = array<i64: 1, 512>}, {transform_indices = @transform_4, window_bounds = array<i64: 8, 128>}, {transform_indices = @transform_5, window_bounds = array<i64: 8, 128>}, {transform_indices = @transform_6, window_bounds = array<i64: 8, 8, 128>}, {transform_indices = @transform_7, window_bounds = array<i64: 8, 128>}, {transform_indices = @transform_8, window_bounds = array<i64: 8, 128>}]} {
    %c0_i32 = arith.constant 0 : i32
    %0 = arith.cmpi eq, %arg1, %c0_i32 : i32
    %1 = arith.extui %0 : i1 to i32
    %c0_i32_0 = arith.constant 0 : i32
    %2 = arith.cmpi ne, %1, %c0_i32_0 : i32
    scf.if %2 {
      %c0_266 = arith.constant 0 : index
      %c0_267 = arith.constant 0 : index
      %475 = vector.load %arg6[%c0_266, %c0_267] : memref<8x128xf32, #tpu.memory_space<vmem>>, vector<8x128xf32>
      %c0_268 = arith.constant 0 : index
      %c0_269 = arith.constant 0 : index
      %476 = vector.load %arg12[%c0_268, %c0_269] : memref<8x128xf32, #tpu.memory_space<vmem>>, vector<8x128xf32>
      tpu.vector_store %arg12[%c0_268, %c0_269], %475 {strides = array<i32>} : memref<8x128xf32, #tpu.memory_space<vmem>>, vector<8x128xf32>,
      %c0_270 = arith.constant 0 : index
      %c0_271 = arith.constant 0 : index
      %477 = vector.load %arg7[%c0_270, %c0_271] : memref<8x128xf32, #tpu.memory_space<vmem>>, vector<8x128xf32>
      %c0_272 = arith.constant 0 : index
      %c0_273 = arith.constant 0 : index
      %478 = vector.load %arg13[%c0_272, %c0_273] : memref<8x128xf32, #tpu.memory_space<vmem>>, vector<8x128xf32>
      tpu.vector_store %arg13[%c0_272, %c0_273], %477 {strides = array<i32>} : memref<8x128xf32, #tpu.memory_space<vmem>>, vector<8x128xf32>,
    } else {
    }
    %c0 = arith.constant 0 : index
    %c0_1 = arith.constant 0 : index
    %c0_2 = arith.constant 0 : index
    %3 = vector.load %arg2[%c0, %c0_1, %c0_2] : memref<8x8x128xbf16, #tpu.memory_space<vmem>>, vector<8x8x128xbf16>
    %4 = vector.shape_cast %3 : vector<8x8x128xbf16> to vector<64x128xbf16>
    %c0_3 = arith.constant 0 : index
    %c0_4 = arith.constant 0 : index
    %5 = vector.load %arg3[%c0_3, %c0_4] : memref<128x512xbf16, #tpu.memory_space<vmem>>, vector<128x512xbf16>
    %cst = arith.constant dense<0.000000e+00> : vector<64x512xf32>
    %6 = tpu.matmul %4, %5, %cst {dimension_numbers = #tpu.dot_dimension_numbers<[1], [0], [0], [1], [0, 0, 1, 1], [], []>} : vector<64x128xbf16>, vector<128x512xbf16>, vector<64x512xf32> -> vector<64x512xf32>
    %c0_5 = arith.constant 0 : index
    %c0_6 = arith.constant 0 : index
    %7 = vector.load %arg5[%c0_5, %c0_6] : memref<1x512xf32, #tpu.memory_space<vmem>>, vector<1x512xf32>
    %8 = vector.broadcast %7 : vector<1x512xf32> to vector<64x512xf32>
    %9 = arith.addf %6, %8 : vector<64x512xf32>
    %10 = vector.shape_cast %9 : vector<64x512xf32> to vector<8x8x512xf32>
    %c0_7 = arith.constant 0 : index
    %c0_8 = arith.constant 0 : index
    %c0_9 = arith.constant 0 : index
    %11 = vector.load %arg11[%c0_7, %c0_8, %c0_9] : memref<8x8x512xf32, #tpu.memory_space<vmem>>, vector<8x8x512xf32>
    tpu.vector_store %arg11[%c0_7, %c0_8, %c0_9], %10 {strides = array<i32>} : memref<8x8x512xf32, #tpu.memory_space<vmem>>, vector<8x8x512xf32>,
    %c0_10 = arith.constant 0 : index
    %c0_11 = arith.constant 0 : index
    %12 = vector.load %arg12[%c0_10, %c0_11] : memref<8x128xf32, #tpu.memory_space<vmem>>, vector<8x128xf32>
    %c0_12 = arith.constant 0 : index
    %c0_13 = arith.constant 0 : index
    %13 = vector.load %arg13[%c0_12, %c0_13] : memref<8x128xf32, #tpu.memory_space<vmem>>, vector<8x128xf32>
    %c0_i32_14 = arith.constant 0 : i32
    %14 = arith.truncf %12 : vector<8x128xf32> to vector<8x128xbf16>
    %15 = arith.index_cast %c0_i32_14 : i32 to index
    %c0_15 = arith.constant 0 : index
    %c0_16 = arith.constant 0 : index
    %16 = vector.load %arg11[%15, %c0_15, %c0_16] : memref<8x8x512xf32, #tpu.memory_space<vmem>>, vector<1x8x128xf32>
    %17 = vector.shape_cast %16 : vector<1x8x128xf32> to vector<8x128xf32>
    %c0_17 = arith.constant 0 : index
    %c0_18 = arith.constant 0 : index
    %18 = vector.load %arg4[%c0_17, %c0_18] : memref<128x512xbf16, #tpu.memory_space<vmem>>, vector<128x128xbf16>
    %cst_19 = arith.constant dense<0.000000e+00> : vector<8x128xf32>
    %19 = tpu.matmul %14, %18, %cst_19 {dimension_numbers = #tpu.dot_dimension_numbers<[1], [0], [0], [1], [0, 0, 1, 1], [], []>} : vector<8x128xbf16>, vector<128x128xbf16>, vector<8x128xf32> -> vector<8x128xf32>
    %20 = arith.addf %17, %19 : vector<8x128xf32>
    %cst_20 = arith.constant 5.000000e-01 : f32
    %21 = vector.broadcast %cst_20 : f32 to vector<8x128xf32>
    %22 = arith.mulf %21, %20 : vector<8x128xf32>
    %23 = math.tanh %22 : vector<8x128xf32>
    %cst_21 = arith.constant 5.000000e-01 : f32
    %24 = vector.broadcast %cst_21 : f32 to vector<8x128xf32>
    %25 = arith.mulf %24, %23 : vector<8x128xf32>
    %cst_22 = arith.constant 5.000000e-01 : f32
    %26 = vector.broadcast %cst_22 : f32 to vector<8x128xf32>
    %27 = arith.addf %25, %26 : vector<8x128xf32>
    %28 = arith.index_cast %c0_i32_14 : i32 to index
    %c0_23 = arith.constant 0 : index
    %c128 = arith.constant 128 : index
    %29 = vector.load %arg11[%28, %c0_23, %c128] : memref<8x8x512xf32, #tpu.memory_space<vmem>>, vector<1x8x128xf32>
    %30 = vector.shape_cast %29 : vector<1x8x128xf32> to vector<8x128xf32>
    %c0_24 = arith.constant 0 : index
    %c128_25 = arith.constant 128 : index
    %31 = vector.load %arg4[%c0_24, %c128_25] : memref<128x512xbf16, #tpu.memory_space<vmem>>, vector<128x128xbf16>
    %cst_26 = arith.constant dense<0.000000e+00> : vector<8x128xf32>
    %32 = tpu.matmul %14, %31, %cst_26 {dimension_numbers = #tpu.dot_dimension_numbers<[1], [0], [0], [1], [0, 0, 1, 1], [], []>} : vector<8x128xbf16>, vector<128x128xbf16>, vector<8x128xf32> -> vector<8x128xf32>
    %33 = arith.addf %30, %32 : vector<8x128xf32>
    %cst_27 = arith.constant 5.000000e-01 : f32
    %34 = vector.broadcast %cst_27 : f32 to vector<8x128xf32>
    %35 = arith.mulf %34, %33 : vector<8x128xf32>
    %36 = math.tanh %35 : vector<8x128xf32>
    %cst_28 = arith.constant 5.000000e-01 : f32
    %37 = vector.broadcast %cst_28 : f32 to vector<8x128xf32>
    %38 = arith.mulf %37, %36 : vector<8x128xf32>
    %cst_29 = arith.constant 5.000000e-01 : f32
    %39 = vector.broadcast %cst_29 : f32 to vector<8x128xf32>
    %40 = arith.addf %38, %39 : vector<8x128xf32>
    %41 = arith.index_cast %c0_i32_14 : i32 to index
    %c0_30 = arith.constant 0 : index
    %c256 = arith.constant 256 : index
    %42 = vector.load %arg11[%41, %c0_30, %c256] : memref<8x8x512xf32, #tpu.memory_space<vmem>>, vector<1x8x128xf32>
    %43 = vector.shape_cast %42 : vector<1x8x128xf32> to vector<8x128xf32>
    %c0_31 = arith.constant 0 : index
    %c256_32 = arith.constant 256 : index
    %44 = vector.load %arg4[%c0_31, %c256_32] : memref<128x512xbf16, #tpu.memory_space<vmem>>, vector<128x128xbf16>
    %cst_33 = arith.constant dense<0.000000e+00> : vector<8x128xf32>
    %45 = tpu.matmul %14, %44, %cst_33 {dimension_numbers = #tpu.dot_dimension_numbers<[1], [0], [0], [1], [0, 0, 1, 1], [], []>} : vector<8x128xbf16>, vector<128x128xbf16>, vector<8x128xf32> -> vector<8x128xf32>
    %46 = arith.addf %43, %45 : vector<8x128xf32>
    %47 = math.tanh %46 : vector<8x128xf32>
    %48 = arith.index_cast %c0_i32_14 : i32 to index
    %c0_34 = arith.constant 0 : index
    %c384 = arith.constant 384 : index
    %49 = vector.load %arg11[%48, %c0_34, %c384] : memref<8x8x512xf32, #tpu.memory_space<vmem>>, vector<1x8x128xf32>
    %50 = vector.shape_cast %49 : vector<1x8x128xf32> to vector<8x128xf32>
    %c0_35 = arith.constant 0 : index
    %c384_36 = arith.constant 384 : index
    %51 = vector.load %arg4[%c0_35, %c384_36] : memref<128x512xbf16, #tpu.memory_space<vmem>>, vector<128x128xbf16>
    %cst_37 = arith.constant dense<0.000000e+00> : vector<8x128xf32>
    %52 = tpu.matmul %14, %51, %cst_37 {dimension_numbers = #tpu.dot_dimension_numbers<[1], [0], [0], [1], [0, 0, 1, 1], [], []>} : vector<8x128xbf16>, vector<128x128xbf16>, vector<8x128xf32> -> vector<8x128xf32>
    %53 = arith.addf %50, %52 : vector<8x128xf32>
    %cst_38 = arith.constant 5.000000e-01 : f32
    %54 = vector.broadcast %cst_38 : f32 to vector<8x128xf32>
    %55 = arith.mulf %54, %53 : vector<8x128xf32>
    %56 = math.tanh %55 : vector<8x128xf32>
    %cst_39 = arith.constant 5.000000e-01 : f32
    %57 = vector.broadcast %cst_39 : f32 to vector<8x128xf32>
    %58 = arith.mulf %57, %56 : vector<8x128xf32>
    %cst_40 = arith.constant 5.000000e-01 : f32
    %59 = vector.broadcast %cst_40 : f32 to vector<8x128xf32>
    %60 = arith.addf %58, %59 : vector<8x128xf32>
    %61 = arith.mulf %40, %13 : vector<8x128xf32>
    %62 = arith.mulf %27, %47 : vector<8x128xf32>
    %63 = arith.addf %61, %62 : vector<8x128xf32>
    %64 = math.tanh %63 : vector<8x128xf32>
    %65 = arith.mulf %60, %64 : vector<8x128xf32>
    %66 = arith.truncf %65 : vector<8x128xf32> to vector<8x128xbf16>
    %67 = arith.index_cast %c0_i32_14 : i32 to index
    %c0_41 = arith.constant 0 : index
    %c0_42 = arith.constant 0 : index
    %68 = vector.load %arg8[%67, %c0_41, %c0_42] : memref<8x8x128xbf16, #tpu.memory_space<vmem>>, vector<1x8x128xbf16>
    %69 = vector.shape_cast %68 : vector<1x8x128xbf16> to vector<8x128xbf16>
    %70 = vector.shape_cast %66 : vector<8x128xbf16> to vector<1x8x128xbf16>
    tpu.vector_store %arg8[%67, %c0_41, %c0_42], %70 {strides = array<i32>} : memref<8x8x128xbf16, #tpu.memory_space<vmem>>, vector<1x8x128xbf16>,
    %c1_i32 = arith.constant 1 : i32
    %71 = arith.truncf %65 : vector<8x128xf32> to vector<8x128xbf16>
    %72 = arith.index_cast %c1_i32 : i32 to index
    %c0_43 = arith.constant 0 : index
    %c0_44 = arith.constant 0 : index
    %73 = vector.load %arg11[%72, %c0_43, %c0_44] : memref<8x8x512xf32, #tpu.memory_space<vmem>>, vector<1x8x128xf32>
    %74 = vector.shape_cast %73 : vector<1x8x128xf32> to vector<8x128xf32>
    %c0_45 = arith.constant 0 : index
    %c0_46 = arith.constant 0 : index
    %75 = vector.load %arg4[%c0_45, %c0_46] : memref<128x512xbf16, #tpu.memory_space<vmem>>, vector<128x128xbf16>
    %cst_47 = arith.constant dense<0.000000e+00> : vector<8x128xf32>
    %76 = tpu.matmul %71, %75, %cst_47 {dimension_numbers = #tpu.dot_dimension_numbers<[1], [0], [0], [1], [0, 0, 1, 1], [], []>} : vector<8x128xbf16>, vector<128x128xbf16>, vector<8x128xf32> -> vector<8x128xf32>
    %77 = arith.addf %74, %76 : vector<8x128xf32>
    %cst_48 = arith.constant 5.000000e-01 : f32
    %78 = vector.broadcast %cst_48 : f32 to vector<8x128xf32>
    %79 = arith.mulf %78, %77 : vector<8x128xf32>
    %80 = math.tanh %79 : vector<8x128xf32>
    %cst_49 = arith.constant 5.000000e-01 : f32
    %81 = vector.broadcast %cst_49 : f32 to vector<8x128xf32>
    %82 = arith.mulf %81, %80 : vector<8x128xf32>
    %cst_50 = arith.constant 5.000000e-01 : f32
    %83 = vector.broadcast %cst_50 : f32 to vector<8x128xf32>
    %84 = arith.addf %82, %83 : vector<8x128xf32>
    %85 = arith.index_cast %c1_i32 : i32 to index
    %c0_51 = arith.constant 0 : index
    %c128_52 = arith.constant 128 : index
    %86 = vector.load %arg11[%85, %c0_51, %c128_52] : memref<8x8x512xf32, #tpu.memory_space<vmem>>, vector<1x8x128xf32>
    %87 = vector.shape_cast %86 : vector<1x8x128xf32> to vector<8x128xf32>
    %c0_53 = arith.constant 0 : index
    %c128_54 = arith.constant 128 : index
    %88 = vector.load %arg4[%c0_53, %c128_54] : memref<128x512xbf16, #tpu.memory_space<vmem>>, vector<128x128xbf16>
    %cst_55 = arith.constant dense<0.000000e+00> : vector<8x128xf32>
    %89 = tpu.matmul %71, %88, %cst_55 {dimension_numbers = #tpu.dot_dimension_numbers<[1], [0], [0], [1], [0, 0, 1, 1], [], []>} : vector<8x128xbf16>, vector<128x128xbf16>, vector<8x128xf32> -> vector<8x128xf32>
    %90 = arith.addf %87, %89 : vector<8x128xf32>
    %cst_56 = arith.constant 5.000000e-01 : f32
    %91 = vector.broadcast %cst_56 : f32 to vector<8x128xf32>
    %92 = arith.mulf %91, %90 : vector<8x128xf32>
    %93 = math.tanh %92 : vector<8x128xf32>
    %cst_57 = arith.constant 5.000000e-01 : f32
    %94 = vector.broadcast %cst_57 : f32 to vector<8x128xf32>
    %95 = arith.mulf %94, %93 : vector<8x128xf32>
    %cst_58 = arith.constant 5.000000e-01 : f32
    %96 = vector.broadcast %cst_58 : f32 to vector<8x128xf32>
    %97 = arith.addf %95, %96 : vector<8x128xf32>
    %98 = arith.index_cast %c1_i32 : i32 to index
    %c0_59 = arith.constant 0 : index
    %c256_60 = arith.constant 256 : index
    %99 = vector.load %arg11[%98, %c0_59, %c256_60] : memref<8x8x512xf32, #tpu.memory_space<vmem>>, vector<1x8x128xf32>
    %100 = vector.shape_cast %99 : vector<1x8x128xf32> to vector<8x128xf32>
    %c0_61 = arith.constant 0 : index
    %c256_62 = arith.constant 256 : index
    %101 = vector.load %arg4[%c0_61, %c256_62] : memref<128x512xbf16, #tpu.memory_space<vmem>>, vector<128x128xbf16>
    %cst_63 = arith.constant dense<0.000000e+00> : vector<8x128xf32>
    %102 = tpu.matmul %71, %101, %cst_63 {dimension_numbers = #tpu.dot_dimension_numbers<[1], [0], [0], [1], [0, 0, 1, 1], [], []>} : vector<8x128xbf16>, vector<128x128xbf16>, vector<8x128xf32> -> vector<8x128xf32>
    %103 = arith.addf %100, %102 : vector<8x128xf32>
    %104 = math.tanh %103 : vector<8x128xf32>
    %105 = arith.index_cast %c1_i32 : i32 to index
    %c0_64 = arith.constant 0 : index
    %c384_65 = arith.constant 384 : index
    %106 = vector.load %arg11[%105, %c0_64, %c384_65] : memref<8x8x512xf32, #tpu.memory_space<vmem>>, vector<1x8x128xf32>
    %107 = vector.shape_cast %106 : vector<1x8x128xf32> to vector<8x128xf32>
    %c0_66 = arith.constant 0 : index
    %c384_67 = arith.constant 384 : index
    %108 = vector.load %arg4[%c0_66, %c384_67] : memref<128x512xbf16, #tpu.memory_space<vmem>>, vector<128x128xbf16>
    %cst_68 = arith.constant dense<0.000000e+00> : vector<8x128xf32>
    %109 = tpu.matmul %71, %108, %cst_68 {dimension_numbers = #tpu.dot_dimension_numbers<[1], [0], [0], [1], [0, 0, 1, 1], [], []>} : vector<8x128xbf16>, vector<128x128xbf16>, vector<8x128xf32> -> vector<8x128xf32>
    %110 = arith.addf %107, %109 : vector<8x128xf32>
    %cst_69 = arith.constant 5.000000e-01 : f32
    %111 = vector.broadcast %cst_69 : f32 to vector<8x128xf32>
    %112 = arith.mulf %111, %110 : vector<8x128xf32>
    %113 = math.tanh %112 : vector<8x128xf32>
    %cst_70 = arith.constant 5.000000e-01 : f32
    %114 = vector.broadcast %cst_70 : f32 to vector<8x128xf32>
    %115 = arith.mulf %114, %113 : vector<8x128xf32>
    %cst_71 = arith.constant 5.000000e-01 : f32
    %116 = vector.broadcast %cst_71 : f32 to vector<8x128xf32>
    %117 = arith.addf %115, %116 : vector<8x128xf32>
    %118 = arith.mulf %97, %63 : vector<8x128xf32>
    %119 = arith.mulf %84, %104 : vector<8x128xf32>
    %120 = arith.addf %118, %119 : vector<8x128xf32>
    %121 = math.tanh %120 : vector<8x128xf32>
    %122 = arith.mulf %117, %121 : vector<8x128xf32>
    %123 = arith.truncf %122 : vector<8x128xf32> to vector<8x128xbf16>
    %124 = arith.index_cast %c1_i32 : i32 to index
    %c0_72 = arith.constant 0 : index
    %c0_73 = arith.constant 0 : index
    %125 = vector.load %arg8[%124, %c0_72, %c0_73] : memref<8x8x128xbf16, #tpu.memory_space<vmem>>, vector<1x8x128xbf16>
    %126 = vector.shape_cast %125 : vector<1x8x128xbf16> to vector<8x128xbf16>
    %127 = vector.shape_cast %123 : vector<8x128xbf16> to vector<1x8x128xbf16>
    tpu.vector_store %arg8[%124, %c0_72, %c0_73], %127 {strides = array<i32>} : memref<8x8x128xbf16, #tpu.memory_space<vmem>>, vector<1x8x128xbf16>,
    %c2_i32 = arith.constant 2 : i32
    %128 = arith.truncf %122 : vector<8x128xf32> to vector<8x128xbf16>
    %129 = arith.index_cast %c2_i32 : i32 to index
    %c0_74 = arith.constant 0 : index
    %c0_75 = arith.constant 0 : index
    %130 = vector.load %arg11[%129, %c0_74, %c0_75] : memref<8x8x512xf32, #tpu.memory_space<vmem>>, vector<1x8x128xf32>
    %131 = vector.shape_cast %130 : vector<1x8x128xf32> to vector<8x128xf32>
    %c0_76 = arith.constant 0 : index
    %c0_77 = arith.constant 0 : index
    %132 = vector.load %arg4[%c0_76, %c0_77] : memref<128x512xbf16, #tpu.memory_space<vmem>>, vector<128x128xbf16>
    %cst_78 = arith.constant dense<0.000000e+00> : vector<8x128xf32>
    %133 = tpu.matmul %128, %132, %cst_78 {dimension_numbers = #tpu.dot_dimension_numbers<[1], [0], [0], [1], [0, 0, 1, 1], [], []>} : vector<8x128xbf16>, vector<128x128xbf16>, vector<8x128xf32> -> vector<8x128xf32>
    %134 = arith.addf %131, %133 : vector<8x128xf32>
    %cst_79 = arith.constant 5.000000e-01 : f32
    %135 = vector.broadcast %cst_79 : f32 to vector<8x128xf32>
    %136 = arith.mulf %135, %134 : vector<8x128xf32>
    %137 = math.tanh %136 : vector<8x128xf32>
    %cst_80 = arith.constant 5.000000e-01 : f32
    %138 = vector.broadcast %cst_80 : f32 to vector<8x128xf32>
    %139 = arith.mulf %138, %137 : vector<8x128xf32>
    %cst_81 = arith.constant 5.000000e-01 : f32
    %140 = vector.broadcast %cst_81 : f32 to vector<8x128xf32>
    %141 = arith.addf %139, %140 : vector<8x128xf32>
    %142 = arith.index_cast %c2_i32 : i32 to index
    %c0_82 = arith.constant 0 : index
    %c128_83 = arith.constant 128 : index
    %143 = vector.load %arg11[%142, %c0_82, %c128_83] : memref<8x8x512xf32, #tpu.memory_space<vmem>>, vector<1x8x128xf32>
    %144 = vector.shape_cast %143 : vector<1x8x128xf32> to vector<8x128xf32>
    %c0_84 = arith.constant 0 : index
    %c128_85 = arith.constant 128 : index
    %145 = vector.load %arg4[%c0_84, %c128_85] : memref<128x512xbf16, #tpu.memory_space<vmem>>, vector<128x128xbf16>
    %cst_86 = arith.constant dense<0.000000e+00> : vector<8x128xf32>
    %146 = tpu.matmul %128, %145, %cst_86 {dimension_numbers = #tpu.dot_dimension_numbers<[1], [0], [0], [1], [0, 0, 1, 1], [], []>} : vector<8x128xbf16>, vector<128x128xbf16>, vector<8x128xf32> -> vector<8x128xf32>
    %147 = arith.addf %144, %146 : vector<8x128xf32>
    %cst_87 = arith.constant 5.000000e-01 : f32
    %148 = vector.broadcast %cst_87 : f32 to vector<8x128xf32>
    %149 = arith.mulf %148, %147 : vector<8x128xf32>
    %150 = math.tanh %149 : vector<8x128xf32>
    %cst_88 = arith.constant 5.000000e-01 : f32
    %151 = vector.broadcast %cst_88 : f32 to vector<8x128xf32>
    %152 = arith.mulf %151, %150 : vector<8x128xf32>
    %cst_89 = arith.constant 5.000000e-01 : f32
    %153 = vector.broadcast %cst_89 : f32 to vector<8x128xf32>
    %154 = arith.addf %152, %153 : vector<8x128xf32>
    %155 = arith.index_cast %c2_i32 : i32 to index
    %c0_90 = arith.constant 0 : index
    %c256_91 = arith.constant 256 : index
    %156 = vector.load %arg11[%155, %c0_90, %c256_91] : memref<8x8x512xf32, #tpu.memory_space<vmem>>, vector<1x8x128xf32>
    %157 = vector.shape_cast %156 : vector<1x8x128xf32> to vector<8x128xf32>
    %c0_92 = arith.constant 0 : index
    %c256_93 = arith.constant 256 : index
    %158 = vector.load %arg4[%c0_92, %c256_93] : memref<128x512xbf16, #tpu.memory_space<vmem>>, vector<128x128xbf16>
    %cst_94 = arith.constant dense<0.000000e+00> : vector<8x128xf32>
    %159 = tpu.matmul %128, %158, %cst_94 {dimension_numbers = #tpu.dot_dimension_numbers<[1], [0], [0], [1], [0, 0, 1, 1], [], []>} : vector<8x128xbf16>, vector<128x128xbf16>, vector<8x128xf32> -> vector<8x128xf32>
    %160 = arith.addf %157, %159 : vector<8x128xf32>
    %161 = math.tanh %160 : vector<8x128xf32>
    %162 = arith.index_cast %c2_i32 : i32 to index
    %c0_95 = arith.constant 0 : index
    %c384_96 = arith.constant 384 : index
    %163 = vector.load %arg11[%162, %c0_95, %c384_96] : memref<8x8x512xf32, #tpu.memory_space<vmem>>, vector<1x8x128xf32>
    %164 = vector.shape_cast %163 : vector<1x8x128xf32> to vector<8x128xf32>
    %c0_97 = arith.constant 0 : index
    %c384_98 = arith.constant 384 : index
    %165 = vector.load %arg4[%c0_97, %c384_98] : memref<128x512xbf16, #tpu.memory_space<vmem>>, vector<128x128xbf16>
    %cst_99 = arith.constant dense<0.000000e+00> : vector<8x128xf32>
    %166 = tpu.matmul %128, %165, %cst_99 {dimension_numbers = #tpu.dot_dimension_numbers<[1], [0], [0], [1], [0, 0, 1, 1], [], []>} : vector<8x128xbf16>, vector<128x128xbf16>, vector<8x128xf32> -> vector<8x128xf32>
    %167 = arith.addf %164, %166 : vector<8x128xf32>
    %cst_100 = arith.constant 5.000000e-01 : f32
    %168 = vector.broadcast %cst_100 : f32 to vector<8x128xf32>
    %169 = arith.mulf %168, %167 : vector<8x128xf32>
    %170 = math.tanh %169 : vector<8x128xf32>
    %cst_101 = arith.constant 5.000000e-01 : f32
    %171 = vector.broadcast %cst_101 : f32 to vector<8x128xf32>
    %172 = arith.mulf %171, %170 : vector<8x128xf32>
    %cst_102 = arith.constant 5.000000e-01 : f32
    %173 = vector.broadcast %cst_102 : f32 to vector<8x128xf32>
    %174 = arith.addf %172, %173 : vector<8x128xf32>
    %175 = arith.mulf %154, %120 : vector<8x128xf32>
    %176 = arith.mulf %141, %161 : vector<8x128xf32>
    %177 = arith.addf %175, %176 : vector<8x128xf32>
    %178 = math.tanh %177 : vector<8x128xf32>
    %179 = arith.mulf %174, %178 : vector<8x128xf32>
    %180 = arith.truncf %179 : vector<8x128xf32> to vector<8x128xbf16>
    %181 = arith.index_cast %c2_i32 : i32 to index
    %c0_103 = arith.constant 0 : index
    %c0_104 = arith.constant 0 : index
    %182 = vector.load %arg8[%181, %c0_103, %c0_104] : memref<8x8x128xbf16, #tpu.memory_space<vmem>>, vector<1x8x128xbf16>
    %183 = vector.shape_cast %182 : vector<1x8x128xbf16> to vector<8x128xbf16>
    %184 = vector.shape_cast %180 : vector<8x128xbf16> to vector<1x8x128xbf16>
    tpu.vector_store %arg8[%181, %c0_103, %c0_104], %184 {strides = array<i32>} : memref<8x8x128xbf16, #tpu.memory_space<vmem>>, vector<1x8x128xbf16>,
    %c3_i32 = arith.constant 3 : i32
    %185 = arith.truncf %179 : vector<8x128xf32> to vector<8x128xbf16>
    %186 = arith.index_cast %c3_i32 : i32 to index
    %c0_105 = arith.constant 0 : index
    %c0_106 = arith.constant 0 : index
    %187 = vector.load %arg11[%186, %c0_105, %c0_106] : memref<8x8x512xf32, #tpu.memory_space<vmem>>, vector<1x8x128xf32>
    %188 = vector.shape_cast %187 : vector<1x8x128xf32> to vector<8x128xf32>
    %c0_107 = arith.constant 0 : index
    %c0_108 = arith.constant 0 : index
    %189 = vector.load %arg4[%c0_107, %c0_108] : memref<128x512xbf16, #tpu.memory_space<vmem>>, vector<128x128xbf16>
    %cst_109 = arith.constant dense<0.000000e+00> : vector<8x128xf32>
    %190 = tpu.matmul %185, %189, %cst_109 {dimension_numbers = #tpu.dot_dimension_numbers<[1], [0], [0], [1], [0, 0, 1, 1], [], []>} : vector<8x128xbf16>, vector<128x128xbf16>, vector<8x128xf32> -> vector<8x128xf32>
    %191 = arith.addf %188, %190 : vector<8x128xf32>
    %cst_110 = arith.constant 5.000000e-01 : f32
    %192 = vector.broadcast %cst_110 : f32 to vector<8x128xf32>
    %193 = arith.mulf %192, %191 : vector<8x128xf32>
    %194 = math.tanh %193 : vector<8x128xf32>
    %cst_111 = arith.constant 5.000000e-01 : f32
    %195 = vector.broadcast %cst_111 : f32 to vector<8x128xf32>
    %196 = arith.mulf %195, %194 : vector<8x128xf32>
    %cst_112 = arith.constant 5.000000e-01 : f32
    %197 = vector.broadcast %cst_112 : f32 to vector<8x128xf32>
    %198 = arith.addf %196, %197 : vector<8x128xf32>
    %199 = arith.index_cast %c3_i32 : i32 to index
    %c0_113 = arith.constant 0 : index
    %c128_114 = arith.constant 128 : index
    %200 = vector.load %arg11[%199, %c0_113, %c128_114] : memref<8x8x512xf32, #tpu.memory_space<vmem>>, vector<1x8x128xf32>
    %201 = vector.shape_cast %200 : vector<1x8x128xf32> to vector<8x128xf32>
    %c0_115 = arith.constant 0 : index
    %c128_116 = arith.constant 128 : index
    %202 = vector.load %arg4[%c0_115, %c128_116] : memref<128x512xbf16, #tpu.memory_space<vmem>>, vector<128x128xbf16>
    %cst_117 = arith.constant dense<0.000000e+00> : vector<8x128xf32>
    %203 = tpu.matmul %185, %202, %cst_117 {dimension_numbers = #tpu.dot_dimension_numbers<[1], [0], [0], [1], [0, 0, 1, 1], [], []>} : vector<8x128xbf16>, vector<128x128xbf16>, vector<8x128xf32> -> vector<8x128xf32>
    %204 = arith.addf %201, %203 : vector<8x128xf32>
    %cst_118 = arith.constant 5.000000e-01 : f32
    %205 = vector.broadcast %cst_118 : f32 to vector<8x128xf32>
    %206 = arith.mulf %205, %204 : vector<8x128xf32>
    %207 = math.tanh %206 : vector<8x128xf32>
    %cst_119 = arith.constant 5.000000e-01 : f32
    %208 = vector.broadcast %cst_119 : f32 to vector<8x128xf32>
    %209 = arith.mulf %208, %207 : vector<8x128xf32>
    %cst_120 = arith.constant 5.000000e-01 : f32
    %210 = vector.broadcast %cst_120 : f32 to vector<8x128xf32>
    %211 = arith.addf %209, %210 : vector<8x128xf32>
    %212 = arith.index_cast %c3_i32 : i32 to index
    %c0_121 = arith.constant 0 : index
    %c256_122 = arith.constant 256 : index
    %213 = vector.load %arg11[%212, %c0_121, %c256_122] : memref<8x8x512xf32, #tpu.memory_space<vmem>>, vector<1x8x128xf32>
    %214 = vector.shape_cast %213 : vector<1x8x128xf32> to vector<8x128xf32>
    %c0_123 = arith.constant 0 : index
    %c256_124 = arith.constant 256 : index
    %215 = vector.load %arg4[%c0_123, %c256_124] : memref<128x512xbf16, #tpu.memory_space<vmem>>, vector<128x128xbf16>
    %cst_125 = arith.constant dense<0.000000e+00> : vector<8x128xf32>
    %216 = tpu.matmul %185, %215, %cst_125 {dimension_numbers = #tpu.dot_dimension_numbers<[1], [0], [0], [1], [0, 0, 1, 1], [], []>} : vector<8x128xbf16>, vector<128x128xbf16>, vector<8x128xf32> -> vector<8x128xf32>
    %217 = arith.addf %214, %216 : vector<8x128xf32>
    %218 = math.tanh %217 : vector<8x128xf32>
    %219 = arith.index_cast %c3_i32 : i32 to index
    %c0_126 = arith.constant 0 : index
    %c384_127 = arith.constant 384 : index
    %220 = vector.load %arg11[%219, %c0_126, %c384_127] : memref<8x8x512xf32, #tpu.memory_space<vmem>>, vector<1x8x128xf32>
    %221 = vector.shape_cast %220 : vector<1x8x128xf32> to vector<8x128xf32>
    %c0_128 = arith.constant 0 : index
    %c384_129 = arith.constant 384 : index
    %222 = vector.load %arg4[%c0_128, %c384_129] : memref<128x512xbf16, #tpu.memory_space<vmem>>, vector<128x128xbf16>
    %cst_130 = arith.constant dense<0.000000e+00> : vector<8x128xf32>
    %223 = tpu.matmul %185, %222, %cst_130 {dimension_numbers = #tpu.dot_dimension_numbers<[1], [0], [0], [1], [0, 0, 1, 1], [], []>} : vector<8x128xbf16>, vector<128x128xbf16>, vector<8x128xf32> -> vector<8x128xf32>
    %224 = arith.addf %221, %223 : vector<8x128xf32>
    %cst_131 = arith.constant 5.000000e-01 : f32
    %225 = vector.broadcast %cst_131 : f32 to vector<8x128xf32>
    %226 = arith.mulf %225, %224 : vector<8x128xf32>
    %227 = math.tanh %226 : vector<8x128xf32>
    %cst_132 = arith.constant 5.000000e-01 : f32
    %228 = vector.broadcast %cst_132 : f32 to vector<8x128xf32>
    %229 = arith.mulf %228, %227 : vector<8x128xf32>
    %cst_133 = arith.constant 5.000000e-01 : f32
    %230 = vector.broadcast %cst_133 : f32 to vector<8x128xf32>
    %231 = arith.addf %229, %230 : vector<8x128xf32>
    %232 = arith.mulf %211, %177 : vector<8x128xf32>
    %233 = arith.mulf %198, %218 : vector<8x128xf32>
    %234 = arith.addf %232, %233 : vector<8x128xf32>
    %235 = math.tanh %234 : vector<8x128xf32>
    %236 = arith.mulf %231, %235 : vector<8x128xf32>
    %237 = arith.truncf %236 : vector<8x128xf32> to vector<8x128xbf16>
    %238 = arith.index_cast %c3_i32 : i32 to index
    %c0_134 = arith.constant 0 : index
    %c0_135 = arith.constant 0 : index
    %239 = vector.load %arg8[%238, %c0_134, %c0_135] : memref<8x8x128xbf16, #tpu.memory_space<vmem>>, vector<1x8x128xbf16>
    %240 = vector.shape_cast %239 : vector<1x8x128xbf16> to vector<8x128xbf16>
    %241 = vector.shape_cast %237 : vector<8x128xbf16> to vector<1x8x128xbf16>
    tpu.vector_store %arg8[%238, %c0_134, %c0_135], %241 {strides = array<i32>} : memref<8x8x128xbf16, #tpu.memory_space<vmem>>, vector<1x8x128xbf16>,
    %c4_i32 = arith.constant 4 : i32
    %242 = arith.truncf %236 : vector<8x128xf32> to vector<8x128xbf16>
    %243 = arith.index_cast %c4_i32 : i32 to index
    %c0_136 = arith.constant 0 : index
    %c0_137 = arith.constant 0 : index
    %244 = vector.load %arg11[%243, %c0_136, %c0_137] : memref<8x8x512xf32, #tpu.memory_space<vmem>>, vector<1x8x128xf32>
    %245 = vector.shape_cast %244 : vector<1x8x128xf32> to vector<8x128xf32>
    %c0_138 = arith.constant 0 : index
    %c0_139 = arith.constant 0 : index
    %246 = vector.load %arg4[%c0_138, %c0_139] : memref<128x512xbf16, #tpu.memory_space<vmem>>, vector<128x128xbf16>
    %cst_140 = arith.constant dense<0.000000e+00> : vector<8x128xf32>
    %247 = tpu.matmul %242, %246, %cst_140 {dimension_numbers = #tpu.dot_dimension_numbers<[1], [0], [0], [1], [0, 0, 1, 1], [], []>} : vector<8x128xbf16>, vector<128x128xbf16>, vector<8x128xf32> -> vector<8x128xf32>
    %248 = arith.addf %245, %247 : vector<8x128xf32>
    %cst_141 = arith.constant 5.000000e-01 : f32
    %249 = vector.broadcast %cst_141 : f32 to vector<8x128xf32>
    %250 = arith.mulf %249, %248 : vector<8x128xf32>
    %251 = math.tanh %250 : vector<8x128xf32>
    %cst_142 = arith.constant 5.000000e-01 : f32
    %252 = vector.broadcast %cst_142 : f32 to vector<8x128xf32>
    %253 = arith.mulf %252, %251 : vector<8x128xf32>
    %cst_143 = arith.constant 5.000000e-01 : f32
    %254 = vector.broadcast %cst_143 : f32 to vector<8x128xf32>
    %255 = arith.addf %253, %254 : vector<8x128xf32>
    %256 = arith.index_cast %c4_i32 : i32 to index
    %c0_144 = arith.constant 0 : index
    %c128_145 = arith.constant 128 : index
    %257 = vector.load %arg11[%256, %c0_144, %c128_145] : memref<8x8x512xf32, #tpu.memory_space<vmem>>, vector<1x8x128xf32>
    %258 = vector.shape_cast %257 : vector<1x8x128xf32> to vector<8x128xf32>
    %c0_146 = arith.constant 0 : index
    %c128_147 = arith.constant 128 : index
    %259 = vector.load %arg4[%c0_146, %c128_147] : memref<128x512xbf16, #tpu.memory_space<vmem>>, vector<128x128xbf16>
    %cst_148 = arith.constant dense<0.000000e+00> : vector<8x128xf32>
    %260 = tpu.matmul %242, %259, %cst_148 {dimension_numbers = #tpu.dot_dimension_numbers<[1], [0], [0], [1], [0, 0, 1, 1], [], []>} : vector<8x128xbf16>, vector<128x128xbf16>, vector<8x128xf32> -> vector<8x128xf32>
    %261 = arith.addf %258, %260 : vector<8x128xf32>
    %cst_149 = arith.constant 5.000000e-01 : f32
    %262 = vector.broadcast %cst_149 : f32 to vector<8x128xf32>
    %263 = arith.mulf %262, %261 : vector<8x128xf32>
    %264 = math.tanh %263 : vector<8x128xf32>
    %cst_150 = arith.constant 5.000000e-01 : f32
    %265 = vector.broadcast %cst_150 : f32 to vector<8x128xf32>
    %266 = arith.mulf %265, %264 : vector<8x128xf32>
    %cst_151 = arith.constant 5.000000e-01 : f32
    %267 = vector.broadcast %cst_151 : f32 to vector<8x128xf32>
    %268 = arith.addf %266, %267 : vector<8x128xf32>
    %269 = arith.index_cast %c4_i32 : i32 to index
    %c0_152 = arith.constant 0 : index
    %c256_153 = arith.constant 256 : index
    %270 = vector.load %arg11[%269, %c0_152, %c256_153] : memref<8x8x512xf32, #tpu.memory_space<vmem>>, vector<1x8x128xf32>
    %271 = vector.shape_cast %270 : vector<1x8x128xf32> to vector<8x128xf32>
    %c0_154 = arith.constant 0 : index
    %c256_155 = arith.constant 256 : index
    %272 = vector.load %arg4[%c0_154, %c256_155] : memref<128x512xbf16, #tpu.memory_space<vmem>>, vector<128x128xbf16>
    %cst_156 = arith.constant dense<0.000000e+00> : vector<8x128xf32>
    %273 = tpu.matmul %242, %272, %cst_156 {dimension_numbers = #tpu.dot_dimension_numbers<[1], [0], [0], [1], [0, 0, 1, 1], [], []>} : vector<8x128xbf16>, vector<128x128xbf16>, vector<8x128xf32> -> vector<8x128xf32>
    %274 = arith.addf %271, %273 : vector<8x128xf32>
    %275 = math.tanh %274 : vector<8x128xf32>
    %276 = arith.index_cast %c4_i32 : i32 to index
    %c0_157 = arith.constant 0 : index
    %c384_158 = arith.constant 384 : index
    %277 = vector.load %arg11[%276, %c0_157, %c384_158] : memref<8x8x512xf32, #tpu.memory_space<vmem>>, vector<1x8x128xf32>
    %278 = vector.shape_cast %277 : vector<1x8x128xf32> to vector<8x128xf32>
    %c0_159 = arith.constant 0 : index
    %c384_160 = arith.constant 384 : index
    %279 = vector.load %arg4[%c0_159, %c384_160] : memref<128x512xbf16, #tpu.memory_space<vmem>>, vector<128x128xbf16>
    %cst_161 = arith.constant dense<0.000000e+00> : vector<8x128xf32>
    %280 = tpu.matmul %242, %279, %cst_161 {dimension_numbers = #tpu.dot_dimension_numbers<[1], [0], [0], [1], [0, 0, 1, 1], [], []>} : vector<8x128xbf16>, vector<128x128xbf16>, vector<8x128xf32> -> vector<8x128xf32>
    %281 = arith.addf %278, %280 : vector<8x128xf32>
    %cst_162 = arith.constant 5.000000e-01 : f32
    %282 = vector.broadcast %cst_162 : f32 to vector<8x128xf32>
    %283 = arith.mulf %282, %281 : vector<8x128xf32>
    %284 = math.tanh %283 : vector<8x128xf32>
    %cst_163 = arith.constant 5.000000e-01 : f32
    %285 = vector.broadcast %cst_163 : f32 to vector<8x128xf32>
    %286 = arith.mulf %285, %284 : vector<8x128xf32>
    %cst_164 = arith.constant 5.000000e-01 : f32
    %287 = vector.broadcast %cst_164 : f32 to vector<8x128xf32>
    %288 = arith.addf %286, %287 : vector<8x128xf32>
    %289 = arith.mulf %268, %234 : vector<8x128xf32>
    %290 = arith.mulf %255, %275 : vector<8x128xf32>
    %291 = arith.addf %289, %290 : vector<8x128xf32>
    %292 = math.tanh %291 : vector<8x128xf32>
    %293 = arith.mulf %288, %292 : vector<8x128xf32>
    %294 = arith.truncf %293 : vector<8x128xf32> to vector<8x128xbf16>
    %295 = arith.index_cast %c4_i32 : i32 to index
    %c0_165 = arith.constant 0 : index
    %c0_166 = arith.constant 0 : index
    %296 = vector.load %arg8[%295, %c0_165, %c0_166] : memref<8x8x128xbf16, #tpu.memory_space<vmem>>, vector<1x8x128xbf16>
    %297 = vector.shape_cast %296 : vector<1x8x128xbf16> to vector<8x128xbf16>
    %298 = vector.shape_cast %294 : vector<8x128xbf16> to vector<1x8x128xbf16>
    tpu.vector_store %arg8[%295, %c0_165, %c0_166], %298 {strides = array<i32>} : memref<8x8x128xbf16, #tpu.memory_space<vmem>>, vector<1x8x128xbf16>,
    %c5_i32 = arith.constant 5 : i32
    %299 = arith.truncf %293 : vector<8x128xf32> to vector<8x128xbf16>
    %300 = arith.index_cast %c5_i32 : i32 to index
    %c0_167 = arith.constant 0 : index
    %c0_168 = arith.constant 0 : index
    %301 = vector.load %arg11[%300, %c0_167, %c0_168] : memref<8x8x512xf32, #tpu.memory_space<vmem>>, vector<1x8x128xf32>
    %302 = vector.shape_cast %301 : vector<1x8x128xf32> to vector<8x128xf32>
    %c0_169 = arith.constant 0 : index
    %c0_170 = arith.constant 0 : index
    %303 = vector.load %arg4[%c0_169, %c0_170] : memref<128x512xbf16, #tpu.memory_space<vmem>>, vector<128x128xbf16>
    %cst_171 = arith.constant dense<0.000000e+00> : vector<8x128xf32>
    %304 = tpu.matmul %299, %303, %cst_171 {dimension_numbers = #tpu.dot_dimension_numbers<[1], [0], [0], [1], [0, 0, 1, 1], [], []>} : vector<8x128xbf16>, vector<128x128xbf16>, vector<8x128xf32> -> vector<8x128xf32>
    %305 = arith.addf %302, %304 : vector<8x128xf32>
    %cst_172 = arith.constant 5.000000e-01 : f32
    %306 = vector.broadcast %cst_172 : f32 to vector<8x128xf32>
    %307 = arith.mulf %306, %305 : vector<8x128xf32>
    %308 = math.tanh %307 : vector<8x128xf32>
    %cst_173 = arith.constant 5.000000e-01 : f32
    %309 = vector.broadcast %cst_173 : f32 to vector<8x128xf32>
    %310 = arith.mulf %309, %308 : vector<8x128xf32>
    %cst_174 = arith.constant 5.000000e-01 : f32
    %311 = vector.broadcast %cst_174 : f32 to vector<8x128xf32>
    %312 = arith.addf %310, %311 : vector<8x128xf32>
    %313 = arith.index_cast %c5_i32 : i32 to index
    %c0_175 = arith.constant 0 : index
    %c128_176 = arith.constant 128 : index
    %314 = vector.load %arg11[%313, %c0_175, %c128_176] : memref<8x8x512xf32, #tpu.memory_space<vmem>>, vector<1x8x128xf32>
    %315 = vector.shape_cast %314 : vector<1x8x128xf32> to vector<8x128xf32>
    %c0_177 = arith.constant 0 : index
    %c128_178 = arith.constant 128 : index
    %316 = vector.load %arg4[%c0_177, %c128_178] : memref<128x512xbf16, #tpu.memory_space<vmem>>, vector<128x128xbf16>
    %cst_179 = arith.constant dense<0.000000e+00> : vector<8x128xf32>
    %317 = tpu.matmul %299, %316, %cst_179 {dimension_numbers = #tpu.dot_dimension_numbers<[1], [0], [0], [1], [0, 0, 1, 1], [], []>} : vector<8x128xbf16>, vector<128x128xbf16>, vector<8x128xf32> -> vector<8x128xf32>
    %318 = arith.addf %315, %317 : vector<8x128xf32>
    %cst_180 = arith.constant 5.000000e-01 : f32
    %319 = vector.broadcast %cst_180 : f32 to vector<8x128xf32>
    %320 = arith.mulf %319, %318 : vector<8x128xf32>
    %321 = math.tanh %320 : vector<8x128xf32>
    %cst_181 = arith.constant 5.000000e-01 : f32
    %322 = vector.broadcast %cst_181 : f32 to vector<8x128xf32>
    %323 = arith.mulf %322, %321 : vector<8x128xf32>
    %cst_182 = arith.constant 5.000000e-01 : f32
    %324 = vector.broadcast %cst_182 : f32 to vector<8x128xf32>
    %325 = arith.addf %323, %324 : vector<8x128xf32>
    %326 = arith.index_cast %c5_i32 : i32 to index
    %c0_183 = arith.constant 0 : index
    %c256_184 = arith.constant 256 : index
    %327 = vector.load %arg11[%326, %c0_183, %c256_184] : memref<8x8x512xf32, #tpu.memory_space<vmem>>, vector<1x8x128xf32>
    %328 = vector.shape_cast %327 : vector<1x8x128xf32> to vector<8x128xf32>
    %c0_185 = arith.constant 0 : index
    %c256_186 = arith.constant 256 : index
    %329 = vector.load %arg4[%c0_185, %c256_186] : memref<128x512xbf16, #tpu.memory_space<vmem>>, vector<128x128xbf16>
    %cst_187 = arith.constant dense<0.000000e+00> : vector<8x128xf32>
    %330 = tpu.matmul %299, %329, %cst_187 {dimension_numbers = #tpu.dot_dimension_numbers<[1], [0], [0], [1], [0, 0, 1, 1], [], []>} : vector<8x128xbf16>, vector<128x128xbf16>, vector<8x128xf32> -> vector<8x128xf32>
    %331 = arith.addf %328, %330 : vector<8x128xf32>
    %332 = math.tanh %331 : vector<8x128xf32>
    %333 = arith.index_cast %c5_i32 : i32 to index
    %c0_188 = arith.constant 0 : index
    %c384_189 = arith.constant 384 : index
    %334 = vector.load %arg11[%333, %c0_188, %c384_189] : memref<8x8x512xf32, #tpu.memory_space<vmem>>, vector<1x8x128xf32>
    %335 = vector.shape_cast %334 : vector<1x8x128xf32> to vector<8x128xf32>
    %c0_190 = arith.constant 0 : index
    %c384_191 = arith.constant 384 : index
    %336 = vector.load %arg4[%c0_190, %c384_191] : memref<128x512xbf16, #tpu.memory_space<vmem>>, vector<128x128xbf16>
    %cst_192 = arith.constant dense<0.000000e+00> : vector<8x128xf32>
    %337 = tpu.matmul %299, %336, %cst_192 {dimension_numbers = #tpu.dot_dimension_numbers<[1], [0], [0], [1], [0, 0, 1, 1], [], []>} : vector<8x128xbf16>, vector<128x128xbf16>, vector<8x128xf32> -> vector<8x128xf32>
    %338 = arith.addf %335, %337 : vector<8x128xf32>
    %cst_193 = arith.constant 5.000000e-01 : f32
    %339 = vector.broadcast %cst_193 : f32 to vector<8x128xf32>
    %340 = arith.mulf %339, %338 : vector<8x128xf32>
    %341 = math.tanh %340 : vector<8x128xf32>
    %cst_194 = arith.constant 5.000000e-01 : f32
    %342 = vector.broadcast %cst_194 : f32 to vector<8x128xf32>
    %343 = arith.mulf %342, %341 : vector<8x128xf32>
    %cst_195 = arith.constant 5.000000e-01 : f32
    %344 = vector.broadcast %cst_195 : f32 to vector<8x128xf32>
    %345 = arith.addf %343, %344 : vector<8x128xf32>
    %346 = arith.mulf %325, %291 : vector<8x128xf32>
    %347 = arith.mulf %312, %332 : vector<8x128xf32>
    %348 = arith.addf %346, %347 : vector<8x128xf32>
    %349 = math.tanh %348 : vector<8x128xf32>
    %350 = arith.mulf %345, %349 : vector<8x128xf32>
    %351 = arith.truncf %350 : vector<8x128xf32> to vector<8x128xbf16>
    %352 = arith.index_cast %c5_i32 : i32 to index
    %c0_196 = arith.constant 0 : index
    %c0_197 = arith.constant 0 : index
    %353 = vector.load %arg8[%352, %c0_196, %c0_197] : memref<8x8x128xbf16, #tpu.memory_space<vmem>>, vector<1x8x128xbf16>
    %354 = vector.shape_cast %353 : vector<1x8x128xbf16> to vector<8x128xbf16>
    %355 = vector.shape_cast %351 : vector<8x128xbf16> to vector<1x8x128xbf16>
    tpu.vector_store %arg8[%352, %c0_196, %c0_197], %355 {strides = array<i32>} : memref<8x8x128xbf16, #tpu.memory_space<vmem>>, vector<1x8x128xbf16>,
    %c6_i32 = arith.constant 6 : i32
    %356 = arith.truncf %350 : vector<8x128xf32> to vector<8x128xbf16>
    %357 = arith.index_cast %c6_i32 : i32 to index
    %c0_198 = arith.constant 0 : index
    %c0_199 = arith.constant 0 : index
    %358 = vector.load %arg11[%357, %c0_198, %c0_199] : memref<8x8x512xf32, #tpu.memory_space<vmem>>, vector<1x8x128xf32>
    %359 = vector.shape_cast %358 : vector<1x8x128xf32> to vector<8x128xf32>
    %c0_200 = arith.constant 0 : index
    %c0_201 = arith.constant 0 : index
    %360 = vector.load %arg4[%c0_200, %c0_201] : memref<128x512xbf16, #tpu.memory_space<vmem>>, vector<128x128xbf16>
    %cst_202 = arith.constant dense<0.000000e+00> : vector<8x128xf32>
    %361 = tpu.matmul %356, %360, %cst_202 {dimension_numbers = #tpu.dot_dimension_numbers<[1], [0], [0], [1], [0, 0, 1, 1], [], []>} : vector<8x128xbf16>, vector<128x128xbf16>, vector<8x128xf32> -> vector<8x128xf32>
    %362 = arith.addf %359, %361 : vector<8x128xf32>
    %cst_203 = arith.constant 5.000000e-01 : f32
    %363 = vector.broadcast %cst_203 : f32 to vector<8x128xf32>
    %364 = arith.mulf %363, %362 : vector<8x128xf32>
    %365 = math.tanh %364 : vector<8x128xf32>
    %cst_204 = arith.constant 5.000000e-01 : f32
    %366 = vector.broadcast %cst_204 : f32 to vector<8x128xf32>
    %367 = arith.mulf %366, %365 : vector<8x128xf32>
    %cst_205 = arith.constant 5.000000e-01 : f32
    %368 = vector.broadcast %cst_205 : f32 to vector<8x128xf32>
    %369 = arith.addf %367, %368 : vector<8x128xf32>
    %370 = arith.index_cast %c6_i32 : i32 to index
    %c0_206 = arith.constant 0 : index
    %c128_207 = arith.constant 128 : index
    %371 = vector.load %arg11[%370, %c0_206, %c128_207] : memref<8x8x512xf32, #tpu.memory_space<vmem>>, vector<1x8x128xf32>
    %372 = vector.shape_cast %371 : vector<1x8x128xf32> to vector<8x128xf32>
    %c0_208 = arith.constant 0 : index
    %c128_209 = arith.constant 128 : index
    %373 = vector.load %arg4[%c0_208, %c128_209] : memref<128x512xbf16, #tpu.memory_space<vmem>>, vector<128x128xbf16>
    %cst_210 = arith.constant dense<0.000000e+00> : vector<8x128xf32>
    %374 = tpu.matmul %356, %373, %cst_210 {dimension_numbers = #tpu.dot_dimension_numbers<[1], [0], [0], [1], [0, 0, 1, 1], [], []>} : vector<8x128xbf16>, vector<128x128xbf16>, vector<8x128xf32> -> vector<8x128xf32>
    %375 = arith.addf %372, %374 : vector<8x128xf32>
    %cst_211 = arith.constant 5.000000e-01 : f32
    %376 = vector.broadcast %cst_211 : f32 to vector<8x128xf32>
    %377 = arith.mulf %376, %375 : vector<8x128xf32>
    %378 = math.tanh %377 : vector<8x128xf32>
    %cst_212 = arith.constant 5.000000e-01 : f32
    %379 = vector.broadcast %cst_212 : f32 to vector<8x128xf32>
    %380 = arith.mulf %379, %378 : vector<8x128xf32>
    %cst_213 = arith.constant 5.000000e-01 : f32
    %381 = vector.broadcast %cst_213 : f32 to vector<8x128xf32>
    %382 = arith.addf %380, %381 : vector<8x128xf32>
    %383 = arith.index_cast %c6_i32 : i32 to index
    %c0_214 = arith.constant 0 : index
    %c256_215 = arith.constant 256 : index
    %384 = vector.load %arg11[%383, %c0_214, %c256_215] : memref<8x8x512xf32, #tpu.memory_space<vmem>>, vector<1x8x128xf32>
    %385 = vector.shape_cast %384 : vector<1x8x128xf32> to vector<8x128xf32>
    %c0_216 = arith.constant 0 : index
    %c256_217 = arith.constant 256 : index
    %386 = vector.load %arg4[%c0_216, %c256_217] : memref<128x512xbf16, #tpu.memory_space<vmem>>, vector<128x128xbf16>
    %cst_218 = arith.constant dense<0.000000e+00> : vector<8x128xf32>
    %387 = tpu.matmul %356, %386, %cst_218 {dimension_numbers = #tpu.dot_dimension_numbers<[1], [0], [0], [1], [0, 0, 1, 1], [], []>} : vector<8x128xbf16>, vector<128x128xbf16>, vector<8x128xf32> -> vector<8x128xf32>
    %388 = arith.addf %385, %387 : vector<8x128xf32>
    %389 = math.tanh %388 : vector<8x128xf32>
    %390 = arith.index_cast %c6_i32 : i32 to index
    %c0_219 = arith.constant 0 : index
    %c384_220 = arith.constant 384 : index
    %391 = vector.load %arg11[%390, %c0_219, %c384_220] : memref<8x8x512xf32, #tpu.memory_space<vmem>>, vector<1x8x128xf32>
    %392 = vector.shape_cast %391 : vector<1x8x128xf32> to vector<8x128xf32>
    %c0_221 = arith.constant 0 : index
    %c384_222 = arith.constant 384 : index
    %393 = vector.load %arg4[%c0_221, %c384_222] : memref<128x512xbf16, #tpu.memory_space<vmem>>, vector<128x128xbf16>
    %cst_223 = arith.constant dense<0.000000e+00> : vector<8x128xf32>
    %394 = tpu.matmul %356, %393, %cst_223 {dimension_numbers = #tpu.dot_dimension_numbers<[1], [0], [0], [1], [0, 0, 1, 1], [], []>} : vector<8x128xbf16>, vector<128x128xbf16>, vector<8x128xf32> -> vector<8x128xf32>
    %395 = arith.addf %392, %394 : vector<8x128xf32>
    %cst_224 = arith.constant 5.000000e-01 : f32
    %396 = vector.broadcast %cst_224 : f32 to vector<8x128xf32>
    %397 = arith.mulf %396, %395 : vector<8x128xf32>
    %398 = math.tanh %397 : vector<8x128xf32>
    %cst_225 = arith.constant 5.000000e-01 : f32
    %399 = vector.broadcast %cst_225 : f32 to vector<8x128xf32>
    %400 = arith.mulf %399, %398 : vector<8x128xf32>
    %cst_226 = arith.constant 5.000000e-01 : f32
    %401 = vector.broadcast %cst_226 : f32 to vector<8x128xf32>
    %402 = arith.addf %400, %401 : vector<8x128xf32>
    %403 = arith.mulf %382, %348 : vector<8x128xf32>
    %404 = arith.mulf %369, %389 : vector<8x128xf32>
    %405 = arith.addf %403, %404 : vector<8x128xf32>
    %406 = math.tanh %405 : vector<8x128xf32>
    %407 = arith.mulf %402, %406 : vector<8x128xf32>
    %408 = arith.truncf %407 : vector<8x128xf32> to vector<8x128xbf16>
    %409 = arith.index_cast %c6_i32 : i32 to index
    %c0_227 = arith.constant 0 : index
    %c0_228 = arith.constant 0 : index
    %410 = vector.load %arg8[%409, %c0_227, %c0_228] : memref<8x8x128xbf16, #tpu.memory_space<vmem>>, vector<1x8x128xbf16>
    %411 = vector.shape_cast %410 : vector<1x8x128xbf16> to vector<8x128xbf16>
    %412 = vector.shape_cast %408 : vector<8x128xbf16> to vector<1x8x128xbf16>
    tpu.vector_store %arg8[%409, %c0_227, %c0_228], %412 {strides = array<i32>} : memref<8x8x128xbf16, #tpu.memory_space<vmem>>, vector<1x8x128xbf16>,
    %c7_i32 = arith.constant 7 : i32
    %413 = arith.truncf %407 : vector<8x128xf32> to vector<8x128xbf16>
    %414 = arith.index_cast %c7_i32 : i32 to index
    %c0_229 = arith.constant 0 : index
    %c0_230 = arith.constant 0 : index
    %415 = vector.load %arg11[%414, %c0_229, %c0_230] : memref<8x8x512xf32, #tpu.memory_space<vmem>>, vector<1x8x128xf32>
    %416 = vector.shape_cast %415 : vector<1x8x128xf32> to vector<8x128xf32>
    %c0_231 = arith.constant 0 : index
    %c0_232 = arith.constant 0 : index
    %417 = vector.load %arg4[%c0_231, %c0_232] : memref<128x512xbf16, #tpu.memory_space<vmem>>, vector<128x128xbf16>
    %cst_233 = arith.constant dense<0.000000e+00> : vector<8x128xf32>
    %418 = tpu.matmul %413, %417, %cst_233 {dimension_numbers = #tpu.dot_dimension_numbers<[1], [0], [0], [1], [0, 0, 1, 1], [], []>} : vector<8x128xbf16>, vector<128x128xbf16>, vector<8x128xf32> -> vector<8x128xf32>
    %419 = arith.addf %416, %418 : vector<8x128xf32>
    %cst_234 = arith.constant 5.000000e-01 : f32
    %420 = vector.broadcast %cst_234 : f32 to vector<8x128xf32>
    %421 = arith.mulf %420, %419 : vector<8x128xf32>
    %422 = math.tanh %421 : vector<8x128xf32>
    %cst_235 = arith.constant 5.000000e-01 : f32
    %423 = vector.broadcast %cst_235 : f32 to vector<8x128xf32>
    %424 = arith.mulf %423, %422 : vector<8x128xf32>
    %cst_236 = arith.constant 5.000000e-01 : f32
    %425 = vector.broadcast %cst_236 : f32 to vector<8x128xf32>
    %426 = arith.addf %424, %425 : vector<8x128xf32>
    %427 = arith.index_cast %c7_i32 : i32 to index
    %c0_237 = arith.constant 0 : index
    %c128_238 = arith.constant 128 : index
    %428 = vector.load %arg11[%427, %c0_237, %c128_238] : memref<8x8x512xf32, #tpu.memory_space<vmem>>, vector<1x8x128xf32>
    %429 = vector.shape_cast %428 : vector<1x8x128xf32> to vector<8x128xf32>
    %c0_239 = arith.constant 0 : index
    %c128_240 = arith.constant 128 : index
    %430 = vector.load %arg4[%c0_239, %c128_240] : memref<128x512xbf16, #tpu.memory_space<vmem>>, vector<128x128xbf16>
    %cst_241 = arith.constant dense<0.000000e+00> : vector<8x128xf32>
    %431 = tpu.matmul %413, %430, %cst_241 {dimension_numbers = #tpu.dot_dimension_numbers<[1], [0], [0], [1], [0, 0, 1, 1], [], []>} : vector<8x128xbf16>, vector<128x128xbf16>, vector<8x128xf32> -> vector<8x128xf32>
    %432 = arith.addf %429, %431 : vector<8x128xf32>
    %cst_242 = arith.constant 5.000000e-01 : f32
    %433 = vector.broadcast %cst_242 : f32 to vector<8x128xf32>
    %434 = arith.mulf %433, %432 : vector<8x128xf32>
    %435 = math.tanh %434 : vector<8x128xf32>
    %cst_243 = arith.constant 5.000000e-01 : f32
    %436 = vector.broadcast %cst_243 : f32 to vector<8x128xf32>
    %437 = arith.mulf %436, %435 : vector<8x128xf32>
    %cst_244 = arith.constant 5.000000e-01 : f32
    %438 = vector.broadcast %cst_244 : f32 to vector<8x128xf32>
    %439 = arith.addf %437, %438 : vector<8x128xf32>
    %440 = arith.index_cast %c7_i32 : i32 to index
    %c0_245 = arith.constant 0 : index
    %c256_246 = arith.constant 256 : index
    %441 = vector.load %arg11[%440, %c0_245, %c256_246] : memref<8x8x512xf32, #tpu.memory_space<vmem>>, vector<1x8x128xf32>
    %442 = vector.shape_cast %441 : vector<1x8x128xf32> to vector<8x128xf32>
    %c0_247 = arith.constant 0 : index
    %c256_248 = arith.constant 256 : index
    %443 = vector.load %arg4[%c0_247, %c256_248] : memref<128x512xbf16, #tpu.memory_space<vmem>>, vector<128x128xbf16>
    %cst_249 = arith.constant dense<0.000000e+00> : vector<8x128xf32>
    %444 = tpu.matmul %413, %443, %cst_249 {dimension_numbers = #tpu.dot_dimension_numbers<[1], [0], [0], [1], [0, 0, 1, 1], [], []>} : vector<8x128xbf16>, vector<128x128xbf16>, vector<8x128xf32> -> vector<8x128xf32>
    %445 = arith.addf %442, %444 : vector<8x128xf32>
    %446 = math.tanh %445 : vector<8x128xf32>
    %447 = arith.index_cast %c7_i32 : i32 to index
    %c0_250 = arith.constant 0 : index
    %c384_251 = arith.constant 384 : index
    %448 = vector.load %arg11[%447, %c0_250, %c384_251] : memref<8x8x512xf32, #tpu.memory_space<vmem>>, vector<1x8x128xf32>
    %449 = vector.shape_cast %448 : vector<1x8x128xf32> to vector<8x128xf32>
    %c0_252 = arith.constant 0 : index
    %c384_253 = arith.constant 384 : index
    %450 = vector.load %arg4[%c0_252, %c384_253] : memref<128x512xbf16, #tpu.memory_space<vmem>>, vector<128x128xbf16>
    %cst_254 = arith.constant dense<0.000000e+00> : vector<8x128xf32>
    %451 = tpu.matmul %413, %450, %cst_254 {dimension_numbers = #tpu.dot_dimension_numbers<[1], [0], [0], [1], [0, 0, 1, 1], [], []>} : vector<8x128xbf16>, vector<128x128xbf16>, vector<8x128xf32> -> vector<8x128xf32>
    %452 = arith.addf %449, %451 : vector<8x128xf32>
    %cst_255 = arith.constant 5.000000e-01 : f32
    %453 = vector.broadcast %cst_255 : f32 to vector<8x128xf32>
    %454 = arith.mulf %453, %452 : vector<8x128xf32>
    %455 = math.tanh %454 : vector<8x128xf32>
    %cst_256 = arith.constant 5.000000e-01 : f32
    %456 = vector.broadcast %cst_256 : f32 to vector<8x128xf32>
    %457 = arith.mulf %456, %455 : vector<8x128xf32>
    %cst_257 = arith.constant 5.000000e-01 : f32
    %458 = vector.broadcast %cst_257 : f32 to vector<8x128xf32>
    %459 = arith.addf %457, %458 : vector<8x128xf32>
    %460 = arith.mulf %439, %405 : vector<8x128xf32>
    %461 = arith.mulf %426, %446 : vector<8x128xf32>
    %462 = arith.addf %460, %461 : vector<8x128xf32>
    %463 = math.tanh %462 : vector<8x128xf32>
    %464 = arith.mulf %459, %463 : vector<8x128xf32>
    %465 = arith.truncf %464 : vector<8x128xf32> to vector<8x128xbf16>
    %466 = arith.index_cast %c7_i32 : i32 to index
    %c0_258 = arith.constant 0 : index
    %c0_259 = arith.constant 0 : index
    %467 = vector.load %arg8[%466, %c0_258, %c0_259] : memref<8x8x128xbf16, #tpu.memory_space<vmem>>, vector<1x8x128xbf16>
    %468 = vector.shape_cast %467 : vector<1x8x128xbf16> to vector<8x128xbf16>
    %469 = vector.shape_cast %465 : vector<8x128xbf16> to vector<1x8x128xbf16>
    tpu.vector_store %arg8[%466, %c0_258, %c0_259], %469 {strides = array<i32>} : memref<8x8x128xbf16, #tpu.memory_space<vmem>>, vector<1x8x128xbf16>,
    %c8_i32 = arith.constant 8 : i32
    %c0_260 = arith.constant 0 : index
    %c0_261 = arith.constant 0 : index
    %470 = vector.load %arg12[%c0_260, %c0_261] : memref<8x128xf32, #tpu.memory_space<vmem>>, vector<8x128xf32>
    tpu.vector_store %arg12[%c0_260, %c0_261], %464 {strides = array<i32>} : memref<8x128xf32, #tpu.memory_space<vmem>>, vector<8x128xf32>,
    %c0_262 = arith.constant 0 : index
    %c0_263 = arith.constant 0 : index
    %471 = vector.load %arg13[%c0_262, %c0_263] : memref<8x128xf32, #tpu.memory_space<vmem>>, vector<8x128xf32>
    tpu.vector_store %arg13[%c0_262, %c0_263], %462 {strides = array<i32>} : memref<8x128xf32, #tpu.memory_space<vmem>>, vector<8x128xf32>,
    %c0_i32_264 = arith.constant 0 : i32
    %472 = arith.cmpi eq, %arg1, %c0_i32_264 : i32
    %473 = arith.extui %472 : i1 to i32
    %c0_i32_265 = arith.constant 0 : i32
    %474 = arith.cmpi ne, %473, %c0_i32_265 : i32
    scf.if %474 {
      %c0_266 = arith.constant 0 : index
      %c0_267 = arith.constant 0 : index
      %475 = vector.load %arg9[%c0_266, %c0_267] : memref<8x128xf32, #tpu.memory_space<vmem>>, vector<8x128xf32>
      tpu.vector_store %arg9[%c0_266, %c0_267], %464 {strides = array<i32>} : memref<8x128xf32, #tpu.memory_space<vmem>>, vector<8x128xf32>,
      %c0_268 = arith.constant 0 : index
      %c0_269 = arith.constant 0 : index
      %476 = vector.load %arg10[%c0_268, %c0_269] : memref<8x128xf32, #tpu.memory_space<vmem>>, vector<8x128xf32>
      tpu.vector_store %arg10[%c0_268, %c0_269], %462 {strides = array<i32>} : memref<8x128xf32, #tpu.memory_space<vmem>>, vector<8x128xf32>,
    } else {
    }
    return
  }
  func.func @transform_0(%arg0: i32, %arg1: i32) -> (i32, i32, i32) {
    %c0_i32 = arith.constant 0 : i32
    %c0_i32_0 = arith.constant 0 : i32
    return %arg1, %arg0, %c0_i32 : i32, i32, i32
  }
  func.func @transform_1(%arg0: i32, %arg1: i32) -> (i32, i32) {
    %c0_i32 = arith.constant 0 : i32
    %c0_i32_0 = arith.constant 0 : i32
    %c0_i32_1 = arith.constant 0 : i32
    return %c0_i32, %c0_i32_0 : i32, i32
  }
  func.func @transform_2(%arg0: i32, %arg1: i32) -> (i32, i32) {
    %c0_i32 = arith.constant 0 : i32
    %c0_i32_0 = arith.constant 0 : i32
    %c0_i32_1 = arith.constant 0 : i32
    return %c0_i32, %c0_i32_0 : i32, i32
  }
  func.func @transform_3(%arg0: i32, %arg1: i32) -> (i32, i32) {
    %c0_i32 = arith.constant 0 : i32
    %c0_i32_0 = arith.constant 0 : i32
    %c0_i32_1 = arith.constant 0 : i32
    return %c0_i32, %c0_i32_0 : i32, i32
  }
  func.func @transform_4(%arg0: i32, %arg1: i32) -> (i32, i32) {
    %c0_i32 = arith.constant 0 : i32
    %c0_i32_0 = arith.constant 0 : i32
    return %arg0, %c0_i32 : i32, i32
  }
  func.func @transform_5(%arg0: i32, %arg1: i32) -> (i32, i32) {
    %c0_i32 = arith.constant 0 : i32
    %c0_i32_0 = arith.constant 0 : i32
    return %arg0, %c0_i32 : i32, i32
  }
  func.func @transform_6(%arg0: i32, %arg1: i32) -> (i32, i32, i32) {
    %c0_i32 = arith.constant 0 : i32
    %c0_i32_0 = arith.constant 0 : i32
    return %arg1, %arg0, %c0_i32 : i32, i32, i32
  }
  func.func @transform_7(%arg0: i32, %arg1: i32) -> (i32, i32) {
    %c0_i32 = arith.constant 0 : i32
    %c0_i32_0 = arith.constant 0 : i32
    return %arg0, %c0_i32 : i32, i32
  }
  func.func @transform_8(%arg0: i32, %arg1: i32) -> (i32, i32) {
    %c0_i32 = arith.constant 0 : i32
    %c0_i32_0 = arith.constant 0 : i32
    return %arg0, %c0_i32 : i32, i32
  }
}

</mosaic_0001>

<llo_original>
// kernel: torch_lstm_forward.5
$region0: #{torch_lstm_forward.5}
  #allocation0 [shape = 'u32[]', space=smem, size = 0x4, offset = 0x4, fixed_abs, tag = 'smem constant byte address 0x4 - core index']
  #allocation1 [shape = 'u32[72,128]{1,0:T(1,128)}', space=vmem, size = 0x9000, scoped, tag = 'internal scratch']
  #allocation2 [shape = 'f32[16,128]{1,0:T(8,128)}', space=vmem, size = 0x2000, scoped, tag = 'scratch operand']
  %s0 = inlined_call_operand.vmem [shape: bf16[16,128], index: 0, kind: input, shape index: {}]
  %s1 = inlined_call_operand.vmem [shape: bf16[128,128], index: 1, kind: input, shape index: {}]
  %s2 = inlined_call_operand.vmem [shape: f32[1,128], index: 2, kind: input, shape index: {}]
  %s3 = inlined_call_operand.hbm [shape: f32[16,128], index: 3, kind: output, shape index: {}]
  %s4 = sld [smem:[#allocation0]]
  $region30: #{torch_lstm_forward.5} parent=0
    _
  %s6 = ssub.s32 1, %s4
  %s7 = scalar_select 0, %s6, %s4
  $region1: #{torch_lstm_forward.5} parent=0
    #allocation3 [shape = 'u8[8192]{0}', space=vmem, size = 0x2000, scoped, tag = 'output window, operand 0, single buffered']
    #allocation4 [shape = 's32[1]{0}', space=sflag, size = 0x4, scoped, tag = 'scoped memory for torch_lstm_forward.5']
    %8 = vsyncpa [#allocation4], 0
    // Predicated region
    $region2: #{torch_lstm_forward.5} parent=1 // pred_check
      _
    $region3: #{torch_lstm_forward.5} parent=1 // pred_check_branch
      %10 = sbr.rel (0) target = $region5
    $region4: #{torch_lstm_forward.5} parent=1 // pred_region
      _
    $region5: #{torch_lstm_forward.5} parent=1 // pred_fallthru
      _
    // Predicated region
    $region6: #{torch_lstm_forward.5} parent=1 // pred_check
      _
    $region7: #{torch_lstm_forward.5} parent=1 // pred_check_branch
      %12 = sbr.rel (0) target = $region9
    $region8: #{torch_lstm_forward.5} parent=1 // pred_region
      _
    $region9: #{torch_lstm_forward.5} parent=1 // pred_fallthru
      _
    // Predicated region
    $region10: #{torch_lstm_forward.5} parent=1 // pred_check
      _
    $region11: #{torch_lstm_forward.5} parent=1 // pred_check_branch
      %14 = sbr.rel (0) target = $region13
    $region12: #{torch_lstm_forward.5} parent=1 // pred_region
      _
    $region13: #{torch_lstm_forward.5} parent=1 // pred_fallthru
      _
    %p15 = scmp.eq.s32.totalorder 0, 0
    // Predicated region
    $region14: #{torch_lstm_forward.5} parent=1 // pred_check
      %p16 = pneg %p15
    $region15: #{torch_lstm_forward.5} parent=1 // pred_check_branch
      %18 = sbr.rel (%p16) target = $region17
    $region16: #{torch_lstm_forward.5} parent=1 // pred_region
      %19 = vst [vmem:[#allocation2] sm:$0xff] 0.0
      %20 = vst [vmem:[#allocation2 + $0x8] sm:$0xff] 0.0
    $region17: #{torch_lstm_forward.5} parent=1 // pred_fallthru
      _
    %v21 = vld [vmem:[#allocation2] sm:$0xff]
    %v22 = vld [vmem:[#allocation2 + $0x8] sm:$0xff]
    %v23 = vld [vmem:[%s0] sm:$0xf]
    %v24 = vld [vmem:[%s0 + $0x4] sm:$0xf]
    %v25 = vld [vmem:[%s1] sm:$0xf]
    %v26 = vld [vmem:[%s1 + $0x4] sm:$0xf]
    %v27 = vld [vmem:[%s1 + $0x8] sm:$0xf]
    %v28 = vld [vmem:[%s1 + $0xc] sm:$0xf]
    %v29 = vld [vmem:[%s1 + $0x10] sm:$0xf]
    %v30 = vld [vmem:[%s1 + $0x14] sm:$0xf]
    %v31 = vld [vmem:[%s1 + $0x18] sm:$0xf]
    %v32 = vld [vmem:[%s1 + $0x1c] sm:$0xf]
    %v33 = vld [vmem:[%s1 + $0x20] sm:$0xf]
    %v34 = vld [vmem:[%s1 + $0x24] sm:$0xf]
    %v35 = vld [vmem:[%s1 + $0x28] sm:$0xf]
    %v36 = vld [vmem:[%s1 + $0x2c] sm:$0xf]
    %v37 = vld [vmem:[%s1 + $0x30] sm:$0xf]
    %v38 = vld [vmem:[%s1 + $0x34] sm:$0xf]
    %v39 = vld [vmem:[%s1 + $0x38] sm:$0xf]
    %v40 = vld [vmem:[%s1 + $0x3c] sm:$0xf]
    %v43 = vunpack.c.l.b16 %v23
    %v44 = vunpack.c.l.b16 %v24
    %v45 = vpack.c.b16 %v44, %v43
    %v63 = vunpack.c.l.b16 %v25
    %v64 = vunpack.c.l.b16 %v26
    %v65 = vunpack.c.l.b16 %v27
    %v66 = vunpack.c.l.b16 %v28
    %v67 = vunpack.c.l.b16 %v29
    %v68 = vunpack.c.l.b16 %v30
    %v69 = vunpack.c.l.b16 %v31
    %v70 = vunpack.c.l.b16 %v32
    %v71 = vunpack.c.l.b16 %v33
    %v72 = vunpack.c.l.b16 %v34
    %v73 = vunpack.c.l.b16 %v35
    %v74 = vunpack.c.l.b16 %v36
    %v75 = vunpack.c.l.b16 %v37
    %v76 = vunpack.c.l.b16 %v38
    %v77 = vunpack.c.l.b16 %v39
    %v78 = vunpack.c.l.b16 %v40
    %v79 = vpack.c.b16 %v64, %v63
    %v80 = vpack.c.b16 %v66, %v65
    %v81 = vpack.c.b16 %v68, %v67
    %v82 = vpack.c.b16 %v70, %v69
    %v83 = vpack.c.b16 %v72, %v71
    %v84 = vpack.c.b16 %v74, %v73
    %v85 = vpack.c.b16 %v76, %v75
    %v86 = vpack.c.b16 %v78, %v77
    %95 = vmatpush.bf16.msra.mxu0 %v86
    %96 = vmatpush.bf16.msra.mxu0 %v85
    %97 = vmatpush.bf16.msra.mxu0 %v84
    %98 = vmatpush.bf16.msra.mxu0 %v83
    %99 = vmatpush.bf16.msra.mxu0 %v82
    %100 = vmatpush.bf16.msra.mxu0 %v81
    %101 = vmatpush.bf16.msra.mxu0 %v80
    %102 = vmatpush.bf16.msra.mxu0 %v79
    %103 = vmatmul.bf16.gmra.mxu0 %v45
    %v104 = vpop.f32.mrf.mxu0
    %v105 = vadd.f32 0.0, %v104
    %v106 = vpop.f32.mrf.mxu0
    %v107 = vadd.f32 0.0, %v106
    %108 = vdwg.mxu0
    %v109 = vadd.f32 %v21, %v105
    %v110 = vadd.f32 %v22, %v107
    %111 = vst [vmem:[#allocation2] sm:$0xff] %v109
    %112 = vst [vmem:[#allocation2 + $0x8] sm:$0xff] %v110
    // Predicated region
    $region18: #{torch_lstm_forward.5} parent=1 // pred_check
      %p113 = pneg %p15
    $region19: #{torch_lstm_forward.5} parent=1 // pred_check_branch
      %115 = sbr.rel (%p113) target = $region21
    $region20: #{torch_lstm_forward.5} parent=1 // pred_region
      %v116 = vld [vmem:[#allocation2] sm:$0xff]
      %v117 = vld [vmem:[#allocation2 + $0x8] sm:$0xff]
      %v118 = vld [vmem:[%s2] sm:$0x1]
      %v120 = vperm.slane %v118, 0
      %v122 = vadd.f32 %v116, %v120
      %v123 = vadd.f32 %v117, %v120
      %124 = vst [vmem:[#allocation3] sm:$0xff] %v122
      %125 = vst [vmem:[#allocation3 + $0x8] sm:$0xff] %v123
    $region21: #{torch_lstm_forward.5} parent=1 // pred_fallthru
      _
    // Predicated region
    $region22: #{torch_lstm_forward.5} parent=1 // pred_check
      _
    $region23: #{torch_lstm_forward.5} parent=1 // pred_check_branch
      %127 = sbr.rel (0) target = $region25
    $region24: #{torch_lstm_forward.5} parent=1 // pred_region
      %129 = vsyncadd [#allocation4], 0
      %s130 = sshll.u32 [#allocation3], 4
      %s131 = int_to_ptr.vmem [resolvable:$true] %s130
      %s132 = sshll.u32 %s3, 4
      %s133 = int_to_ptr.hbm [resolvable:$true] %s132
      %138 = dma.vmem_to_hbm [thread:$0]  %s131, 256, %s133, [#allocation4], 128, 128, 8
    $region25: #{torch_lstm_forward.5} parent=1 // pred_fallthru
      _
    // Predicated region
    $region26: #{torch_lstm_forward.5} parent=1 // pred_check
      _
    $region27: #{torch_lstm_forward.5} parent=1 // pred_check_branch
      %140 = sbr.rel (0) target = $region29
    $region28: #{torch_lstm_forward.5} parent=1 // pred_region
      %142 = dma.done [#allocation4], 256
    $region29: #{torch_lstm_forward.5} parent=1 // pred_fallthru
      _
    %143 = vsyncpa [#allocation4], 1

// kernel: torch_lstm_forward.3
$region0: #{torch_lstm_forward.3}
  #allocation0 [shape = 'u32[]', space=smem, size = 0x4, offset = 0x4, fixed_abs, tag = 'smem constant byte address 0x4 - core index']
  #allocation1 [shape = 'u32[72,128]{1,0:T(1,128)}', space=vmem, size = 0x9000, scoped, tag = 'internal scratch']
  #allocation2 [shape = 'f32[8,8,512]{2,1,0:T(8,128)}', space=vmem, size = 0x20000, scoped, tag = 'scratch operand']
  #allocation3 [shape = 'f32[8,128]{1,0:T(8,128)}', space=vmem, size = 0x1000, scoped, tag = 'scratch operand']
  #allocation4 [shape = 'f32[8,128]{1,0:T(8,128)}', space=vmem, size = 0x1000, scoped, tag = 'scratch operand']
  %s0 = inlined_call_operand.vmem [shape: bf16[8,8,128], index: 0, kind: input, shape index: {}]
  %s1 = inlined_call_operand.vmem [shape: bf16[128,512], index: 1, kind: input, shape index: {}]
  %s2 = inlined_call_operand.vmem [shape: bf16[128,512], index: 2, kind: input, shape index: {}]
  %s3 = inlined_call_operand.vmem [shape: f32[1,512], index: 3, kind: input, shape index: {}]
  %s4 = inlined_call_operand.vmem [shape: f32[8,128], index: 4, kind: input, shape index: {}]
  %s5 = inlined_call_operand.vmem [shape: f32[8,128], index: 5, kind: input, shape index: {}]
  %s6 = inlined_call_operand.vmem [shape: bf16[8,8,128], index: 6, kind: output, shape index: {0}]
  %s7 = inlined_call_operand.vmem [shape: f32[8,128], index: 7, kind: output, shape index: {1}]
  %s8 = inlined_call_operand.vmem [shape: f32[8,128], index: 8, kind: output, shape index: {2}]
  %9 = xla_tuple %s6, %s7, %s8
  %s10 = sld [smem:[#allocation0]]
  $region58: #{torch_lstm_forward.3} parent=0
    _
  %s12 = ssub.s32 1, %s10
  %s13 = scalar_select 0, %s12, %s10
  // Predicated region
  $region2: #{torch_lstm_forward.3} parent=0 // pred_check
    _
  $region3: #{torch_lstm_forward.3} parent=0 // pred_check_branch
    %15 = sbr.rel (0) target = $region5
  $region4: #{torch_lstm_forward.3} parent=0 // pred_region
    _
  $region5: #{torch_lstm_forward.3} parent=0 // pred_fallthru
    _
  // Predicated region
  $region6: #{torch_lstm_forward.3} parent=0 // pred_check
    _
  $region7: #{torch_lstm_forward.3} parent=0 // pred_check_branch
    %17 = sbr.rel (0) target = $region9
  $region8: #{torch_lstm_forward.3} parent=0 // pred_region
    _
  $region9: #{torch_lstm_forward.3} parent=0 // pred_fallthru
    _
  // Predicated region
  $region10: #{torch_lstm_forward.3} parent=0 // pred_check
    _
  $region11: #{torch_lstm_forward.3} parent=0 // pred_check_branch
    %19 = sbr.rel (0) target = $region13
  $region12: #{torch_lstm_forward.3} parent=0 // pred_region
    _
  $region13: #{torch_lstm_forward.3} parent=0 // pred_fallthru
    _
  // Predicated region
  $region14: #{torch_lstm_forward.3} parent=0 // pred_check
    _
  $region15: #{torch_lstm_forward.3} parent=0 // pred_check_branch
    %21 = sbr.rel (0) target = $region17
  $region16: #{torch_lstm_forward.3} parent=0 // pred_region
    _
  $region17: #{torch_lstm_forward.3} parent=0 // pred_fallthru
    _
  // Predicated region
  $region18: #{torch_lstm_forward.3} parent=0 // pred_check
    _
  $region19: #{torch_lstm_forward.3} parent=0 // pred_check_branch
    %23 = sbr.rel (0) target = $region21
  $region20: #{torch_lstm_forward.3} parent=0 // pred_region
    _
  $region21: #{torch_lstm_forward.3} parent=0 // pred_fallthru
    _
  // Predicated region
  $region22: #{torch_lstm_forward.3} parent=0 // pred_check
    _
  $region23: #{torch_lstm_forward.3} parent=0 // pred_check_branch
    %25 = sbr.rel (0) target = $region25
  $region24: #{torch_lstm_forward.3} parent=0 // pred_region
    _
  $region25: #{torch_lstm_forward.3} parent=0 // pred_fallthru
    _
  %p26 = scmp.eq.s32.totalorder 0, 0
  // Predicated region
  $region26: #{torch_lstm_forward.3} parent=0 // pred_check
    %p27 = pneg %p26
  $region27: #{torch_lstm_forward.3} parent=0 // pred_check_branch
    %29 = sbr.rel (%p27) target = $region29
  $region28: #{torch_lstm_forward.3} parent=0 // pred_region
    %v30 = vld [vmem:[%s4] sm:$0xff]
    %31 = vst [vmem:[#allocation3] sm:$0xff] %v30
    %v32 = vld [vmem:[%s5] sm:$0xff]
    %33 = vst [vmem:[#allocation4] sm:$0xff] %v32
  $region29: #{torch_lstm_forward.3} parent=0 // pred_fallthru
    _
  %v34 = vld [vmem:[%s0] sm:$0xf]
  %v35 = vld [vmem:[%s0 + $0x4] sm:$0xf]
  %v36 = vld [vmem:[%s0 + $0x8] sm:$0xf]
  %v37 = vld [vmem:[%s0 + $0xc] sm:$0xf]
  %v38 = vld [vmem:[%s0 + $0x10] sm:$0xf]
  %v39 = vld [vmem:[%s0 + $0x14] sm:$0xf]
  %v40 = vld [vmem:[%s0 + $0x18] sm:$0xf]
  %v41 = vld [vmem:[%s0 + $0x1c] sm:$0xf]
  %v42 = vld [vmem:[%s1] sm:$0xff]
  %v43 = vld [vmem:[%s1 + $0x8] sm:$0xff]
  %v44 = vld [vmem:[%s1 + $0x10] sm:$0xff]
  %v45 = vld [vmem:[%s1 + $0x18] sm:$0xff]
  %v46 = vld [vmem:[%s1 + $0x20] sm:$0xff]
  %v47 = vld [vmem:[%s1 + $0x28] sm:$0xff]
  %v48 = vld [vmem:[%s1 + $0x30] sm:$0xff]
  %v49 = vld [vmem:[%s1 + $0x38] sm:$0xff]
  %v50 = vld [vmem:[%s1 + $0x40] sm:$0xff]
  %v51 = vld [vmem:[%s1 + $0x48] sm:$0xff]
  %v52 = vld [vmem:[%s1 + $0x50] sm:$0xff]
  %v53 = vld [vmem:[%s1 + $0x58] sm:$0xff]
  %v54 = vld [vmem:[%s1 + $0x60] sm:$0xff]
  %v55 = vld [vmem:[%s1 + $0x68] sm:$0xff]
  %v56 = vld [vmem:[%s1 + $0x70] sm:$0xff]
  %v57 = vld [vmem:[%s1 + $0x78] sm:$0xff]
  %v58 = vld [vmem:[%s1 + $0x80] sm:$0xff]
  %v59 = vld [vmem:[%s1 + $0x88] sm:$0xff]
  %v60 = vld [vmem:[%s1 + $0x90] sm:$0xff]
  %v61 = vld [vmem:[%s1 + $0x98] sm:$0xff]
  %v62 = vld [vmem:[%s1 + $0xa0] sm:$0xff]
  %v63 = vld [vmem:[%s1 + $0xa8] sm:$0xff]
  %v64 = vld [vmem:[%s1 + $0xb0] sm:$0xff]
  %v65 = vld [vmem:[%s1 + $0xb8] sm:$0xff]
  %v66 = vld [vmem:[%s1 + $0xc0] sm:$0xff]
  %v67 = vld [vmem:[%s1 + $0xc8] sm:$0xff]
  %v68 = vld [vmem:[%s1 + $0xd0] sm:$0xff]
  %v69 = vld [vmem:[%s1 + $0xd8] sm:$0xff]
  %v70 = vld [vmem:[%s1 + $0xe0] sm:$0xff]
  %v71 = vld [vmem:[%s1 + $0xe8] sm:$0xff]
  %v72 = vld [vmem:[%s1 + $0xf0] sm:$0xff]
  %v73 = vld [vmem:[%s1 + $0xf8] sm:$0xff]
  %v74 = vld [vmem:[%s3] sm:$0xf]
  %v76 = vperm.slane %v74, 0
  %v77 = vperm.slane %v74, 1
  %v78 = vperm.slane %v74, 2
  %v79 = vperm.slane %v74, 3
  %v92 = vunpack.c.l.b16 %v34
  %v93 = vunpack.c.l.b16 %v35
  %v94 = vunpack.c.l.b16 %v36
  %v95 = vunpack.c.l.b16 %v37
  %v96 = vunpack.c.l.b16 %v38
  %v97 = vunpack.c.l.b16 %v39
  %v98 = vunpack.c.l.b16 %v40
  %v99 = vunpack.c.l.b16 %v41
  %v100 = vpack.c.b16 %v93, %v92
  %v101 = vpack.c.b16 %v95, %v94
  %v102 = vpack.c.b16 %v97, %v96
  %v103 = vpack.c.b16 %v99, %v98
  %v140 = vunpack.c.l.b16 %v42
  %v141 = vunpack.c.h.b16 %v42
  %v142 = vunpack.c.l.b16 %v43
  %v143 = vunpack.c.h.b16 %v43
  %v144 = vunpack.c.l.b16 %v44
  %v145 = vunpack.c.h.b16 %v44
  %v146 = vunpack.c.l.b16 %v45
  %v147 = vunpack.c.h.b16 %v45
  %v148 = vunpack.c.l.b16 %v46
  %v149 = vunpack.c.h.b16 %v46
  %v150 = vunpack.c.l.b16 %v47
  %v151 = vunpack.c.h.b16 %v47
  %v152 = vunpack.c.l.b16 %v48
  %v153 = vunpack.c.h.b16 %v48
  %v154 = vunpack.c.l.b16 %v49
  %v155 = vunpack.c.h.b16 %v49
  %v156 = vunpack.c.l.b16 %v50
  %v157 = vunpack.c.h.b16 %v50
  %v158 = vunpack.c.l.b16 %v51
  %v159 = vunpack.c.h.b16 %v51
  %v160 = vunpack.c.l.b16 %v52
  %v161 = vunpack.c.h.b16 %v52
  %v162 = vunpack.c.l.b16 %v53
  %v163 = vunpack.c.h.b16 %v53
  %v164 = vunpack.c.l.b16 %v54
  %v165 = vunpack.c.h.b16 %v54
  %v166 = vunpack.c.l.b16 %v55
  %v167 = vunpack.c.h.b16 %v55
  %v168 = vunpack.c.l.b16 %v56
  %v169 = vunpack.c.h.b16 %v56
  %v170 = vunpack.c.l.b16 %v57
  %v171 = vunpack.c.h.b16 %v57
  %v172 = vunpack.c.l.b16 %v58
  %v173 = vunpack.c.h.b16 %v58
  %v174 = vunpack.c.l.b16 %v59
  %v175 = vunpack.c.h.b16 %v59
  %v176 = vunpack.c.l.b16 %v60
  %v177 = vunpack.c.h.b16 %v60
  %v178 = vunpack.c.l.b16 %v61
  %v179 = vunpack.c.h.b16 %v61
  %v180 = vunpack.c.l.b16 %v62
  %v181 = vunpack.c.h.b16 %v62
  %v182 = vunpack.c.l.b16 %v63
  %v183 = vunpack.c.h.b16 %v63
  %v184 = vunpack.c.l.b16 %v64
  %v185 = vunpack.c.h.b16 %v64
  %v186 = vunpack.c.l.b16 %v65
  %v187 = vunpack.c.h.b16 %v65
  %v188 = vunpack.c.l.b16 %v66
  %v189 = vunpack.c.h.b16 %v66
  %v190 = vunpack.c.l.b16 %v67
  %v191 = vunpack.c.h.b16 %v67
  %v192 = vunpack.c.l.b16 %v68
  %v193 = vunpack.c.h.b16 %v68
  %v194 = vunpack.c.l.b16 %v69
  %v195 = vunpack.c.h.b16 %v69
  %v196 = vunpack.c.l.b16 %v70
  %v197 = vunpack.c.h.b16 %v70
  %v198 = vunpack.c.l.b16 %v71
  %v199 = vunpack.c.h.b16 %v71
  %v200 = vunpack.c.l.b16 %v72
  %v201 = vunpack.c.h.b16 %v72
  %v202 = vunpack.c.l.b16 %v73
  %v203 = vunpack.c.h.b16 %v73
  %v204 = vpack.c.b16 %v144, %v140
  %v205 = vpack.c.b16 %v145, %v141
  %v206 = vpack.c.b16 %v146, %v142
  %v207 = vpack.c.b16 %v147, %v143
  %v208 = vpack.c.b16 %v152, %v148
  %v209 = vpack.c.b16 %v153, %v149
  %v210 = vpack.c.b16 %v154, %v150
  %v211 = vpack.c.b16 %v155, %v151
  %v212 = vpack.c.b16 %v160, %v156
  %v213 = vpack.c.b16 %v161, %v157
  %v214 = vpack.c.b16 %v162, %v158
  %v215 = vpack.c.b16 %v163, %v159
  %v216 = vpack.c.b16 %v168, %v164
  %v217 = vpack.c.b16 %v169, %v165
  %v218 = vpack.c.b16 %v170, %v166
  %v219 = vpack.c.b16 %v171, %v167
  %v220 = vpack.c.b16 %v176, %v172
  %v221 = vpack.c.b16 %v177, %v173
  %v222 = vpack.c.b16 %v178, %v174
  %v223 = vpack.c.b16 %v179, %v175
  %v224 = vpack.c.b16 %v184, %v180
  %v225 = vpack.c.b16 %v185, %v181
  %v226 = vpack.c.b16 %v186, %v182
  %v227 = vpack.c.b16 %v187, %v183
  %v228 = vpack.c.b16 %v192, %v188
  %v229 = vpack.c.b16 %v193, %v189
  %v230 = vpack.c.b16 %v194, %v190
  %v231 = vpack.c.b16 %v195, %v191
  %v232 = vpack.c.b16 %v200, %v196
  %v233 = vpack.c.b16 %v201, %v197
  %v234 = vpack.c.b16 %v202, %v198
  %v235 = vpack.c.b16 %v203, %v199
  %268 = vmatpush.bf16.msra.mxu0 %v232
  %269 = vmatpush.bf16.msra.mxu0 %v228
  %270 = vmatpush.bf16.msra.mxu0 %v224
  %271 = vmatpush.bf16.msra.mxu0 %v220
  %272 = vmatpush.bf16.msra.mxu0 %v216
  %273 = vmatpush.bf16.msra.mxu0 %v212
  %274 = vmatpush.bf16.msra.mxu0 %v208
  %275 = vmatpush.bf16.msra.mxu0 %v204
  %276 = vmatmul.bf16.gmra.mxu0 %v100
  %v277 = vpop.f32.mrf.mxu0
  %v278 = vadd.f32 %v76, %v277
  %v279 = vpop.f32.mrf.mxu0
  %v280 = vadd.f32 %v76, %v279
  %281 = vmatmul.bf16.gmra.mxu0 %v101
  %v282 = vpop.f32.mrf.mxu0
  %v283 = vadd.f32 %v76, %v282
  %v284 = vpop.f32.mrf.mxu0
  %v285 = vadd.f32 %v76, %v284
  %286 = vmatmul.bf16.gmra.mxu0 %v102
  %v287 = vpop.f32.mrf.mxu0
  %v288 = vadd.f32 %v76, %v287
  %v289 = vpop.f32.mrf.mxu0
  %v290 = vadd.f32 %v76, %v289
  %291 = vmatmul.bf16.gmra.mxu0 %v103
  %v292 = vpop.f32.mrf.mxu0
  %v293 = vadd.f32 %v76, %v292
  %v294 = vpop.f32.mrf.mxu0
  %v295 = vadd.f32 %v76, %v294
  %296 = vdwg.mxu0
  %297 = vmatpush.bf16.msra.mxu0 %v233
  %298 = vmatpush.bf16.msra.mxu0 %v229
  %299 = vmatpush.bf16.msra.mxu0 %v225
  %300 = vmatpush.bf16.msra.mxu0 %v221
  %301 = vmatpush.bf16.msra.mxu0 %v217
  %302 = vmatpush.bf16.msra.mxu0 %v213
  %303 = vmatpush.bf16.msra.mxu0 %v209
  %304 = vmatpush.bf16.msra.mxu0 %v205
  %305 = vmatmul.bf16.gmra.mxu0 %v100
  %v306 = vpop.f32.mrf.mxu0
  %v307 = vadd.f32 %v77, %v306
  %v308 = vpop.f32.mrf.mxu0
  %v309 = vadd.f32 %v77, %v308
  %310 = vmatmul.bf16.gmra.mxu0 %v101
  %v311 = vpop.f32.mrf.mxu0
  %v312 = vadd.f32 %v77, %v311
  %v313 = vpop.f32.mrf.mxu0
  %v314 = vadd.f32 %v77, %v313
  %315 = vmatmul.bf16.gmra.mxu0 %v102
  %v316 = vpop.f32.mrf.mxu0
  %v317 = vadd.f32 %v77, %v316
  %v318 = vpop.f32.mrf.mxu0
  %v319 = vadd.f32 %v77, %v318
  %320 = vmatmul.bf16.gmra.mxu0 %v103
  %v321 = vpop.f32.mrf.mxu0
  %v322 = vadd.f32 %v77, %v321
  %v323 = vpop.f32.mrf.mxu0
  %v324 = vadd.f32 %v77, %v323
  %325 = vdwg.mxu0
  %326 = vmatpush.bf16.msra.mxu0 %v234
  %327 = vmatpush.bf16.msra.mxu0 %v230
  %328 = vmatpush.bf16.msra.mxu0 %v226
  %329 = vmatpush.bf16.msra.mxu0 %v222
  %330 = vmatpush.bf16.msra.mxu0 %v218
  %331 = vmatpush.bf16.msra.mxu0 %v214
  %332 = vmatpush.bf16.msra.mxu0 %v210
  %333 = vmatpush.bf16.msra.mxu0 %v206
  %334 = vmatmul.bf16.gmra.mxu0 %v100
  %v335 = vpop.f32.mrf.mxu0
  %v336 = vadd.f32 %v78, %v335
  %v337 = vpop.f32.mrf.mxu0
  %v338 = vadd.f32 %v78, %v337
  %339 = vmatmul.bf16.gmra.mxu0 %v101
  %v340 = vpop.f32.mrf.mxu0
  %v341 = vadd.f32 %v78, %v340
  %v342 = vpop.f32.mrf.mxu0
  %v343 = vadd.f32 %v78, %v342
  %344 = vmatmul.bf16.gmra.mxu0 %v102
  %v345 = vpop.f32.mrf.mxu0
  %v346 = vadd.f32 %v78, %v345
  %v347 = vpop.f32.mrf.mxu0
  %v348 = vadd.f32 %v78, %v347
  %349 = vmatmul.bf16.gmra.mxu0 %v103
  %v350 = vpop.f32.mrf.mxu0
  %v351 = vadd.f32 %v78, %v350
  %v352 = vpop.f32.mrf.mxu0
  %v353 = vadd.f32 %v78, %v352
  %354 = vdwg.mxu0
  %355 = vmatpush.bf16.msra.mxu0 %v235
  %356 = vmatpush.bf16.msra.mxu0 %v231
  %357 = vmatpush.bf16.msra.mxu0 %v227
  %358 = vmatpush.bf16.msra.mxu0 %v223
  %359 = vmatpush.bf16.msra.mxu0 %v219
  %360 = vmatpush.bf16.msra.mxu0 %v215
  %361 = vmatpush.bf16.msra.mxu0 %v211
  %362 = vmatpush.bf16.msra.mxu0 %v207
  %363 = vmatmul.bf16.gmra.mxu0 %v100
  %v364 = vpop.f32.mrf.mxu0
  %v365 = vadd.f32 %v79, %v364
  %v366 = vpop.f32.mrf.mxu0
  %v367 = vadd.f32 %v79, %v366
  %368 = vmatmul.bf16.gmra.mxu0 %v101
  %v369 = vpop.f32.mrf.mxu0
  %v370 = vadd.f32 %v79, %v369
  %v371 = vpop.f32.mrf.mxu0
  %v372 = vadd.f32 %v79, %v371
  %373 = vmatmul.bf16.gmra.mxu0 %v102
  %v374 = vpop.f32.mrf.mxu0
  %v375 = vadd.f32 %v79, %v374
  %v376 = vpop.f32.mrf.mxu0
  %v377 = vadd.f32 %v79, %v376
  %378 = vmatmul.bf16.gmra.mxu0 %v103
  %v379 = vpop.f32.mrf.mxu0
  %v380 = vadd.f32 %v79, %v379
  %v381 = vpop.f32.mrf.mxu0
  %v382 = vadd.f32 %v79, %v381
  %383 = vdwg.mxu0
  %384 = vst [vmem:[#allocation2] sm:$0xff] %v278
  %385 = vst [vmem:[#allocation2 + $0x8] sm:$0xff] %v307
  %386 = vst [vmem:[#allocation2 + $0x10] sm:$0xff] %v336
  %387 = vst [vmem:[#allocation2 + $0x18] sm:$0xff] %v365
  %388 = vst [vmem:[#allocation2 + $0x20] sm:$0xff] %v280
  %389 = vst [vmem:[#allocation2 + $0x28] sm:$0xff] %v309
  %390 = vst [vmem:[#allocation2 + $0x30] sm:$0xff] %v338
  %391 = vst [vmem:[#allocation2 + $0x38] sm:$0xff] %v367
  %392 = vst [vmem:[#allocation2 + $0x40] sm:$0xff] %v283
  %393 = vst [vmem:[#allocation2 + $0x48] sm:$0xff] %v312
  %394 = vst [vmem:[#allocation2 + $0x50] sm:$0xff] %v341
  %395 = vst [vmem:[#allocation2 + $0x58] sm:$0xff] %v370
  %396 = vst [vmem:[#allocation2 + $0x60] sm:$0xff] %v285
  %397 = vst [vmem:[#allocation2 + $0x68] sm:$0xff] %v314
  %398 = vst [vmem:[#allocation2 + $0x70] sm:$0xff] %v343
  %399 = vst [vmem:[#allocation2 + $0x78] sm:$0xff] %v372
  %400 = vst [vmem:[#allocation2 + $0x80] sm:$0xff] %v288
  %401 = vst [vmem:[#allocation2 + $0x88] sm:$0xff] %v317
  %402 = vst [vmem:[#allocation2 + $0x90] sm:$0xff] %v346
  %403 = vst [vmem:[#allocation2 + $0x98] sm:$0xff] %v375
  %404 = vst [vmem:[#allocation2 + $0xa0] sm:$0xff] %v290
  %405 = vst [vmem:[#allocation2 + $0xa8] sm:$0xff] %v319
  %406 = vst [vmem:[#allocation2 + $0xb0] sm:$0xff] %v348
  %407 = vst [vmem:[#allocation2 + $0xb8] sm:$0xff] %v377
  %408 = vst [vmem:[#allocation2 + $0xc0] sm:$0xff] %v293
  %409 = vst [vmem:[#allocation2 + $0xc8] sm:$0xff] %v322
  %410 = vst [vmem:[#allocation2 + $0xd0] sm:$0xff] %v351
  %411 = vst [vmem:[#allocation2 + $0xd8] sm:$0xff] %v380
  %412 = vst [vmem:[#allocation2 + $0xe0] sm:$0xff] %v295
  %413 = vst [vmem:[#allocation2 + $0xe8] sm:$0xff] %v324
  %414 = vst [vmem:[#allocation2 + $0xf0] sm:$0xff] %v353
  %415 = vst [vmem:[#allocation2 + $0xf8] sm:$0xff] %v382
  %v416 = vld [vmem:[#allocation3] sm:$0xff]
  %v417 = vld [vmem:[#allocation4] sm:$0xff]
  %v418 = vpack.c.bf16 %v416, %v416
  %v419 = vld [vmem:[#allocation2] sm:$0xff]
  %v420 = vld [vmem:[%s2] sm:$0xf]
  %v421 = vld [vmem:[%s2 + $0x10] sm:$0xf]
  %v422 = vld [vmem:[%s2 + $0x20] sm:$0xf]
  %v423 = vld [vmem:[%s2 + $0x30] sm:$0xf]
  %v424 = vld [vmem:[%s2 + $0x40] sm:$0xf]
  %v425 = vld [vmem:[%s2 + $0x50] sm:$0xf]
  %v426 = vld [vmem:[%s2 + $0x60] sm:$0xf]
  %v427 = vld [vmem:[%s2 + $0x70] sm:$0xf]
  %v428 = vld [vmem:[%s2 + $0x80] sm:$0xf]
  %v429 = vld [vmem:[%s2 + $0x90] sm:$0xf]
  %v430 = vld [vmem:[%s2 + $0xa0] sm:$0xf]
  %v431 = vld [vmem:[%s2 + $0xb0] sm:$0xf]
  %v432 = vld [vmem:[%s2 + $0xc0] sm:$0xf]
  %v433 = vld [vmem:[%s2 + $0xd0] sm:$0xf]
  %v434 = vld [vmem:[%s2 + $0xe0] sm:$0xf]
  %v435 = vld [vmem:[%s2 + $0xf0] sm:$0xf]
  %v452 = vunpack.c.l.b16 %v420
  %v453 = vunpack.c.l.b16 %v421
  %v454 = vunpack.c.l.b16 %v422
  %v455 = vunpack.c.l.b16 %v423
  %v456 = vunpack.c.l.b16 %v424
  %v457 = vunpack.c.l.b16 %v425
  %v458 = vunpack.c.l.b16 %v426
  %v459 = vunpack.c.l.b16 %v427
  %v460 = vunpack.c.l.b16 %v428
  %v461 = vunpack.c.l.b16 %v429
  %v462 = vunpack.c.l.b16 %v430
  %v463 = vunpack.c.l.b16 %v431
  %v464 = vunpack.c.l.b16 %v432
  %v465 = vunpack.c.l.b16 %v433
  %v466 = vunpack.c.l.b16 %v434
  %v467 = vunpack.c.l.b16 %v435
  %v468 = vpack.c.b16 %v453, %v452
  %v469 = vpack.c.b16 %v455, %v454
  %v470 = vpack.c.b16 %v457, %v456
  %v471 = vpack.c.b16 %v459, %v458
  %v472 = vpack.c.b16 %v461, %v460
  %v473 = vpack.c.b16 %v463, %v462
  %v474 = vpack.c.b16 %v465, %v464
  %v475 = vpack.c.b16 %v467, %v466
  %484 = vmatpush.bf16.msra.mxu0 %v475
  %485 = vmatpush.bf16.msra.mxu0 %v474
  %486 = vmatpush.bf16.msra.mxu0 %v473
  %487 = vmatpush.bf16.msra.mxu0 %v472
  %488 = vmatpush.bf16.msra.mxu0 %v471
  %489 = vmatpush.bf16.msra.mxu0 %v470
  %490 = vmatpush.bf16.msra.mxu0 %v469
  %491 = vmatpush.bf16.msra.mxu0 %v468
  %492 = vmatmul.bf16.gmra.mxu0 %v418
  %v493 = vpop.f32.mrf.mxu0
  %v494 = vadd.f32 0.0, %v493
  %v495 = vpop.f32.mrf.mxu0
  %496 = vdwg.mxu0
  %v497 = vadd.f32 %v419, %v494
  %v498 = vmul.f32 %v497, 0.5
  %v499 = vtanh.pop %v498
  %v500 = vmul.f32 %v499, 0.5
  %v501 = vadd.f32 %v500, 0.5
  %v502 = vld [vmem:[#allocation2 + $0x8] sm:$0xff]
  %v503 = vld [vmem:[%s2 + $0x4] sm:$0xf]
  %v504 = vld [vmem:[%s2 + $0x14] sm:$0xf]
  %v505 = vld [vmem:[%s2 + $0x24] sm:$0xf]
  %v506 = vld [vmem:[%s2 + $0x34] sm:$0xf]
  %v507 = vld [vmem:[%s2 + $0x44] sm:$0xf]
  %v508 = vld [vmem:[%s2 + $0x54] sm:$0xf]
  %v509 = vld [vmem:[%s2 + $0x64] sm:$0xf]
  %v510 = vld [vmem:[%s2 + $0x74] sm:$0xf]
  %v511 = vld [vmem:[%s2 + $0x84] sm:$0xf]
  %v512 = vld [vmem:[%s2 + $0x94] sm:$0xf]
  %v513 = vld [vmem:[%s2 + $0xa4] sm:$0xf]
  %v514 = vld [vmem:[%s2 + $0xb4] sm:$0xf]
  %v515 = vld [vmem:[%s2 + $0xc4] sm:$0xf]
  %v516 = vld [vmem:[%s2 + $0xd4] sm:$0xf]
  %v517 = vld [vmem:[%s2 + $0xe4] sm:$0xf]
  %v518 = vld [vmem:[%s2 + $0xf4] sm:$0xf]
  %v535 = vunpack.c.l.b16 %v503
  %v536 = vunpack.c.l.b16 %v504
  %v537 = vunpack.c.l.b16 %v505
  %v538 = vunpack.c.l.b16 %v506
  %v539 = vunpack.c.l.b16 %v507
  %v540 = vunpack.c.l.b16 %v508
  %v541 = vunpack.c.l.b16 %v509
  %v542 = vunpack.c.l.b16 %v510
  %v543 = vunpack.c.l.b16 %v511
  %v544 = vunpack.c.l.b16 %v512
  %v545 = vunpack.c.l.b16 %v513
  %v546 = vunpack.c.l.b16 %v514
  %v547 = vunpack.c.l.b16 %v515
  %v548 = vunpack.c.l.b16 %v516
  %v549 = vunpack.c.l.b16 %v517
  %v550 = vunpack.c.l.b16 %v518
  %v551 = vpack.c.b16 %v536, %v535
  %v552 = vpack.c.b16 %v538, %v537
  %v553 = vpack.c.b16 %v540, %v539
  %v554 = vpack.c.b16 %v542, %v541
  %v555 = vpack.c.b16 %v544, %v543
  %v556 = vpack.c.b16 %v546, %v545
  %v557 = vpack.c.b16 %v548, %v547
  %v558 = vpack.c.b16 %v550, %v549
  %567 = vmatpush.bf16.msra.mxu0 %v558
  %568 = vmatpush.bf16.msra.mxu0 %v557
  %569 = vmatpush.bf16.msra.mxu0 %v556
  %570 = vmatpush.bf16.msra.mxu0 %v555
  %571 = vmatpush.bf16.msra.mxu0 %v554
  %572 = vmatpush.bf16.msra.mxu0 %v553
  %573 = vmatpush.bf16.msra.mxu0 %v552
  %574 = vmatpush.bf16.msra.mxu0 %v551
  %575 = vmatmul.bf16.gmra.mxu0 %v418
  %v576 = vpop.f32.mrf.mxu0
  %v577 = vadd.f32 0.0, %v576
  %v578 = vpop.f32.mrf.mxu0
  %579 = vdwg.mxu0
  %v580 = vadd.f32 %v502, %v577
  %v581 = vmul.f32 %v580, 0.5
  %v582 = vtanh.pop %v581
  %v583 = vmul.f32 %v582, 0.5
  %v584 = vadd.f32 %v583, 0.5
  %v585 = vld [vmem:[#allocation2 + $0x10] sm:$0xff]
  %v586 = vld [vmem:[%s2 + $0x8] sm:$0xf]
  %v587 = vld [vmem:[%s2 + $0x18] sm:$0xf]
  %v588 = vld [vmem:[%s2 + $0x28] sm:$0xf]
  %v589 = vld [vmem:[%s2 + $0x38] sm:$0xf]
  %v590 = vld [vmem:[%s2 + $0x48] sm:$0xf]
  %v591 = vld [vmem:[%s2 + $0x58] sm:$0xf]
  %v592 = vld [vmem:[%s2 + $0x68] sm:$0xf]
  %v593 = vld [vmem:[%s2 + $0x78] sm:$0xf]
  %v594 = vld [vmem:[%s2 + $0x88] sm:$0xf]
  %v595 = vld [vmem:[%s2 + $0x98] sm:$0xf]
  %v596 = vld [vmem:[%s2 + $0xa8] sm:$0xf]
  %v597 = vld [vmem:[%s2 + $0xb8] sm:$0xf]
  %v598 = vld [vmem:[%s2 + $0xc8] sm:$0xf]
  %v599 = vld [vmem:[%s2 + $0xd8] sm:$0xf]
  %v600 = vld [vmem:[%s2 + $0xe8] sm:$0xf]
  %v601 = vld [vmem:[%s2 + $0xf8] sm:$0xf]
  %v618 = vunpack.c.l.b16 %v586
  %v619 = vunpack.c.l.b16 %v587
  %v620 = vunpack.c.l.b16 %v588
  %v621 = vunpack.c.l.b16 %v589
  %v622 = vunpack.c.l.b16 %v590
  %v623 = vunpack.c.l.b16 %v591
  %v624 = vunpack.c.l.b16 %v592
  %v625 = vunpack.c.l.b16 %v593
  %v626 = vunpack.c.l.b16 %v594
  %v627 = vunpack.c.l.b16 %v595
  %v628 = vunpack.c.l.b16 %v596
  %v629 = vunpack.c.l.b16 %v597
  %v630 = vunpack.c.l.b16 %v598
  %v631 = vunpack.c.l.b16 %v599
  %v632 = vunpack.c.l.b16 %v600
  %v633 = vunpack.c.l.b16 %v601
  %v634 = vpack.c.b16 %v619, %v618
  %v635 = vpack.c.b16 %v621, %v620
  %v636 = vpack.c.b16 %v623, %v622
  %v637 = vpack.c.b16 %v625, %v624
  %v638 = vpack.c.b16 %v627, %v626
  %v639 = vpack.c.b16 %v629, %v628
  %v640 = vpack.c.b16 %v631, %v630
  %v641 = vpack.c.b16 %v633, %v632
  %650 = vmatpush.bf16.msra.mxu0 %v641
  %651 = vmatpush.bf16.msra.mxu0 %v640
  %652 = vmatpush.bf16.msra.mxu0 %v639
  %653 = vmatpush.bf16.msra.mxu0 %v638
  %654 = vmatpush.bf16.msra.mxu0 %v637
  %655 = vmatpush.bf16.msra.mxu0 %v636
  %656 = vmatpush.bf16.msra.mxu0 %v635
  %657 = vmatpush.bf16.msra.mxu0 %v634
  %658 = vmatmul.bf16.gmra.mxu0 %v418
  %v659 = vpop.f32.mrf.mxu0
  %v660 = vadd.f32 0.0, %v659
  %v661 = vpop.f32.mrf.mxu0
  %662 = vdwg.mxu0
  %v663 = vadd.f32 %v585, %v660
  %v664 = vtanh.pop %v663
  %v665 = vld [vmem:[#allocation2 + $0x18] sm:$0xff]
  %v666 = vld [vmem:[%s2 + $0xc] sm:$0xf]
  %v667 = vld [vmem:[%s2 + $0x1c] sm:$0xf]
  %v668 = vld [vmem:[%s2 + $0x2c] sm:$0xf]
  %v669 = vld [vmem:[%s2 + $0x3c] sm:$0xf]
  %v670 = vld [vmem:[%s2 + $0x4c] sm:$0xf]
  %v671 = vld [vmem:[%s2 + $0x5c] sm:$0xf]
  %v672 = vld [vmem:[%s2 + $0x6c] sm:$0xf]
  %v673 = vld [vmem:[%s2 + $0x7c] sm:$0xf]
  %v674 = vld [vmem:[%s2 + $0x8c] sm:$0xf]
  %v675 = vld [vmem:[%s2 + $0x9c] sm:$0xf]
  %v676 = vld [vmem:[%s2 + $0xac] sm:$0xf]
  %v677 = vld [vmem:[%s2 + $0xbc] sm:$0xf]
  %v678 = vld [vmem:[%s2 + $0xcc] sm:$0xf]
  %v679 = vld [vmem:[%s2 + $0xdc] sm:$0xf]
  %v680 = vld [vmem:[%s2 + $0xec] sm:$0xf]
  %v681 = vld [vmem:[%s2 + $0xfc] sm:$0xf]
  %v698 = vunpack.c.l.b16 %v666
  %v699 = vunpack.c.l.b16 %v667
  %v700 = vunpack.c.l.b16 %v668
  %v701 = vunpack.c.l.b16 %v669
  %v702 = vunpack.c.l.b16 %v670
  %v703 = vunpack.c.l.b16 %v671
  %v704 = vunpack.c.l.b16 %v672
  %v705 = vunpack.c.l.b16 %v673
  %v706 = vunpack.c.l.b16 %v674
  %v707 = vunpack.c.l.b16 %v675
  %v708 = vunpack.c.l.b16 %v676
  %v709 = vunpack.c.l.b16 %v677
  %v710 = vunpack.c.l.b16 %v678
  %v711 = vunpack.c.l.b16 %v679
  %v712 = vunpack.c.l.b16 %v680
  %v713 = vunpack.c.l.b16 %v681
  %v714 = vpack.c.b16 %v699, %v698
  %v715 = vpack.c.b16 %v701, %v700
  %v716 = vpack.c.b16 %v703, %v702
  %v717 = vpack.c.b16 %v705, %v704
  %v718 = vpack.c.b16 %v707, %v706
  %v719 = vpack.c.b16 %v709, %v708
  %v720 = vpack.c.b16 %v711, %v710
  %v721 = vpack.c.b16 %v713, %v712
  %730 = vmatpush.bf16.msra.mxu0 %v721
  %731 = vmatpush.bf16.msra.mxu0 %v720
  %732 = vmatpush.bf16.msra.mxu0 %v719
  %733 = vmatpush.bf16.msra.mxu0 %v718
  %734 = vmatpush.bf16.msra.mxu0 %v717
  %735 = vmatpush.bf16.msra.mxu0 %v716
  %736 = vmatpush.bf16.msra.mxu0 %v715
  %737 = vmatpush.bf16.msra.mxu0 %v714
  %738 = vmatmul.bf16.gmra.mxu0 %v418
  %v739 = vpop.f32.mrf.mxu0
  %v740 = vadd.f32 0.0, %v739
  %v741 = vpop.f32.mrf.mxu0
  %742 = vdwg.mxu0
  %v743 = vadd.f32 %v665, %v740
  %v744 = vmul.f32 %v743, 0.5
  %v745 = vtanh.pop %v744
  %v746 = vmul.f32 %v745, 0.5
  %v747 = vadd.f32 %v746, 0.5
  %v748 = vmul.f32 %v584, %v417
  %v749 = vmul.f32 %v501, %v664
  %v750 = vadd.f32 %v748, %v749
  %v751 = vtanh.pop %v750
  %v752 = vmul.f32 %v747, %v751
  %v753 = vpack.c.bf16 %v752, %v752
  %754 = vst [vmem:[%s6] sm:$0xf] %v753
  %s755 = scalar_lea.vmem [#allocation2], 32
  %v756 = vld [vmem:[%s755] sm:$0xff]
  %v757 = vld [vmem:[%s2] sm:$0xf]
  %v758 = vld [vmem:[%s2 + $0x10] sm:$0xf]
  %v759 = vld [vmem:[%s2 + $0x20] sm:$0xf]
  %v760 = vld [vmem:[%s2 + $0x30] sm:$0xf]
  %v761 = vld [vmem:[%s2 + $0x40] sm:$0xf]
  %v762 = vld [vmem:[%s2 + $0x50] sm:$0xf]
  %v763 = vld [vmem:[%s2 + $0x60] sm:$0xf]
  %v764 = vld [vmem:[%s2 + $0x70] sm:$0xf]
  %v765 = vld [vmem:[%s2 + $0x80] sm:$0xf]
  %v766 = vld [vmem:[%s2 + $0x90] sm:$0xf]
  %v767 = vld [vmem:[%s2 + $0xa0] sm:$0xf]
  %v768 = vld [vmem:[%s2 + $0xb0] sm:$0xf]
  %v769 = vld [vmem:[%s2 + $0xc0] sm:$0xf]
  %v770 = vld [vmem:[%s2 + $0xd0] sm:$0xf]
  %v771 = vld [vmem:[%s2 + $0xe0] sm:$0xf]
  %v772 = vld [vmem:[%s2 + $0xf0] sm:$0xf]
  %v789 = vunpack.c.l.b16 %v757
  %v790 = vunpack.c.l.b16 %v758
  %v791 = vunpack.c.l.b16 %v759
  %v792 = vunpack.c.l.b16 %v760
  %v793 = vunpack.c.l.b16 %v761
  %v794 = vunpack.c.l.b16 %v762
  %v795 = vunpack.c.l.b16 %v763
  %v796 = vunpack.c.l.b16 %v764
  %v797 = vunpack.c.l.b16 %v765
  %v798 = vunpack.c.l.b16 %v766
  %v799 = vunpack.c.l.b16 %v767
  %v800 = vunpack.c.l.b16 %v768
  %v801 = vunpack.c.l.b16 %v769
  %v802 = vunpack.c.l.b16 %v770
  %v803 = vunpack.c.l.b16 %v771
  %v804 = vunpack.c.l.b16 %v772
  %v805 = vpack.c.b16 %v790, %v789
  %v806 = vpack.c.b16 %v792, %v791
  %v807 = vpack.c.b16 %v794, %v793
  %v808 = vpack.c.b16 %v796, %v795
  %v809 = vpack.c.b16 %v798, %v797
  %v810 = vpack.c.b16 %v800, %v799
  %v811 = vpack.c.b16 %v802, %v801
  %v812 = vpack.c.b16 %v804, %v803
  %821 = vmatpush.bf16.msra.mxu0 %v812
  %822 = vmatpush.bf16.msra.mxu0 %v811
  %823 = vmatpush.bf16.msra.mxu0 %v810
  %824 = vmatpush.bf16.msra.mxu0 %v809
  %825 = vmatpush.bf16.msra.mxu0 %v808
  %826 = vmatpush.bf16.msra.mxu0 %v807
  %827 = vmatpush.bf16.msra.mxu0 %v806
  %828 = vmatpush.bf16.msra.mxu0 %v805
  %829 = vmatmul.bf16.gmra.mxu0 %v753
  %v830 = vpop.f32.mrf.mxu0
  %v831 = vadd.f32 0.0, %v830
  %v832 = vpop.f32.mrf.mxu0
  %833 = vdwg.mxu0
  %v834 = vadd.f32 %v756, %v831
  %v835 = vmul.f32 %v834, 0.5
  %v836 = vtanh.pop %v835
  %v837 = vmul.f32 %v836, 0.5
  %v838 = vadd.f32 %v837, 0.5
  %v839 = vld [vmem:[%s755 + $0x8] sm:$0xff]
  %v840 = vld [vmem:[%s2 + $0x4] sm:$0xf]
  %v841 = vld [vmem:[%s2 + $0x14] sm:$0xf]
  %v842 = vld [vmem:[%s2 + $0x24] sm:$0xf]
  %v843 = vld [vmem:[%s2 + $0x34] sm:$0xf]
  %v844 = vld [vmem:[%s2 + $0x44] sm:$0xf]
  %v845 = vld [vmem:[%s2 + $0x54] sm:$0xf]
  %v846 = vld [vmem:[%s2 + $0x64] sm:$0xf]
  %v847 = vld [vmem:[%s2 + $0x74] sm:$0xf]
  %v848 = vld [vmem:[%s2 + $0x84] sm:$0xf]
  %v849 = vld [vmem:[%s2 + $0x94] sm:$0xf]
  %v850 = vld [vmem:[%s2 + $0xa4] sm:$0xf]
  %v851 = vld [vmem:[%s2 + $0xb4] sm:$0xf]
  %v852 = vld [vmem:[%s2 + $0xc4] sm:$0xf]
  %v853 = vld [vmem:[%s2 + $0xd4] sm:$0xf]
  %v854 = vld [vmem:[%s2 + $0xe4] sm:$0xf]
  %v855 = vld [vmem:[%s2 + $0xf4] sm:$0xf]
  %v872 = vunpack.c.l.b16 %v840
  %v873 = vunpack.c.l.b16 %v841
  %v874 = vunpack.c.l.b16 %v842
  %v875 = vunpack.c.l.b16 %v843
  %v876 = vunpack.c.l.b16 %v844
  %v877 = vunpack.c.l.b16 %v845
  %v878 = vunpack.c.l.b16 %v846
  %v879 = vunpack.c.l.b16 %v847
  %v880 = vunpack.c.l.b16 %v848
  %v881 = vunpack.c.l.b16 %v849
  %v882 = vunpack.c.l.b16 %v850
  %v883 = vunpack.c.l.b16 %v851
  %v884 = vunpack.c.l.b16 %v852
  %v885 = vunpack.c.l.b16 %v853
  %v886 = vunpack.c.l.b16 %v854
  %v887 = vunpack.c.l.b16 %v855
  %v888 = vpack.c.b16 %v873, %v872
  %v889 = vpack.c.b16 %v875, %v874
  %v890 = vpack.c.b16 %v877, %v876
  %v891 = vpack.c.b16 %v879, %v878
  %v892 = vpack.c.b16 %v881, %v880
  %v893 = vpack.c.b16 %v883, %v882
  %v894 = vpack.c.b16 %v885, %v884
  %v895 = vpack.c.b16 %v887, %v886
  %904 = vmatpush.bf16.msra.mxu0 %v895
  %905 = vmatpush.bf16.msra.mxu0 %v894
  %906 = vmatpush.bf16.msra.mxu0 %v893
  %907 = vmatpush.bf16.msra.mxu0 %v892
  %908 = vmatpush.bf16.msra.mxu0 %v891
  %909 = vmatpush.bf16.msra.mxu0 %v890
  %910 = vmatpush.bf16.msra.mxu0 %v889
  %911 = vmatpush.bf16.msra.mxu0 %v888
  %912 = vmatmul.bf16.gmra.mxu0 %v753
  %v913 = vpop.f32.mrf.mxu0
  %v914 = vadd.f32 0.0, %v913
  %v915 = vpop.f32.mrf.mxu0
  %916 = vdwg.mxu0
  %v917 = vadd.f32 %v839, %v914
  %v918 = vmul.f32 %v917, 0.5
  %v919 = vtanh.pop %v918
  %v920 = vmul.f32 %v919, 0.5
  %v921 = vadd.f32 %v920, 0.5
  %v922 = vld [vmem:[%s755 + $0x10] sm:$0xff]
  %v923 = vld [vmem:[%s2 + $0x8] sm:$0xf]
  %v924 = vld [vmem:[%s2 + $0x18] sm:$0xf]
  %v925 = vld [vmem:[%s2 + $0x28] sm:$0xf]
  %v926 = vld [vmem:[%s2 + $0x38] sm:$0xf]
  %v927 = vld [vmem:[%s2 + $0x48] sm:$0xf]
  %v928 = vld [vmem:[%s2 + $0x58] sm:$0xf]
  %v929 = vld [vmem:[%s2 + $0x68] sm:$0xf]
  %v930 = vld [vmem:[%s2 + $0x78] sm:$0xf]
  %v931 = vld [vmem:[%s2 + $0x88] sm:$0xf]
  %v932 = vld [vmem:[%s2 + $0x98] sm:$0xf]
  %v933 = vld [vmem:[%s2 + $0xa8] sm:$0xf]
  %v934 = vld [vmem:[%s2 + $0xb8] sm:$0xf]
  %v935 = vld [vmem:[%s2 + $0xc8] sm:$0xf]
  %v936 = vld [vmem:[%s2 + $0xd8] sm:$0xf]
  %v937 = vld [vmem:[%s2 + $0xe8] sm:$0xf]
  %v938 = vld [vmem:[%s2 + $0xf8] sm:$0xf]
  %v955 = vunpack.c.l.b16 %v923
  %v956 = vunpack.c.l.b16 %v924
  %v957 = vunpack.c.l.b16 %v925
  %v958 = vunpack.c.l.b16 %v926
  %v959 = vunpack.c.l.b16 %v927
  %v960 = vunpack.c.l.b16 %v928
  %v961 = vunpack.c.l.b16 %v929
  %v962 = vunpack.c.l.b16 %v930
  %v963 = vunpack.c.l.b16 %v931
  %v964 = vunpack.c.l.b16 %v932
  %v965 = vunpack.c.l.b16 %v933
  %v966 = vunpack.c.l.b16 %v934
  %v967 = vunpack.c.l.b16 %v935
  %v968 = vunpack.c.l.b16 %v936
  %v969 = vunpack.c.l.b16 %v937
  %v970 = vunpack.c.l.b16 %v938
  %v971 = vpack.c.b16 %v956, %v955
  %v972 = vpack.c.b16 %v958, %v957
  %v973 = vpack.c.b16 %v960, %v959
  %v974 = vpack.c.b16 %v962, %v961
  %v975 = vpack.c.b16 %v964, %v963
  %v976 = vpack.c.b16 %v966, %v965
  %v977 = vpack.c.b16 %v968, %v967
  %v978 = vpack.c.b16 %v970, %v969
  %987 = vmatpush.bf16.msra.mxu0 %v978
  %988 = vmatpush.bf16.msra.mxu0 %v977
  %989 = vmatpush.bf16.msra.mxu0 %v976
  %990 = vmatpush.bf16.msra.mxu0 %v975
  %991 = vmatpush.bf16.msra.mxu0 %v974
  %992 = vmatpush.bf16.msra.mxu0 %v973
  %993 = vmatpush.bf16.msra.mxu0 %v972
  %994 = vmatpush.bf16.msra.mxu0 %v971
  %995 = vmatmul.bf16.gmra.mxu0 %v753
  %v996 = vpop.f32.mrf.mxu0
  %v997 = vadd.f32 0.0, %v996
  %v998 = vpop.f32.mrf.mxu0
  %999 = vdwg.mxu0
  %v1000 = vadd.f32 %v922, %v997
  %v1001 = vtanh.pop %v1000
  %v1002 = vld [vmem:[%s755 + $0x18] sm:$0xff]
  %v1003 = vld [vmem:[%s2 + $0xc] sm:$0xf]
  %v1004 = vld [vmem:[%s2 + $0x1c] sm:$0xf]
  %v1005 = vld [vmem:[%s2 + $0x2c] sm:$0xf]
  %v1006 = vld [vmem:[%s2 + $0x3c] sm:$0xf]
  %v1007 = vld [vmem:[%s2 + $0x4c] sm:$0xf]
  %v1008 = vld [vmem:[%s2 + $0x5c] sm:$0xf]
  %v1009 = vld [vmem:[%s2 + $0x6c] sm:$0xf]
  %v1010 = vld [vmem:[%s2 + $0x7c] sm:$0xf]
  %v1011 = vld [vmem:[%s2 + $0x8c] sm:$0xf]
  %v1012 = vld [vmem:[%s2 + $0x9c] sm:$0xf]
  %v1013 = vld [vmem:[%s2 + $0xac] sm:$0xf]
  %v1014 = vld [vmem:[%s2 + $0xbc] sm:$0xf]
  %v1015 = vld [vmem:[%s2 + $0xcc] sm:$0xf]
  %v1016 = vld [vmem:[%s2 + $0xdc] sm:$0xf]
  %v1017 = vld [vmem:[%s2 + $0xec] sm:$0xf]
  %v1018 = vld [vmem:[%s2 + $0xfc] sm:$0xf]
  %v1035 = vunpack.c.l.b16 %v1003
  %v1036 = vunpack.c.l.b16 %v1004
  %v1037 = vunpack.c.l.b16 %v1005
  %v1038 = vunpack.c.l.b16 %v1006
  %v1039 = vunpack.c.l.b16 %v1007
  %v1040 = vunpack.c.l.b16 %v1008
  %v1041 = vunpack.c.l.b16 %v1009
  %v1042 = vunpack.c.l.b16 %v1010
  %v1043 = vunpack.c.l.b16 %v1011
  %v1044 = vunpack.c.l.b16 %v1012
  %v1045 = vunpack.c.l.b16 %v1013
  %v1046 = vunpack.c.l.b16 %v1014
  %v1047 = vunpack.c.l.b16 %v1015
  %v1048 = vunpack.c.l.b16 %v1016
  %v1049 = vunpack.c.l.b16 %v1017
  %v1050 = vunpack.c.l.b16 %v1018
  %v1051 = vpack.c.b16 %v1036, %v1035
  %v1052 = vpack.c.b16 %v1038, %v1037
  %v1053 = vpack.c.b16 %v1040, %v1039
  %v1054 = vpack.c.b16 %v1042, %v1041
  %v1055 = vpack.c.b16 %v1044, %v1043
  %v1056 = vpack.c.b16 %v1046, %v1045
  %v1057 = vpack.c.b16 %v1048, %v1047
  %v1058 = vpack.c.b16 %v1050, %v1049
  %1067 = vmatpush.bf16.msra.mxu0 %v1058
  %1068 = vmatpush.bf16.msra.mxu0 %v1057
  %1069 = vmatpush.bf16.msra.mxu0 %v1056
  %1070 = vmatpush.bf16.msra.mxu0 %v1055
  %1071 = vmatpush.bf16.msra.mxu0 %v1054
  %1072 = vmatpush.bf16.msra.mxu0 %v1053
  %1073 = vmatpush.bf16.msra.mxu0 %v1052
  %1074 = vmatpush.bf16.msra.mxu0 %v1051
  %1075 = vmatmul.bf16.gmra.mxu0 %v753
  %v1076 = vpop.f32.mrf.mxu0
  %v1077 = vadd.f32 0.0, %v1076
  %v1078 = vpop.f32.mrf.mxu0
  %1079 = vdwg.mxu0
  %v1080 = vadd.f32 %v1002, %v1077
  %v1081 = vmul.f32 %v1080, 0.5
  %v1082 = vtanh.pop %v1081
  %v1083 = vmul.f32 %v1082, 0.5
  %v1084 = vadd.f32 %v1083, 0.5
  %v1085 = vmul.f32 %v921, %v750
  %v1086 = vmul.f32 %v838, %v1001
  %v1087 = vadd.f32 %v1085, %v1086
  %v1088 = vtanh.pop %v1087
  %v1089 = vmul.f32 %v1084, %v1088
  %v1090 = vpack.c.bf16 %v1089, %v1089
  %s1091 = scalar_lea.vmem %s6, 4
  %1092 = vst [vmem:[%s1091] sm:$0xf] %v1090
  %s1093 = scalar_lea.vmem [#allocation2], 64
  %v1094 = vld [vmem:[%s1093] sm:$0xff]
  %v1095 = vld [vmem:[%s2] sm:$0xf]
  %v1096 = vld [vmem:[%s2 + $0x10] sm:$0xf]
  %v1097 = vld [vmem:[%s2 + $0x20] sm:$0xf]
  %v1098 = vld [vmem:[%s2 + $0x30] sm:$0xf]
  %v1099 = vld [vmem:[%s2 + $0x40] sm:$0xf]
  %v1100 = vld [vmem:[%s2 + $0x50] sm:$0xf]
  %v1101 = vld [vmem:[%s2 + $0x60] sm:$0xf]
  %v1102 = vld [vmem:[%s2 + $0x70] sm:$0xf]
  %v1103 = vld [vmem:[%s2 + $0x80] sm:$0xf]
  %v1104 = vld [vmem:[%s2 + $0x90] sm:$0xf]
  %v1105 = vld [vmem:[%s2 + $0xa0] sm:$0xf]
  %v1106 = vld [vmem:[%s2 + $0xb0] sm:$0xf]
  %v1107 = vld [vmem:[%s2 + $0xc0] sm:$0xf]
  %v1108 = vld [vmem:[%s2 + $0xd0] sm:$0xf]
  %v1109 = vld [vmem:[%s2 + $0xe0] sm:$0xf]
  %v1110 = vld [vmem:[%s2 + $0xf0] sm:$0xf]
  %v1127 = vunpack.c.l.b16 %v1095
  %v1128 = vunpack.c.l.b16 %v1096
  %v1129 = vunpack.c.l.b16 %v1097
  %v1130 = vunpack.c.l.b16 %v1098
  %v1131 = vunpack.c.l.b16 %v1099
  %v1132 = vunpack.c.l.b16 %v1100
  %v1133 = vunpack.c.l.b16 %v1101
  %v1134 = vunpack.c.l.b16 %v1102
  %v1135 = vunpack.c.l.b16 %v1103
  %v1136 = vunpack.c.l.b16 %v1104
  %v1137 = vunpack.c.l.b16 %v1105
  %v1138 = vunpack.c.l.b16 %v1106
  %v1139 = vunpack.c.l.b16 %v1107
  %v1140 = vunpack.c.l.b16 %v1108
  %v1141 = vunpack.c.l.b16 %v1109
  %v1142 = vunpack.c.l.b16 %v1110
  %v1143 = vpack.c.b16 %v1128, %v1127
  %v1144 = vpack.c.b16 %v1130, %v1129
  %v1145 = vpack.c.b16 %v1132, %v1131
  %v1146 = vpack.c.b16 %v1134, %v1133
  %v1147 = vpack.c.b16 %v1136, %v1135
  %v1148 = vpack.c.b16 %v1138, %v1137
  %v1149 = vpack.c.b16 %v1140, %v1139
  %v1150 = vpack.c.b16 %v1142, %v1141
  %1159 = vmatpush.bf16.msra.mxu0 %v1150
  %1160 = vmatpush.bf16.msra.mxu0 %v1149
  %1161 = vmatpush.bf16.msra.mxu0 %v1148
  %1162 = vmatpush.bf16.msra.mxu0 %v1147
  %1163 = vmatpush.bf16.msra.mxu0 %v1146
  %1164 = vmatpush.bf16.msra.mxu0 %v1145
  %1165 = vmatpush.bf16.msra.mxu0 %v1144
  %1166 = vmatpush.bf16.msra.mxu0 %v1143
  %1167 = vmatmul.bf16.gmra.mxu0 %v1090
  %v1168 = vpop.f32.mrf.mxu0
  %v1169 = vadd.f32 0.0, %v1168
  %v1170 = vpop.f32.mrf.mxu0
  %1171 = vdwg.mxu0
  %v1172 = vadd.f32 %v1094, %v1169
  %v1173 = vmul.f32 %v1172, 0.5
  %v1174 = vtanh.pop %v1173
  %v1175 = vmul.f32 %v1174, 0.5
  %v1176 = vadd.f32 %v1175, 0.5
  %v1177 = vld [vmem:[%s1093 + $0x8] sm:$0xff]
  %v1178 = vld [vmem:[%s2 + $0x4] sm:$0xf]
  %v1179 = vld [vmem:[%s2 + $0x14] sm:$0xf]
  %v1180 = vld [vmem:[%s2 + $0x24] sm:$0xf]
  %v1181 = vld [vmem:[%s2 + $0x34] sm:$0xf]
  %v1182 = vld [vmem:[%s2 + $0x44] sm:$0xf]
  %v1183 = vld [vmem:[%s2 + $0x54] sm:$0xf]
  %v1184 = vld [vmem:[%s2 + $0x64] sm:$0xf]
  %v1185 = vld [vmem:[%s2 + $0x74] sm:$0xf]
  %v1186 = vld [vmem:[%s2 + $0x84] sm:$0xf]
  %v1187 = vld [vmem:[%s2 + $0x94] sm:$0xf]
  %v1188 = vld [vmem:[%s2 + $0xa4] sm:$0xf]
  %v1189 = vld [vmem:[%s2 + $0xb4] sm:$0xf]
  %v1190 = vld [vmem:[%s2 + $0xc4] sm:$0xf]
  %v1191 = vld [vmem:[%s2 + $0xd4] sm:$0xf]
  %v1192 = vld [vmem:[%s2 + $0xe4] sm:$0xf]
  %v1193 = vld [vmem:[%s2 + $0xf4] sm:$0xf]
  %v1210 = vunpack.c.l.b16 %v1178
  %v1211 = vunpack.c.l.b16 %v1179
  %v1212 = vunpack.c.l.b16 %v1180
  %v1213 = vunpack.c.l.b16 %v1181
  %v1214 = vunpack.c.l.b16 %v1182
  %v1215 = vunpack.c.l.b16 %v1183
  %v1216 = vunpack.c.l.b16 %v1184
  %v1217 = vunpack.c.l.b16 %v1185
  %v1218 = vunpack.c.l.b16 %v1186
  %v1219 = vunpack.c.l.b16 %v1187
  %v1220 = vunpack.c.l.b16 %v1188
  %v1221 = vunpack.c.l.b16 %v1189
  %v1222 = vunpack.c.l.b16 %v1190
  %v1223 = vunpack.c.l.b16 %v1191
  %v1224 = vunpack.c.l.b16 %v1192
  %v1225 = vunpack.c.l.b16 %v1193
  %v1226 = vpack.c.b16 %v1211, %v1210
  %v1227 = vpack.c.b16 %v1213, %v1212
  %v1228 = vpack.c.b16 %v1215, %v1214
  %v1229 = vpack.c.b16 %v1217, %v1216
  %v1230 = vpack.c.b16 %v1219, %v1218
  %v1231 = vpack.c.b16 %v1221, %v1220
  %v1232 = vpack.c.b16 %v1223, %v1222
  %v1233 = vpack.c.b16 %v1225, %v1224
  %1242 = vmatpush.bf16.msra.mxu0 %v1233
  %1243 = vmatpush.bf16.msra.mxu0 %v1232
  %1244 = vmatpush.bf16.msra.mxu0 %v1231
  %1245 = vmatpush.bf16.msra.mxu0 %v1230
  %1246 = vmatpush.bf16.msra.mxu0 %v1229
  %1247 = vmatpush.bf16.msra.mxu0 %v1228
  %1248 = vmatpush.bf16.msra.mxu0 %v1227
  %1249 = vmatpush.bf16.msra.mxu0 %v1226
  %1250 = vmatmul.bf16.gmra.mxu0 %v1090
  %v1251 = vpop.f32.mrf.mxu0
  %v1252 = vadd.f32 0.0, %v1251
  %v1253 = vpop.f32.mrf.mxu0
  %1254 = vdwg.mxu0
  %v1255 = vadd.f32 %v1177, %v1252
  %v1256 = vmul.f32 %v1255, 0.5
  %v1257 = vtanh.pop %v1256
  %v1258 = vmul.f32 %v1257, 0.5
  %v1259 = vadd.f32 %v1258, 0.5
  %v1260 = vld [vmem:[%s1093 + $0x10] sm:$0xff]
  %v1261 = vld [vmem:[%s2 + $0x8] sm:$0xf]
  %v1262 = vld [vmem:[%s2 + $0x18] sm:$0xf]
  %v1263 = vld [vmem:[%s2 + $0x28] sm:$0xf]
  %v1264 = vld [vmem:[%s2 + $0x38] sm:$0xf]
  %v1265 = vld [vmem:[%s2 + $0x48] sm:$0xf]
  %v1266 = vld [vmem:[%s2 + $0x58] sm:$0xf]
  %v1267 = vld [vmem:[%s2 + $0x68] sm:$0xf]
  %v1268 = vld [vmem:[%s2 + $0x78] sm:$0xf]
  %v1269 = vld [vmem:[%s2 + $0x88] sm:$0xf]
  %v1270 = vld [vmem:[%s2 + $0x98] sm:$0xf]
  %v1271 = vld [vmem:[%s2 + $0xa8] sm:$0xf]
  %v1272 = vld [vmem:[%s2 + $0xb8] sm:$0xf]
  %v1273 = vld [vmem:[%s2 + $0xc8] sm:$0xf]
  %v1274 = vld [vmem:[%s2 + $0xd8] sm:$0xf]
  %v1275 = vld [vmem:[%s2 + $0xe8] sm:$0xf]
  %v1276 = vld [vmem:[%s2 + $0xf8] sm:$0xf]
  %v1293 = vunpack.c.l.b16 %v1261
  %v1294 = vunpack.c.l.b16 %v1262
  %v1295 = vunpack.c.l.b16 %v1263
  %v1296 = vunpack.c.l.b16 %v1264
  %v1297 = vunpack.c.l.b16 %v1265
  %v1298 = vunpack.c.l.b16 %v1266
  %v1299 = vunpack.c.l.b16 %v1267
  %v1300 = vunpack.c.l.b16 %v1268
  %v1301 = vunpack.c.l.b16 %v1269
  %v1302 = vunpack.c.l.b16 %v1270
  %v1303 = vunpack.c.l.b16 %v1271
  %v1304 = vunpack.c.l.b16 %v1272
  %v1305 = vunpack.c.l.b16 %v1273
  %v1306 = vunpack.c.l.b16 %v1274
  %v1307 = vunpack.c.l.b16 %v1275
  %v1308 = vunpack.c.l.b16 %v1276
  %v1309 = vpack.c.b16 %v1294, %v1293
  %v1310 = vpack.c.b16 %v1296, %v1295
  %v1311 = vpack.c.b16 %v1298, %v1297
  %v1312 = vpack.c.b16 %v1300, %v1299
  %v1313 = vpack.c.b16 %v1302, %v1301
  %v1314 = vpack.c.b16 %v1304, %v1303
  %v1315 = vpack.c.b16 %v1306, %v1305
  %v1316 = vpack.c.b16 %v1308, %v1307
  %1325 = vmatpush.bf16.msra.mxu0 %v1316
  %1326 = vmatpush.bf16.msra.mxu0 %v1315
  %1327 = vmatpush.bf16.msra.mxu0 %v1314
  %1328 = vmatpush.bf16.msra.mxu0 %v1313
  %1329 = vmatpush.bf16.msra.mxu0 %v1312
  %1330 = vmatpush.bf16.msra.mxu0 %v1311
  %1331 = vmatpush.bf16.msra.mxu0 %v1310
  %1332 = vmatpush.bf16.msra.mxu0 %v1309
  %1333 = vmatmul.bf16.gmra.mxu0 %v1090
  %v1334 = vpop.f32.mrf.mxu0
  %v1335 = vadd.f32 0.0, %v1334
  %v1336 = vpop.f32.mrf.mxu0
  %1337 = vdwg.mxu0
  %v1338 = vadd.f32 %v1260, %v1335
  %v1339 = vtanh.pop %v1338
  %v1340 = vld [vmem:[%s1093 + $0x18] sm:$0xff]
  %v1341 = vld [vmem:[%s2 + $0xc] sm:$0xf]
  %v1342 = vld [vmem:[%s2 + $0x1c] sm:$0xf]
  %v1343 = vld [vmem:[%s2 + $0x2c] sm:$0xf]
  %v1344 = vld [vmem:[%s2 + $0x3c] sm:$0xf]
  %v1345 = vld [vmem:[%s2 + $0x4c] sm:$0xf]
  %v1346 = vld [vmem:[%s2 + $0x5c] sm:$0xf]
  %v1347 = vld [vmem:[%s2 + $0x6c] sm:$0xf]
  %v1348 = vld [vmem:[%s2 + $0x7c] sm:$0xf]
  %v1349 = vld [vmem:[%s2 + $0x8c] sm:$0xf]
  %v1350 = vld [vmem:[%s2 + $0x9c] sm:$0xf]
  %v1351 = vld [vmem:[%s2 + $0xac] sm:$0xf]
  %v1352 = vld [vmem:[%s2 + $0xbc] sm:$0xf]
  %v1353 = vld [vmem:[%s2 + $0xcc] sm:$0xf]
  %v1354 = vld [vmem:[%s2 + $0xdc] sm:$0xf]
  %v1355 = vld [vmem:[%s2 + $0xec] sm:$0xf]
  %v1356 = vld [vmem:[%s2 + $0xfc] sm:$0xf]
  %v1373 = vunpack.c.l.b16 %v1341
  %v1374 = vunpack.c.l.b16 %v1342
  %v1375 = vunpack.c.l.b16 %v1343
  %v1376 = vunpack.c.l.b16 %v1344
  %v1377 = vunpack.c.l.b16 %v1345
  %v1378 = vunpack.c.l.b16 %v1346
  %v1379 = vunpack.c.l.b16 %v1347
  %v1380 = vunpack.c.l.b16 %v1348
  %v1381 = vunpack.c.l.b16 %v1349
  %v1382 = vunpack.c.l.b16 %v1350
  %v1383 = vunpack.c.l.b16 %v1351
  %v1384 = vunpack.c.l.b16 %v1352
  %v1385 = vunpack.c.l.b16 %v1353
  %v1386 = vunpack.c.l.b16 %v1354
  %v1387 = vunpack.c.l.b16 %v1355
  %v1388 = vunpack.c.l.b16 %v1356
  %v1389 = vpack.c.b16 %v1374, %v1373
  %v1390 = vpack.c.b16 %v1376, %v1375
  %v1391 = vpack.c.b16 %v1378, %v1377
  %v1392 = vpack.c.b16 %v1380, %v1379
  %v1393 = vpack.c.b16 %v1382, %v1381
  %v1394 = vpack.c.b16 %v1384, %v1383
  %v1395 = vpack.c.b16 %v1386, %v1385
  %v1396 = vpack.c.b16 %v1388, %v1387
  %1405 = vmatpush.bf16.msra.mxu0 %v1396
  %1406 = vmatpush.bf16.msra.mxu0 %v1395
  %1407 = vmatpush.bf16.msra.mxu0 %v1394
  %1408 = vmatpush.bf16.msra.mxu0 %v1393
  %1409 = vmatpush.bf16.msra.mxu0 %v1392
  %1410 = vmatpush.bf16.msra.mxu0 %v1391
  %1411 = vmatpush.bf16.msra.mxu0 %v1390
  %1412 = vmatpush.bf16.msra.mxu0 %v1389
  %1413 = vmatmul.bf16.gmra.mxu0 %v1090
  %v1414 = vpop.f32.mrf.mxu0
  %v1415 = vadd.f32 0.0, %v1414
  %v1416 = vpop.f32.mrf.mxu0
  %1417 = vdwg.mxu0
  %v1418 = vadd.f32 %v1340, %v1415
  %v1419 = vmul.f32 %v1418, 0.5
  %v1420 = vtanh.pop %v1419
  %v1421 = vmul.f32 %v1420, 0.5
  %v1422 = vadd.f32 %v1421, 0.5
  %v1423 = vmul.f32 %v1259, %v1087
  %v1424 = vmul.f32 %v1176, %v1339
  %v1425 = vadd.f32 %v1423, %v1424
  %v1426 = vtanh.pop %v1425
  %v1427 = vmul.f32 %v1422, %v1426
  %v1428 = vpack.c.bf16 %v1427, %v1427
  %s1429 = scalar_lea.vmem %s6, 8
  %1430 = vst [vmem:[%s1429] sm:$0xf] %v1428
  %s1431 = scalar_lea.vmem [#allocation2], 96
  %v1432 = vld [vmem:[%s1431] sm:$0xff]
  %v1433 = vld [vmem:[%s2] sm:$0xf]
  %v1434 = vld [vmem:[%s2 + $0x10] sm:$0xf]
  %v1435 = vld [vmem:[%s2 + $0x20] sm:$0xf]
  %v1436 = vld [vmem:[%s2 + $0x30] sm:$0xf]
  %v1437 = vld [vmem:[%s2 + $0x40] sm:$0xf]
  %v1438 = vld [vmem:[%s2 + $0x50] sm:$0xf]
  %v1439 = vld [vmem:[%s2 + $0x60] sm:$0xf]
  %v1440 = vld [vmem:[%s2 + $0x70] sm:$0xf]
  %v1441 = vld [vmem:[%s2 + $0x80] sm:$0xf]
  %v1442 = vld [vmem:[%s2 + $0x90] sm:$0xf]
  %v1443 = vld [vmem:[%s2 + $0xa0] sm:$0xf]
  %v1444 = vld [vmem:[%s2 + $0xb0] sm:$0xf]
  %v1445 = vld [vmem:[%s2 + $0xc0] sm:$0xf]
  %v1446 = vld [vmem:[%s2 + $0xd0] sm:$0xf]
  %v1447 = vld [vmem:[%s2 + $0xe0] sm:$0xf]
  %v1448 = vld [vmem:[%s2 + $0xf0] sm:$0xf]
  %v1465 = vunpack.c.l.b16 %v1433
  %v1466 = vunpack.c.l.b16 %v1434
  %v1467 = vunpack.c.l.b16 %v1435
  %v1468 = vunpack.c.l.b16 %v1436
  %v1469 = vunpack.c.l.b16 %v1437
  %v1470 = vunpack.c.l.b16 %v1438
  %v1471 = vunpack.c.l.b16 %v1439
  %v1472 = vunpack.c.l.b16 %v1440
  %v1473 = vunpack.c.l.b16 %v1441
  %v1474 = vunpack.c.l.b16 %v1442
  %v1475 = vunpack.c.l.b16 %v1443
  %v1476 = vunpack.c.l.b16 %v1444
  %v1477 = vunpack.c.l.b16 %v1445
  %v1478 = vunpack.c.l.b16 %v1446
  %v1479 = vunpack.c.l.b16 %v1447
  %v1480 = vunpack.c.l.b16 %v1448
  %v1481 = vpack.c.b16 %v1466, %v1465
  %v1482 = vpack.c.b16 %v1468, %v1467
  %v1483 = vpack.c.b16 %v1470, %v1469
  %v1484 = vpack.c.b16 %v1472, %v1471
  %v1485 = vpack.c.b16 %v1474, %v1473
  %v1486 = vpack.c.b16 %v1476, %v1475
  %v1487 = vpack.c.b16 %v1478, %v1477
  %v1488 = vpack.c.b16 %v1480, %v1479
  %1497 = vmatpush.bf16.msra.mxu0 %v1488
  %1498 = vmatpush.bf16.msra.mxu0 %v1487
  %1499 = vmatpush.bf16.msra.mxu0 %v1486
  %1500 = vmatpush.bf16.msra.mxu0 %v1485
  %1501 = vmatpush.bf16.msra.mxu0 %v1484
  %1502 = vmatpush.bf16.msra.mxu0 %v1483
  %1503 = vmatpush.bf16.msra.mxu0 %v1482
  %1504 = vmatpush.bf16.msra.mxu0 %v1481
  %1505 = vmatmul.bf16.gmra.mxu0 %v1428
  %v1506 = vpop.f32.mrf.mxu0
  %v1507 = vadd.f32 0.0, %v1506
  %v1508 = vpop.f32.mrf.mxu0
  %1509 = vdwg.mxu0
  %v1510 = vadd.f32 %v1432, %v1507
  %v1511 = vmul.f32 %v1510, 0.5
  %v1512 = vtanh.pop %v1511
  %v1513 = vmul.f32 %v1512, 0.5
  %v1514 = vadd.f32 %v1513, 0.5
  %v1515 = vld [vmem:[%s1431 + $0x8] sm:$0xff]
  %v1516 = vld [vmem:[%s2 + $0x4] sm:$0xf]
  %v1517 = vld [vmem:[%s2 + $0x14] sm:$0xf]
  %v1518 = vld [vmem:[%s2 + $0x24] sm:$0xf]
  %v1519 = vld [vmem:[%s2 + $0x34] sm:$0xf]
  %v1520 = vld [vmem:[%s2 + $0x44] sm:$0xf]
  %v1521 = vld [vmem:[%s2 + $0x54] sm:$0xf]
  %v1522 = vld [vmem:[%s2 + $0x64] sm:$0xf]
  %v1523 = vld [vmem:[%s2 + $0x74] sm:$0xf]
  %v1524 = vld [vmem:[%s2 + $0x84] sm:$0xf]
  %v1525 = vld [vmem:[%s2 + $0x94] sm:$0xf]
  %v1526 = vld [vmem:[%s2 + $0xa4] sm:$0xf]
  %v1527 = vld [vmem:[%s2 + $0xb4] sm:$0xf]
  %v1528 = vld [vmem:[%s2 + $0xc4] sm:$0xf]
  %v1529 = vld [vmem:[%s2 + $0xd4] sm:$0xf]
  %v1530 = vld [vmem:[%s2 + $0xe4] sm:$0xf]
  %v1531 = vld [vmem:[%s2 + $0xf4] sm:$0xf]
  %v1548 = vunpack.c.l.b16 %v1516
  %v1549 = vunpack.c.l.b16 %v1517
  %v1550 = vunpack.c.l.b16 %v1518
  %v1551 = vunpack.c.l.b16 %v1519
  %v1552 = vunpack.c.l.b16 %v1520
  %v1553 = vunpack.c.l.b16 %v1521
  %v1554 = vunpack.c.l.b16 %v1522
  %v1555 = vunpack.c.l.b16 %v1523
  %v1556 = vunpack.c.l.b16 %v1524
  %v1557 = vunpack.c.l.b16 %v1525
  %v1558 = vunpack.c.l.b16 %v1526
  %v1559 = vunpack.c.l.b16 %v1527
  %v1560 = vunpack.c.l.b16 %v1528
  %v1561 = vunpack.c.l.b16 %v1529
  %v1562 = vunpack.c.l.b16 %v1530
  %v1563 = vunpack.c.l.b16 %v1531
  %v1564 = vpack.c.b16 %v1549, %v1548
  %v1565 = vpack.c.b16 %v1551, %v1550
  %v1566 = vpack.c.b16 %v1553, %v1552
  %v1567 = vpack.c.b16 %v1555, %v1554
  %v1568 = vpack.c.b16 %v1557, %v1556
  %v1569 = vpack.c.b16 %v1559, %v1558
  %v1570 = vpack.c.b16 %v1561, %v1560
  %v1571 = vpack.c.b16 %v1563, %v1562
  %1580 = vmatpush.bf16.msra.mxu0 %v1571
  %1581 = vmatpush.bf16.msra.mxu0 %v1570
  %1582 = vmatpush.bf16.msra.mxu0 %v1569
  %1583 = vmatpush.bf16.msra.mxu0 %v1568
  %1584 = vmatpush.bf16.msra.mxu0 %v1567
  %1585 = vmatpush.bf16.msra.mxu0 %v1566
  %1586 = vmatpush.bf16.msra.mxu0 %v1565
  %1587 = vmatpush.bf16.msra.mxu0 %v1564
  %1588 = vmatmul.bf16.gmra.mxu0 %v1428
  %v1589 = vpop.f32.mrf.mxu0
  %v1590 = vadd.f32 0.0, %v1589
  %v1591 = vpop.f32.mrf.mxu0
  %1592 = vdwg.mxu0
  %v1593 = vadd.f32 %v1515, %v1590
  %v1594 = vmul.f32 %v1593, 0.5
  %v1595 = vtanh.pop %v1594
  %v1596 = vmul.f32 %v1595, 0.5
  %v1597 = vadd.f32 %v1596, 0.5
  %v1598 = vld [vmem:[%s1431 + $0x10] sm:$0xff]
  %v1599 = vld [vmem:[%s2 + $0x8] sm:$0xf]
  %v1600 = vld [vmem:[%s2 + $0x18] sm:$0xf]
  %v1601 = vld [vmem:[%s2 + $0x28] sm:$0xf]
  %v1602 = vld [vmem:[%s2 + $0x38] sm:$0xf]
  %v1603 = vld [vmem:[%s2 + $0x48] sm:$0xf]
  %v1604 = vld [vmem:[%s2 + $0x58] sm:$0xf]
  %v1605 = vld [vmem:[%s2 + $0x68] sm:$0xf]
  %v1606 = vld [vmem:[%s2 + $0x78] sm:$0xf]
  %v1607 = vld [vmem:[%s2 + $0x88] sm:$0xf]
  %v1608 = vld [vmem:[%s2 + $0x98] sm:$0xf]
  %v1609 = vld [vmem:[%s2 + $0xa8] sm:$0xf]
  %v1610 = vld [vmem:[%s2 + $0xb8] sm:$0xf]
  %v1611 = vld [vmem:[%s2 + $0xc8] sm:$0xf]
  %v1612 = vld [vmem:[%s2 + $0xd8] sm:$0xf]
  %v1613 = vld [vmem:[%s2 + $0xe8] sm:$0xf]
  %v1614 = vld [vmem:[%s2 + $0xf8] sm:$0xf]
  %v1631 = vunpack.c.l.b16 %v1599
  %v1632 = vunpack.c.l.b16 %v1600
  %v1633 = vunpack.c.l.b16 %v1601
  %v1634 = vunpack.c.l.b16 %v1602
  %v1635 = vunpack.c.l.b16 %v1603
  %v1636 = vunpack.c.l.b16 %v1604
  %v1637 = vunpack.c.l.b16 %v1605
  %v1638 = vunpack.c.l.b16 %v1606
  %v1639 = vunpack.c.l.b16 %v1607
  %v1640 = vunpack.c.l.b16 %v1608
  %v1641 = vunpack.c.l.b16 %v1609
  %v1642 = vunpack.c.l.b16 %v1610
  %v1643 = vunpack.c.l.b16 %v1611
  %v1644 = vunpack.c.l.b16 %v1612
  %v1645 = vunpack.c.l.b16 %v1613
  %v1646 = vunpack.c.l.b16 %v1614
  %v1647 = vpack.c.b16 %v1632, %v1631
  %v1648 = vpack.c.b16 %v1634, %v1633
  %v1649 = vpack.c.b16 %v1636, %v1635
  %v1650 = vpack.c.b16 %v1638, %v1637
  %v1651 = vpack.c.b16 %v1640, %v1639
  %v1652 = vpack.c.b16 %v1642, %v1641
  %v1653 = vpack.c.b16 %v1644, %v1643
  %v1654 = vpack.c.b16 %v1646, %v1645
  %1663 = vmatpush.bf16.msra.mxu0 %v1654
  %1664 = vmatpush.bf16.msra.mxu0 %v1653
  %1665 = vmatpush.bf16.msra.mxu0 %v1652
  %1666 = vmatpush.bf16.msra.mxu0 %v1651
  %1667 = vmatpush.bf16.msra.mxu0 %v1650
  %1668 = vmatpush.bf16.msra.mxu0 %v1649
  %1669 = vmatpush.bf16.msra.mxu0 %v1648
  %1670 = vmatpush.bf16.msra.mxu0 %v1647
  %1671 = vmatmul.bf16.gmra.mxu0 %v1428
  %v1672 = vpop.f32.mrf.mxu0
  %v1673 = vadd.f32 0.0, %v1672
  %v1674 = vpop.f32.mrf.mxu0
  %1675 = vdwg.mxu0
  %v1676 = vadd.f32 %v1598, %v1673
  %v1677 = vtanh.pop %v1676
  %v1678 = vld [vmem:[%s1431 + $0x18] sm:$0xff]
  %v1679 = vld [vmem:[%s2 + $0xc] sm:$0xf]
  %v1680 = vld [vmem:[%s2 + $0x1c] sm:$0xf]
  %v1681 = vld [vmem:[%s2 + $0x2c] sm:$0xf]
  %v1682 = vld [vmem:[%s2 + $0x3c] sm:$0xf]
  %v1683 = vld [vmem:[%s2 + $0x4c] sm:$0xf]
  %v1684 = vld [vmem:[%s2 + $0x5c] sm:$0xf]
  %v1685 = vld [vmem:[%s2 + $0x6c] sm:$0xf]
  %v1686 = vld [vmem:[%s2 + $0x7c] sm:$0xf]
  %v1687 = vld [vmem:[%s2 + $0x8c] sm:$0xf]
  %v1688 = vld [vmem:[%s2 + $0x9c] sm:$0xf]
  %v1689 = vld [vmem:[%s2 + $0xac] sm:$0xf]
  %v1690 = vld [vmem:[%s2 + $0xbc] sm:$0xf]
  %v1691 = vld [vmem:[%s2 + $0xcc] sm:$0xf]
  %v1692 = vld [vmem:[%s2 + $0xdc] sm:$0xf]
  %v1693 = vld [vmem:[%s2 + $0xec] sm:$0xf]
  %v1694 = vld [vmem:[%s2 + $0xfc] sm:$0xf]
  %v1711 = vunpack.c.l.b16 %v1679
  %v1712 = vunpack.c.l.b16 %v1680
  %v1713 = vunpack.c.l.b16 %v1681
  %v1714 = vunpack.c.l.b16 %v1682
  %v1715 = vunpack.c.l.b16 %v1683
  %v1716 = vunpack.c.l.b16 %v1684
  %v1717 = vunpack.c.l.b16 %v1685
  %v1718 = vunpack.c.l.b16 %v1686
  %v1719 = vunpack.c.l.b16 %v1687
  %v1720 = vunpack.c.l.b16 %v1688
  %v1721 = vunpack.c.l.b16 %v1689
  %v1722 = vunpack.c.l.b16 %v1690
  %v1723 = vunpack.c.l.b16 %v1691
  %v1724 = vunpack.c.l.b16 %v1692
  %v1725 = vunpack.c.l.b16 %v1693
  %v1726 = vunpack.c.l.b16 %v1694
  %v1727 = vpack.c.b16 %v1712, %v1711
  %v1728 = vpack.c.b16 %v1714, %v1713
  %v1729 = vpack.c.b16 %v1716, %v1715
  %v1730 = vpack.c.b16 %v1718, %v1717
  %v1731 = vpack.c.b16 %v1720, %v1719
  %v1732 = vpack.c.b16 %v1722, %v1721
  %v1733 = vpack.c.b16 %v1724, %v1723
  %v1734 = vpack.c.b16 %v1726, %v1725
  %1743 = vmatpush.bf16.msra.mxu0 %v1734
  %1744 = vmatpush.bf16.msra.mxu0 %v1733
  %1745 = vmatpush.bf16.msra.mxu0 %v1732
  %1746 = vmatpush.bf16.msra.mxu0 %v1731
  %1747 = vmatpush.bf16.msra.mxu0 %v1730
  %1748 = vmatpush.bf16.msra.mxu0 %v1729
  %1749 = vmatpush.bf16.msra.mxu0 %v1728
  %1750 = vmatpush.bf16.msra.mxu0 %v1727
  %1751 = vmatmul.bf16.gmra.mxu0 %v1428
  %v1752 = vpop.f32.mrf.mxu0
  %v1753 = vadd.f32 0.0, %v1752
  %v1754 = vpop.f32.mrf.mxu0
  %1755 = vdwg.mxu0
  %v1756 = vadd.f32 %v1678, %v1753
  %v1757 = vmul.f32 %v1756, 0.5
  %v1758 = vtanh.pop %v1757
  %v1759 = vmul.f32 %v1758, 0.5
  %v1760 = vadd.f32 %v1759, 0.5
  %v1761 = vmul.f32 %v1597, %v1425
  %v1762 = vmul.f32 %v1514, %v1677
  %v1763 = vadd.f32 %v1761, %v1762
  %v1764 = vtanh.pop %v1763
  %v1765 = vmul.f32 %v1760, %v1764
  %v1766 = vpack.c.bf16 %v1765, %v1765
  %s1767 = scalar_lea.vmem %s6, 12
  %1768 = vst [vmem:[%s1767] sm:$0xf] %v1766
  %s1769 = scalar_lea.vmem [#allocation2], 128
  %v1770 = vld [vmem:[%s1769] sm:$0xff]
  %v1771 = vld [vmem:[%s2] sm:$0xf]
  %v1772 = vld [vmem:[%s2 + $0x10] sm:$0xf]
  %v1773 = vld [vmem:[%s2 + $0x20] sm:$0xf]
  %v1774 = vld [vmem:[%s2 + $0x30] sm:$0xf]
  %v1775 = vld [vmem:[%s2 + $0x40] sm:$0xf]
  %v1776 = vld [vmem:[%s2 + $0x50] sm:$0xf]
  %v1777 = vld [vmem:[%s2 + $0x60] sm:$0xf]
  %v1778 = vld [vmem:[%s2 + $0x70] sm:$0xf]
  %v1779 = vld [vmem:[%s2 + $0x80] sm:$0xf]
  %v1780 = vld [vmem:[%s2 + $0x90] sm:$0xf]
  %v1781 = vld [vmem:[%s2 + $0xa0] sm:$0xf]
  %v1782 = vld [vmem:[%s2 + $0xb0] sm:$0xf]
  %v1783 = vld [vmem:[%s2 + $0xc0] sm:$0xf]
  %v1784 = vld [vmem:[%s2 + $0xd0] sm:$0xf]
  %v1785 = vld [vmem:[%s2 + $0xe0] sm:$0xf]
  %v1786 = vld [vmem:[%s2 + $0xf0] sm:$0xf]
  %v1803 = vunpack.c.l.b16 %v1771
  %v1804 = vunpack.c.l.b16 %v1772
  %v1805 = vunpack.c.l.b16 %v1773
  %v1806 = vunpack.c.l.b16 %v1774
  %v1807 = vunpack.c.l.b16 %v1775
  %v1808 = vunpack.c.l.b16 %v1776
  %v1809 = vunpack.c.l.b16 %v1777
  %v1810 = vunpack.c.l.b16 %v1778
  %v1811 = vunpack.c.l.b16 %v1779
  %v1812 = vunpack.c.l.b16 %v1780
  %v1813 = vunpack.c.l.b16 %v1781
  %v1814 = vunpack.c.l.b16 %v1782
  %v1815 = vunpack.c.l.b16 %v1783
  %v1816 = vunpack.c.l.b16 %v1784
  %v1817 = vunpack.c.l.b16 %v1785
  %v1818 = vunpack.c.l.b16 %v1786
  %v1819 = vpack.c.b16 %v1804, %v1803
  %v1820 = vpack.c.b16 %v1806, %v1805
  %v1821 = vpack.c.b16 %v1808, %v1807
  %v1822 = vpack.c.b16 %v1810, %v1809
  %v1823 = vpack.c.b16 %v1812, %v1811
  %v1824 = vpack.c.b16 %v1814, %v1813
  %v1825 = vpack.c.b16 %v1816, %v1815
  %v1826 = vpack.c.b16 %v1818, %v1817
  %1835 = vmatpush.bf16.msra.mxu0 %v1826
  %1836 = vmatpush.bf16.msra.mxu0 %v1825
  %1837 = vmatpush.bf16.msra.mxu0 %v1824
  %1838 = vmatpush.bf16.msra.mxu0 %v1823
  %1839 = vmatpush.bf16.msra.mxu0 %v1822
  %1840 = vmatpush.bf16.msra.mxu0 %v1821
  %1841 = vmatpush.bf16.msra.mxu0 %v1820
  %1842 = vmatpush.bf16.msra.mxu0 %v1819
  %1843 = vmatmul.bf16.gmra.mxu0 %v1766
  %v1844 = vpop.f32.mrf.mxu0
  %v1845 = vadd.f32 0.0, %v1844
  %v1846 = vpop.f32.mrf.mxu0
  %1847 = vdwg.mxu0
  %v1848 = vadd.f32 %v1770, %v1845
  %v1849 = vmul.f32 %v1848, 0.5
  %v1850 = vtanh.pop %v1849
  %v1851 = vmul.f32 %v1850, 0.5
  %v1852 = vadd.f32 %v1851, 0.5
  %v1853 = vld [vmem:[%s1769 + $0x8] sm:$0xff]
  %v1854 = vld [vmem:[%s2 + $0x4] sm:$0xf]
  %v1855 = vld [vmem:[%s2 + $0x14] sm:$0xf]
  %v1856 = vld [vmem:[%s2 + $0x24] sm:$0xf]
  %v1857 = vld [vmem:[%s2 + $0x34] sm:$0xf]
  %v1858 = vld [vmem:[%s2 + $0x44] sm:$0xf]
  %v1859 = vld [vmem:[%s2 + $0x54] sm:$0xf]
  %v1860 = vld [vmem:[%s2 + $0x64] sm:$0xf]
  %v1861 = vld [vmem:[%s2 + $0x74] sm:$0xf]
  %v1862 = vld [vmem:[%s2 + $0x84] sm:$0xf]
  %v1863 = vld [vmem:[%s2 + $0x94] sm:$0xf]
  %v1864 = vld [vmem:[%s2 + $0xa4] sm:$0xf]
  %v1865 = vld [vmem:[%s2 + $0xb4] sm:$0xf]
  %v1866 = vld [vmem:[%s2 + $0xc4] sm:$0xf]
  %v1867 = vld [vmem:[%s2 + $0xd4] sm:$0xf]
  %v1868 = vld [vmem:[%s2 + $0xe4] sm:$0xf]
  %v1869 = vld [vmem:[%s2 + $0xf4] sm:$0xf]
  %v1886 = vunpack.c.l.b16 %v1854
  %v1887 = vunpack.c.l.b16 %v1855
  %v1888 = vunpack.c.l.b16 %v1856
  %v1889 = vunpack.c.l.b16 %v1857
  %v1890 = vunpack.c.l.b16 %v1858
  %v1891 = vunpack.c.l.b16 %v1859
  %v1892 = vunpack.c.l.b16 %v1860
  %v1893 = vunpack.c.l.b16 %v1861
  %v1894 = vunpack.c.l.b16 %v1862
  %v1895 = vunpack.c.l.b16 %v1863
  %v1896 = vunpack.c.l.b16 %v1864
  %v1897 = vunpack.c.l.b16 %v1865
  %v1898 = vunpack.c.l.b16 %v1866
  %v1899 = vunpack.c.l.b16 %v1867
  %v1900 = vunpack.c.l.b16 %v1868
  %v1901 = vunpack.c.l.b16 %v1869
  %v1902 = vpack.c.b16 %v1887, %v1886
  %v1903 = vpack.c.b16 %v1889, %v1888
  %v1904 = vpack.c.b16 %v1891, %v1890
  %v1905 = vpack.c.b16 %v1893, %v1892
  %v1906 = vpack.c.b16 %v1895, %v1894
  %v1907 = vpack.c.b16 %v1897, %v1896
  %v1908 = vpack.c.b16 %v1899, %v1898
  %v1909 = vpack.c.b16 %v1901, %v1900
  %1918 = vmatpush.bf16.msra.mxu0 %v1909
  %1919 = vmatpush.bf16.msra.mxu0 %v1908
  %1920 = vmatpush.bf16.msra.mxu0 %v1907
  %1921 = vmatpush.bf16.msra.mxu0 %v1906
  %1922 = vmatpush.bf16.msra.mxu0 %v1905
  %1923 = vmatpush.bf16.msra.mxu0 %v1904
  %1924 = vmatpush.bf16.msra.mxu0 %v1903
  %1925 = vmatpush.bf16.msra.mxu0 %v1902
  %1926 = vmatmul.bf16.gmra.mxu0 %v1766
  %v1927 = vpop.f32.mrf.mxu0
  %v1928 = vadd.f32 0.0, %v1927
  %v1929 = vpop.f32.mrf.mxu0
  %1930 = vdwg.mxu0
  %v1931 = vadd.f32 %v1853, %v1928
  %v1932 = vmul.f32 %v1931, 0.5
  %v1933 = vtanh.pop %v1932
  %v1934 = vmul.f32 %v1933, 0.5
  %v1935 = vadd.f32 %v1934, 0.5
  %v1936 = vld [vmem:[%s1769 + $0x10] sm:$0xff]
  %v1937 = vld [vmem:[%s2 + $0x8] sm:$0xf]
  %v1938 = vld [vmem:[%s2 + $0x18] sm:$0xf]
  %v1939 = vld [vmem:[%s2 + $0x28] sm:$0xf]
  %v1940 = vld [vmem:[%s2 + $0x38] sm:$0xf]
  %v1941 = vld [vmem:[%s2 + $0x48] sm:$0xf]
  %v1942 = vld [vmem:[%s2 + $0x58] sm:$0xf]
  %v1943 = vld [vmem:[%s2 + $0x68] sm:$0xf]
  %v1944 = vld [vmem:[%s2 + $0x78] sm:$0xf]
  %v1945 = vld [vmem:[%s2 + $0x88] sm:$0xf]
  %v1946 = vld [vmem:[%s2 + $0x98] sm:$0xf]
  %v1947 = vld [vmem:[%s2 + $0xa8] sm:$0xf]
  %v1948 = vld [vmem:[%s2 + $0xb8] sm:$0xf]
  %v1949 = vld [vmem:[%s2 + $0xc8] sm:$0xf]
  %v1950 = vld [vmem:[%s2 + $0xd8] sm:$0xf]
  %v1951 = vld [vmem:[%s2 + $0xe8] sm:$0xf]
  %v1952 = vld [vmem:[%s2 + $0xf8] sm:$0xf]
  %v1969 = vunpack.c.l.b16 %v1937
  %v1970 = vunpack.c.l.b16 %v1938
  %v1971 = vunpack.c.l.b16 %v1939
  %v1972 = vunpack.c.l.b16 %v1940
  %v1973 = vunpack.c.l.b16 %v1941
  %v1974 = vunpack.c.l.b16 %v1942
  %v1975 = vunpack.c.l.b16 %v1943
  %v1976 = vunpack.c.l.b16 %v1944
  %v1977 = vunpack.c.l.b16 %v1945
  %v1978 = vunpack.c.l.b16 %v1946
  %v1979 = vunpack.c.l.b16 %v1947
  %v1980 = vunpack.c.l.b16 %v1948
  %v1981 = vunpack.c.l.b16 %v1949
  %v1982 = vunpack.c.l.b16 %v1950
  %v1983 = vunpack.c.l.b16 %v1951
  %v1984 = vunpack.c.l.b16 %v1952
  %v1985 = vpack.c.b16 %v1970, %v1969
  %v1986 = vpack.c.b16 %v1972, %v1971
  %v1987 = vpack.c.b16 %v1974, %v1973
  %v1988 = vpack.c.b16 %v1976, %v1975
  %v1989 = vpack.c.b16 %v1978, %v1977
  %v1990 = vpack.c.b16 %v1980, %v1979
  %v1991 = vpack.c.b16 %v1982, %v1981
  %v1992 = vpack.c.b16 %v1984, %v1983
  %2001 = vmatpush.bf16.msra.mxu0 %v1992
  %2002 = vmatpush.bf16.msra.mxu0 %v1991
  %2003 = vmatpush.bf16.msra.mxu0 %v1990
  %2004 = vmatpush.bf16.msra.mxu0 %v1989
  %2005 = vmatpush.bf16.msra.mxu0 %v1988
  %2006 = vmatpush.bf16.msra.mxu0 %v1987
  %2007 = vmatpush.bf16.msra.mxu0 %v1986
  %2008 = vmatpush.bf16.msra.mxu0 %v1985
  %2009 = vmatmul.bf16.gmra.mxu0 %v1766
  %v2010 = vpop.f32.mrf.mxu0
  %v2011 = vadd.f32 0.0, %v2010
  %v2012 = vpop.f32.mrf.mxu0
  %2013 = vdwg.mxu0
  %v2014 = vadd.f32 %v1936, %v2011
  %v2015 = vtanh.pop %v2014
  %v2016 = vld [vmem:[%s1769 + $0x18] sm:$0xff]
  %v2017 = vld [vmem:[%s2 + $0xc] sm:$0xf]
  %v2018 = vld [vmem:[%s2 + $0x1c] sm:$0xf]
  %v2019 = vld [vmem:[%s2 + $0x2c] sm:$0xf]
  %v2020 = vld [vmem:[%s2 + $0x3c] sm:$0xf]
  %v2021 = vld [vmem:[%s2 + $0x4c] sm:$0xf]
  %v2022 = vld [vmem:[%s2 + $0x5c] sm:$0xf]
  %v2023 = vld [vmem:[%s2 + $0x6c] sm:$0xf]
  %v2024 = vld [vmem:[%s2 + $0x7c] sm:$0xf]
  %v2025 = vld [vmem:[%s2 + $0x8c] sm:$0xf]
  %v2026 = vld [vmem:[%s2 + $0x9c] sm:$0xf]
  %v2027 = vld [vmem:[%s2 + $0xac] sm:$0xf]
  %v2028 = vld [vmem:[%s2 + $0xbc] sm:$0xf]
  %v2029 = vld [vmem:[%s2 + $0xcc] sm:$0xf]
  %v2030 = vld [vmem:[%s2 + $0xdc] sm:$0xf]
  %v2031 = vld [vmem:[%s2 + $0xec] sm:$0xf]
  %v2032 = vld [vmem:[%s2 + $0xfc] sm:$0xf]
  %v2049 = vunpack.c.l.b16 %v2017
  %v2050 = vunpack.c.l.b16 %v2018
  %v2051 = vunpack.c.l.b16 %v2019
  %v2052 = vunpack.c.l.b16 %v2020
  %v2053 = vunpack.c.l.b16 %v2021
  %v2054 = vunpack.c.l.b16 %v2022
  %v2055 = vunpack.c.l.b16 %v2023
  %v2056 = vunpack.c.l.b16 %v2024
  %v2057 = vunpack.c.l.b16 %v2025
  %v2058 = vunpack.c.l.b16 %v2026
  %v2059 = vunpack.c.l.b16 %v2027
  %v2060 = vunpack.c.l.b16 %v2028
  %v2061 = vunpack.c.l.b16 %v2029
  %v2062 = vunpack.c.l.b16 %v2030
  %v2063 = vunpack.c.l.b16 %v2031
  %v2064 = vunpack.c.l.b16 %v2032
  %v2065 = vpack.c.b16 %v2050, %v2049
  %v2066 = vpack.c.b16 %v2052, %v2051
  %v2067 = vpack.c.b16 %v2054, %v2053
  %v2068 = vpack.c.b16 %v2056, %v2055
  %v2069 = vpack.c.b16 %v2058, %v2057
  %v2070 = vpack.c.b16 %v2060, %v2059
  %v2071 = vpack.c.b16 %v2062, %v2061
  %v2072 = vpack.c.b16 %v2064, %v2063
  %2081 = vmatpush.bf16.msra.mxu0 %v2072
  %2082 = vmatpush.bf16.msra.mxu0 %v2071
  %2083 = vmatpush.bf16.msra.mxu0 %v2070
  %2084 = vmatpush.bf16.msra.mxu0 %v2069
  %2085 = vmatpush.bf16.msra.mxu0 %v2068
  %2086 = vmatpush.bf16.msra.mxu0 %v2067
  %2087 = vmatpush.bf16.msra.mxu0 %v2066
  %2088 = vmatpush.bf16.msra.mxu0 %v2065
  %2089 = vmatmul.bf16.gmra.mxu0 %v1766
  %v2090 = vpop.f32.mrf.mxu0
  %v2091 = vadd.f32 0.0, %v2090
  %v2092 = vpop.f32.mrf.mxu0
  %2093 = vdwg.mxu0
  %v2094 = vadd.f32 %v2016, %v2091
  %v2095 = vmul.f32 %v2094, 0.5
  %v2096 = vtanh.pop %v2095
  %v2097 = vmul.f32 %v2096, 0.5
  %v2098 = vadd.f32 %v2097, 0.5
  %v2099 = vmul.f32 %v1935, %v1763
  %v2100 = vmul.f32 %v1852, %v2015
  %v2101 = vadd.f32 %v2099, %v2100
  %v2102 = vtanh.pop %v2101
  %v2103 = vmul.f32 %v2098, %v2102
  %v2104 = vpack.c.bf16 %v2103, %v2103
  %s2105 = scalar_lea.vmem %s6, 16
  %2106 = vst [vmem:[%s2105] sm:$0xf] %v2104
  %s2107 = scalar_lea.vmem [#allocation2], 160
  %v2108 = vld [vmem:[%s2107] sm:$0xff]
  %v2109 = vld [vmem:[%s2] sm:$0xf]
  %v2110 = vld [vmem:[%s2 + $0x10] sm:$0xf]
  %v2111 = vld [vmem:[%s2 + $0x20] sm:$0xf]
  %v2112 = vld [vmem:[%s2 + $0x30] sm:$0xf]
  %v2113 = vld [vmem:[%s2 + $0x40] sm:$0xf]
  %v2114 = vld [vmem:[%s2 + $0x50] sm:$0xf]
  %v2115 = vld [vmem:[%s2 + $0x60] sm:$0xf]
  %v2116 = vld [vmem:[%s2 + $0x70] sm:$0xf]
  %v2117 = vld [vmem:[%s2 + $0x80] sm:$0xf]
  %v2118 = vld [vmem:[%s2 + $0x90] sm:$0xf]
  %v2119 = vld [vmem:[%s2 + $0xa0] sm:$0xf]
  %v2120 = vld [vmem:[%s2 + $0xb0] sm:$0xf]
  %v2121 = vld [vmem:[%s2 + $0xc0] sm:$0xf]
  %v2122 = vld [vmem:[%s2 + $0xd0] sm:$0xf]
  %v2123 = vld [vmem:[%s2 + $0xe0] sm:$0xf]
  %v2124 = vld [vmem:[%s2 + $0xf0] sm:$0xf]
  %v2141 = vunpack.c.l.b16 %v2109
  %v2142 = vunpack.c.l.b16 %v2110
  %v2143 = vunpack.c.l.b16 %v2111
  %v2144 = vunpack.c.l.b16 %v2112
  %v2145 = vunpack.c.l.b16 %v2113
  %v2146 = vunpack.c.l.b16 %v2114
  %v2147 = vunpack.c.l.b16 %v2115
  %v2148 = vunpack.c.l.b16 %v2116
  %v2149 = vunpack.c.l.b16 %v2117
  %v2150 = vunpack.c.l.b16 %v2118
  %v2151 = vunpack.c.l.b16 %v2119
  %v2152 = vunpack.c.l.b16 %v2120
  %v2153 = vunpack.c.l.b16 %v2121
  %v2154 = vunpack.c.l.b16 %v2122
  %v2155 = vunpack.c.l.b16 %v2123
  %v2156 = vunpack.c.l.b16 %v2124
  %v2157 = vpack.c.b16 %v2142, %v2141
  %v2158 = vpack.c.b16 %v2144, %v2143
  %v2159 = vpack.c.b16 %v2146, %v2145
  %v2160 = vpack.c.b16 %v2148, %v2147
  %v2161 = vpack.c.b16 %v2150, %v2149
  %v2162 = vpack.c.b16 %v2152, %v2151
  %v2163 = vpack.c.b16 %v2154, %v2153
  %v2164 = vpack.c.b16 %v2156, %v2155
  %2173 = vmatpush.bf16.msra.mxu0 %v2164
  %2174 = vmatpush.bf16.msra.mxu0 %v2163
  %2175 = vmatpush.bf16.msra.mxu0 %v2162
  %2176 = vmatpush.bf16.msra.mxu0 %v2161
  %2177 = vmatpush.bf16.msra.mxu0 %v2160
  %2178 = vmatpush.bf16.msra.mxu0 %v2159
  %2179 = vmatpush.bf16.msra.mxu0 %v2158
  %2180 = vmatpush.bf16.msra.mxu0 %v2157
  %2181 = vmatmul.bf16.gmra.mxu0 %v2104
  %v2182 = vpop.f32.mrf.mxu0
  %v2183 = vadd.f32 0.0, %v2182
  %v2184 = vpop.f32.mrf.mxu0
  %2185 = vdwg.mxu0
  %v2186 = vadd.f32 %v2108, %v2183
  %v2187 = vmul.f32 %v2186, 0.5
  %v2188 = vtanh.pop %v2187
  %v2189 = vmul.f32 %v2188, 0.5
  %v2190 = vadd.f32 %v2189, 0.5
  %v2191 = vld [vmem:[%s2107 + $0x8] sm:$0xff]
  %v2192 = vld [vmem:[%s2 + $0x4] sm:$0xf]
  %v2193 = vld [vmem:[%s2 + $0x14] sm:$0xf]
  %v2194 = vld [vmem:[%s2 + $0x24] sm:$0xf]
  %v2195 = vld [vmem:[%s2 + $0x34] sm:$0xf]
  %v2196 = vld [vmem:[%s2 + $0x44] sm:$0xf]
  %v2197 = vld [vmem:[%s2 + $0x54] sm:$0xf]
  %v2198 = vld [vmem:[%s2 + $0x64] sm:$0xf]
  %v2199 = vld [vmem:[%s2 + $0x74] sm:$0xf]
  %v2200 = vld [vmem:[%s2 + $0x84] sm:$0xf]
  %v2201 = vld [vmem:[%s2 + $0x94] sm:$0xf]
  %v2202 = vld [vmem:[%s2 + $0xa4] sm:$0xf]
  %v2203 = vld [vmem:[%s2 + $0xb4] sm:$0xf]
  %v2204 = vld [vmem:[%s2 + $0xc4] sm:$0xf]
  %v2205 = vld [vmem:[%s2 + $0xd4] sm:$0xf]
  %v2206 = vld [vmem:[%s2 + $0xe4] sm:$0xf]
  %v2207 = vld [vmem:[%s2 + $0xf4] sm:$0xf]
  %v2224 = vunpack.c.l.b16 %v2192
  %v2225 = vunpack.c.l.b16 %v2193
  %v2226 = vunpack.c.l.b16 %v2194
  %v2227 = vunpack.c.l.b16 %v2195
  %v2228 = vunpack.c.l.b16 %v2196
  %v2229 = vunpack.c.l.b16 %v2197
  %v2230 = vunpack.c.l.b16 %v2198
  %v2231 = vunpack.c.l.b16 %v2199
  %v2232 = vunpack.c.l.b16 %v2200
  %v2233 = vunpack.c.l.b16 %v2201
  %v2234 = vunpack.c.l.b16 %v2202
  %v2235 = vunpack.c.l.b16 %v2203
  %v2236 = vunpack.c.l.b16 %v2204
  %v2237 = vunpack.c.l.b16 %v2205
  %v2238 = vunpack.c.l.b16 %v2206
  %v2239 = vunpack.c.l.b16 %v2207
  %v2240 = vpack.c.b16 %v2225, %v2224
  %v2241 = vpack.c.b16 %v2227, %v2226
  %v2242 = vpack.c.b16 %v2229, %v2228
  %v2243 = vpack.c.b16 %v2231, %v2230
  %v2244 = vpack.c.b16 %v2233, %v2232
  %v2245 = vpack.c.b16 %v2235, %v2234
  %v2246 = vpack.c.b16 %v2237, %v2236
  %v2247 = vpack.c.b16 %v2239, %v2238
  %2256 = vmatpush.bf16.msra.mxu0 %v2247
  %2257 = vmatpush.bf16.msra.mxu0 %v2246
  %2258 = vmatpush.bf16.msra.mxu0 %v2245
  %2259 = vmatpush.bf16.msra.mxu0 %v2244
  %2260 = vmatpush.bf16.msra.mxu0 %v2243
  %2261 = vmatpush.bf16.msra.mxu0 %v2242
  %2262 = vmatpush.bf16.msra.mxu0 %v2241
  %2263 = vmatpush.bf16.msra.mxu0 %v2240
  %2264 = vmatmul.bf16.gmra.mxu0 %v2104
  %v2265 = vpop.f32.mrf.mxu0
  %v2266 = vadd.f32 0.0, %v2265
  %v2267 = vpop.f32.mrf.mxu0
  %2268 = vdwg.mxu0
  %v2269 = vadd.f32 %v2191, %v2266
  %v2270 = vmul.f32 %v2269, 0.5
  %v2271 = vtanh.pop %v2270
  %v2272 = vmul.f32 %v2271, 0.5
  %v2273 = vadd.f32 %v2272, 0.5
  %v2274 = vld [vmem:[%s2107 + $0x10] sm:$0xff]
  %v2275 = vld [vmem:[%s2 + $0x8] sm:$0xf]
  %v2276 = vld [vmem:[%s2 + $0x18] sm:$0xf]
  %v2277 = vld [vmem:[%s2 + $0x28] sm:$0xf]
  %v2278 = vld [vmem:[%s2 + $0x38] sm:$0xf]
  %v2279 = vld [vmem:[%s2 + $0x48] sm:$0xf]
  %v2280 = vld [vmem:[%s2 + $0x58] sm:$0xf]
  %v2281 = vld [vmem:[%s2 + $0x68] sm:$0xf]
  %v2282 = vld [vmem:[%s2 + $0x78] sm:$0xf]
  %v2283 = vld [vmem:[%s2 + $0x88] sm:$0xf]
  %v2284 = vld [vmem:[%s2 + $0x98] sm:$0xf]
  %v2285 = vld [vmem:[%s2 + $0xa8] sm:$0xf]
  %v2286 = vld [vmem:[%s2 + $0xb8] sm:$0xf]
  %v2287 = vld [vmem:[%s2 + $0xc8] sm:$0xf]
  %v2288 = vld [vmem:[%s2 + $0xd8] sm:$0xf]
  %v2289 = vld [vmem:[%s2 + $0xe8] sm:$0xf]
  %v2290 = vld [vmem:[%s2 + $0xf8] sm:$0xf]
  %v2307 = vunpack.c.l.b16 %v2275
  %v2308 = vunpack.c.l.b16 %v2276
  %v2309 = vunpack.c.l.b16 %v2277
  %v2310 = vunpack.c.l.b16 %v2278
  %v2311 = vunpack.c.l.b16 %v2279
  %v2312 = vunpack.c.l.b16 %v2280
  %v2313 = vunpack.c.l.b16 %v2281
  %v2314 = vunpack.c.l.b16 %v2282
  %v2315 = vunpack.c.l.b16 %v2283
  %v2316 = vunpack.c.l.b16 %v2284
  %v2317 = vunpack.c.l.b16 %v2285
  %v2318 = vunpack.c.l.b16 %v2286
  %v2319 = vunpack.c.l.b16 %v2287
  %v2320 = vunpack.c.l.b16 %v2288
  %v2321 = vunpack.c.l.b16 %v2289
  %v2322 = vunpack.c.l.b16 %v2290
  %v2323 = vpack.c.b16 %v2308, %v2307
  %v2324 = vpack.c.b16 %v2310, %v2309
  %v2325 = vpack.c.b16 %v2312, %v2311
  %v2326 = vpack.c.b16 %v2314, %v2313
  %v2327 = vpack.c.b16 %v2316, %v2315
  %v2328 = vpack.c.b16 %v2318, %v2317
  %v2329 = vpack.c.b16 %v2320, %v2319
  %v2330 = vpack.c.b16 %v2322, %v2321
  %2339 = vmatpush.bf16.msra.mxu0 %v2330
  %2340 = vmatpush.bf16.msra.mxu0 %v2329
  %2341 = vmatpush.bf16.msra.mxu0 %v2328
  %2342 = vmatpush.bf16.msra.mxu0 %v2327
  %2343 = vmatpush.bf16.msra.mxu0 %v2326
  %2344 = vmatpush.bf16.msra.mxu0 %v2325
  %2345 = vmatpush.bf16.msra.mxu0 %v2324
  %2346 = vmatpush.bf16.msra.mxu0 %v2323
  %2347 = vmatmul.bf16.gmra.mxu0 %v2104
  %v2348 = vpop.f32.mrf.mxu0
  %v2349 = vadd.f32 0.0, %v2348
  %v2350 = vpop.f32.mrf.mxu0
  %2351 = vdwg.mxu0
  %v2352 = vadd.f32 %v2274, %v2349
  %v2353 = vtanh.pop %v2352
  %v2354 = vld [vmem:[%s2107 + $0x18] sm:$0xff]
  %v2355 = vld [vmem:[%s2 + $0xc] sm:$0xf]
  %v2356 = vld [vmem:[%s2 + $0x1c] sm:$0xf]
  %v2357 = vld [vmem:[%s2 + $0x2c] sm:$0xf]
  %v2358 = vld [vmem:[%s2 + $0x3c] sm:$0xf]
  %v2359 = vld [vmem:[%s2 + $0x4c] sm:$0xf]
  %v2360 = vld [vmem:[%s2 + $0x5c] sm:$0xf]
  %v2361 = vld [vmem:[%s2 + $0x6c] sm:$0xf]
  %v2362 = vld [vmem:[%s2 + $0x7c] sm:$0xf]
  %v2363 = vld [vmem:[%s2 + $0x8c] sm:$0xf]
  %v2364 = vld [vmem:[%s2 + $0x9c] sm:$0xf]
  %v2365 = vld [vmem:[%s2 + $0xac] sm:$0xf]
  %v2366 = vld [vmem:[%s2 + $0xbc] sm:$0xf]
  %v2367 = vld [vmem:[%s2 + $0xcc] sm:$0xf]
  %v2368 = vld [vmem:[%s2 + $0xdc] sm:$0xf]
  %v2369 = vld [vmem:[%s2 + $0xec] sm:$0xf]
  %v2370 = vld [vmem:[%s2 + $0xfc] sm:$0xf]
  %v2387 = vunpack.c.l.b16 %v2355
  %v2388 = vunpack.c.l.b16 %v2356
  %v2389 = vunpack.c.l.b16 %v2357
  %v2390 = vunpack.c.l.b16 %v2358
  %v2391 = vunpack.c.l.b16 %v2359
  %v2392 = vunpack.c.l.b16 %v2360
  %v2393 = vunpack.c.l.b16 %v2361
  %v2394 = vunpack.c.l.b16 %v2362
  %v2395 = vunpack.c.l.b16 %v2363
  %v2396 = vunpack.c.l.b16 %v2364
  %v2397 = vunpack.c.l.b16 %v2365
  %v2398 = vunpack.c.l.b16 %v2366
  %v2399 = vunpack.c.l.b16 %v2367
  %v2400 = vunpack.c.l.b16 %v2368
  %v2401 = vunpack.c.l.b16 %v2369
  %v2402 = vunpack.c.l.b16 %v2370
  %v2403 = vpack.c.b16 %v2388, %v2387
  %v2404 = vpack.c.b16 %v2390, %v2389
  %v2405 = vpack.c.b16 %v2392, %v2391
  %v2406 = vpack.c.b16 %v2394, %v2393
  %v2407 = vpack.c.b16 %v2396, %v2395
  %v2408 = vpack.c.b16 %v2398, %v2397
  %v2409 = vpack.c.b16 %v2400, %v2399
  %v2410 = vpack.c.b16 %v2402, %v2401
  %2419 = vmatpush.bf16.msra.mxu0 %v2410
  %2420 = vmatpush.bf16.msra.mxu0 %v2409
  %2421 = vmatpush.bf16.msra.mxu0 %v2408
  %2422 = vmatpush.bf16.msra.mxu0 %v2407
  %2423 = vmatpush.bf16.msra.mxu0 %v2406
  %2424 = vmatpush.bf16.msra.mxu0 %v2405
  %2425 = vmatpush.bf16.msra.mxu0 %v2404
  %2426 = vmatpush.bf16.msra.mxu0 %v2403
  %2427 = vmatmul.bf16.gmra.mxu0 %v2104
  %v2428 = vpop.f32.mrf.mxu0
  %v2429 = vadd.f32 0.0, %v2428
  %v2430 = vpop.f32.mrf.mxu0
  %2431 = vdwg.mxu0
  %v2432 = vadd.f32 %v2354, %v2429
  %v2433 = vmul.f32 %v2432, 0.5
  %v2434 = vtanh.pop %v2433
  %v2435 = vmul.f32 %v2434, 0.5
  %v2436 = vadd.f32 %v2435, 0.5
  %v2437 = vmul.f32 %v2273, %v2101
  %v2438 = vmul.f32 %v2190, %v2353
  %v2439 = vadd.f32 %v2437, %v2438
  %v2440 = vtanh.pop %v2439
  %v2441 = vmul.f32 %v2436, %v2440
  %v2442 = vpack.c.bf16 %v2441, %v2441
  %s2443 = scalar_lea.vmem %s6, 20
  %2444 = vst [vmem:[%s2443] sm:$0xf] %v2442
  %s2445 = scalar_lea.vmem [#allocation2], 192
  %v2446 = vld [vmem:[%s2445] sm:$0xff]
  %v2447 = vld [vmem:[%s2] sm:$0xf]
  %v2448 = vld [vmem:[%s2 + $0x10] sm:$0xf]
  %v2449 = vld [vmem:[%s2 + $0x20] sm:$0xf]
  %v2450 = vld [vmem:[%s2 + $0x30] sm:$0xf]
  %v2451 = vld [vmem:[%s2 + $0x40] sm:$0xf]
  %v2452 = vld [vmem:[%s2 + $0x50] sm:$0xf]
  %v2453 = vld [vmem:[%s2 + $0x60] sm:$0xf]
  %v2454 = vld [vmem:[%s2 + $0x70] sm:$0xf]
  %v2455 = vld [vmem:[%s2 + $0x80] sm:$0xf]
  %v2456 = vld [vmem:[%s2 + $0x90] sm:$0xf]
  %v2457 = vld [vmem:[%s2 + $0xa0] sm:$0xf]
  %v2458 = vld [vmem:[%s2 + $0xb0] sm:$0xf]
  %v2459 = vld [vmem:[%s2 + $0xc0] sm:$0xf]
  %v2460 = vld [vmem:[%s2 + $0xd0] sm:$0xf]
  %v2461 = vld [vmem:[%s2 + $0xe0] sm:$0xf]
  %v2462 = vld [vmem:[%s2 + $0xf0] sm:$0xf]
  %v2479 = vunpack.c.l.b16 %v2447
  %v2480 = vunpack.c.l.b16 %v2448
  %v2481 = vunpack.c.l.b16 %v2449
  %v2482 = vunpack.c.l.b16 %v2450
  %v2483 = vunpack.c.l.b16 %v2451
  %v2484 = vunpack.c.l.b16 %v2452
  %v2485 = vunpack.c.l.b16 %v2453
  %v2486 = vunpack.c.l.b16 %v2454
  %v2487 = vunpack.c.l.b16 %v2455
  %v2488 = vunpack.c.l.b16 %v2456
  %v2489 = vunpack.c.l.b16 %v2457
  %v2490 = vunpack.c.l.b16 %v2458
  %v2491 = vunpack.c.l.b16 %v2459
  %v2492 = vunpack.c.l.b16 %v2460
  %v2493 = vunpack.c.l.b16 %v2461
  %v2494 = vunpack.c.l.b16 %v2462
  %v2495 = vpack.c.b16 %v2480, %v2479
  %v2496 = vpack.c.b16 %v2482, %v2481
  %v2497 = vpack.c.b16 %v2484, %v2483
  %v2498 = vpack.c.b16 %v2486, %v2485
  %v2499 = vpack.c.b16 %v2488, %v2487
  %v2500 = vpack.c.b16 %v2490, %v2489
  %v2501 = vpack.c.b16 %v2492, %v2491
  %v2502 = vpack.c.b16 %v2494, %v2493
  %2511 = vmatpush.bf16.msra.mxu0 %v2502
  %2512 = vmatpush.bf16.msra.mxu0 %v2501
  %2513 = vmatpush.bf16.msra.mxu0 %v2500
  %2514 = vmatpush.bf16.msra.mxu0 %v2499
  %2515 = vmatpush.bf16.msra.mxu0 %v2498
  %2516 = vmatpush.bf16.msra.mxu0 %v2497
  %2517 = vmatpush.bf16.msra.mxu0 %v2496
  %2518 = vmatpush.bf16.msra.mxu0 %v2495
  %2519 = vmatmul.bf16.gmra.mxu0 %v2442
  %v2520 = vpop.f32.mrf.mxu0
  %v2521 = vadd.f32 0.0, %v2520
  %v2522 = vpop.f32.mrf.mxu0
  %2523 = vdwg.mxu0
  %v2524 = vadd.f32 %v2446, %v2521
  %v2525 = vmul.f32 %v2524, 0.5
  %v2526 = vtanh.pop %v2525
  %v2527 = vmul.f32 %v2526, 0.5
  %v2528 = vadd.f32 %v2527, 0.5
  %v2529 = vld [vmem:[%s2445 + $0x8] sm:$0xff]
  %v2530 = vld [vmem:[%s2 + $0x4] sm:$0xf]
  %v2531 = vld [vmem:[%s2 + $0x14] sm:$0xf]
  %v2532 = vld [vmem:[%s2 + $0x24] sm:$0xf]
  %v2533 = vld [vmem:[%s2 + $0x34] sm:$0xf]
  %v2534 = vld [vmem:[%s2 + $0x44] sm:$0xf]
  %v2535 = vld [vmem:[%s2 + $0x54] sm:$0xf]
  %v2536 = vld [vmem:[%s2 + $0x64] sm:$0xf]
  %v2537 = vld [vmem:[%s2 + $0x74] sm:$0xf]
  %v2538 = vld [vmem:[%s2 + $0x84] sm:$0xf]
  %v2539 = vld [vmem:[%s2 + $0x94] sm:$0xf]
  %v2540 = vld [vmem:[%s2 + $0xa4] sm:$0xf]
  %v2541 = vld [vmem:[%s2 + $0xb4] sm:$0xf]
  %v2542 = vld [vmem:[%s2 + $0xc4] sm:$0xf]
  %v2543 = vld [vmem:[%s2 + $0xd4] sm:$0xf]
  %v2544 = vld [vmem:[%s2 + $0xe4] sm:$0xf]
  %v2545 = vld [vmem:[%s2 + $0xf4] sm:$0xf]
  %v2562 = vunpack.c.l.b16 %v2530
  %v2563 = vunpack.c.l.b16 %v2531
  %v2564 = vunpack.c.l.b16 %v2532
  %v2565 = vunpack.c.l.b16 %v2533
  %v2566 = vunpack.c.l.b16 %v2534
  %v2567 = vunpack.c.l.b16 %v2535
  %v2568 = vunpack.c.l.b16 %v2536
  %v2569 = vunpack.c.l.b16 %v2537
  %v2570 = vunpack.c.l.b16 %v2538
  %v2571 = vunpack.c.l.b16 %v2539
  %v2572 = vunpack.c.l.b16 %v2540
  %v2573 = vunpack.c.l.b16 %v2541
  %v2574 = vunpack.c.l.b16 %v2542
  %v2575 = vunpack.c.l.b16 %v2543
  %v2576 = vunpack.c.l.b16 %v2544
  %v2577 = vunpack.c.l.b16 %v2545
  %v2578 = vpack.c.b16 %v2563, %v2562
  %v2579 = vpack.c.b16 %v2565, %v2564
  %v2580 = vpack.c.b16 %v2567, %v2566
  %v2581 = vpack.c.b16 %v2569, %v2568
  %v2582 = vpack.c.b16 %v2571, %v2570
  %v2583 = vpack.c.b16 %v2573, %v2572
  %v2584 = vpack.c.b16 %v2575, %v2574
  %v2585 = vpack.c.b16 %v2577, %v2576
  %2594 = vmatpush.bf16.msra.mxu0 %v2585
  %2595 = vmatpush.bf16.msra.mxu0 %v2584
  %2596 = vmatpush.bf16.msra.mxu0 %v2583
  %2597 = vmatpush.bf16.msra.mxu0 %v2582
  %2598 = vmatpush.bf16.msra.mxu0 %v2581
  %2599 = vmatpush.bf16.msra.mxu0 %v2580
  %2600 = vmatpush.bf16.msra.mxu0 %v2579
  %2601 = vmatpush.bf16.msra.mxu0 %v2578
  %2602 = vmatmul.bf16.gmra.mxu0 %v2442
  %v2603 = vpop.f32.mrf.mxu0
  %v2604 = vadd.f32 0.0, %v2603
  %v2605 = vpop.f32.mrf.mxu0
  %2606 = vdwg.mxu0
  %v2607 = vadd.f32 %v2529, %v2604
  %v2608 = vmul.f32 %v2607, 0.5
  %v2609 = vtanh.pop %v2608
  %v2610 = vmul.f32 %v2609, 0.5
  %v2611 = vadd.f32 %v2610, 0.5
  %v2612 = vld [vmem:[%s2445 + $0x10] sm:$0xff]
  %v2613 = vld [vmem:[%s2 + $0x8] sm:$0xf]
  %v2614 = vld [vmem:[%s2 + $0x18] sm:$0xf]
  %v2615 = vld [vmem:[%s2 + $0x28] sm:$0xf]
  %v2616 = vld [vmem:[%s2 + $0x38] sm:$0xf]
  %v2617 = vld [vmem:[%s2 + $0x48] sm:$0xf]
  %v2618 = vld [vmem:[%s2 + $0x58] sm:$0xf]
  %v2619 = vld [vmem:[%s2 + $0x68] sm:$0xf]
  %v2620 = vld [vmem:[%s2 + $0x78] sm:$0xf]
  %v2621 = vld [vmem:[%s2 + $0x88] sm:$0xf]
  %v2622 = vld [vmem:[%s2 + $0x98] sm:$0xf]
  %v2623 = vld [vmem:[%s2 + $0xa8] sm:$0xf]
  %v2624 = vld [vmem:[%s2 + $0xb8] sm:$0xf]
  %v2625 = vld [vmem:[%s2 + $0xc8] sm:$0xf]
  %v2626 = vld [vmem:[%s2 + $0xd8] sm:$0xf]
  %v2627 = vld [vmem:[%s2 + $0xe8] sm:$0xf]
  %v2628 = vld [vmem:[%s2 + $0xf8] sm:$0xf]
  %v2645 = vunpack.c.l.b16 %v2613
  %v2646 = vunpack.c.l.b16 %v2614
  %v2647 = vunpack.c.l.b16 %v2615
  %v2648 = vunpack.c.l.b16 %v2616
  %v2649 = vunpack.c.l.b16 %v2617
  %v2650 = vunpack.c.l.b16 %v2618
  %v2651 = vunpack.c.l.b16 %v2619
  %v2652 = vunpack.c.l.b16 %v2620
  %v2653 = vunpack.c.l.b16 %v2621
  %v2654 = vunpack.c.l.b16 %v2622
  %v2655 = vunpack.c.l.b16 %v2623
  %v2656 = vunpack.c.l.b16 %v2624
  %v2657 = vunpack.c.l.b16 %v2625
  %v2658 = vunpack.c.l.b16 %v2626
  %v2659 = vunpack.c.l.b16 %v2627
  %v2660 = vunpack.c.l.b16 %v2628
  %v2661 = vpack.c.b16 %v2646, %v2645
  %v2662 = vpack.c.b16 %v2648, %v2647
  %v2663 = vpack.c.b16 %v2650, %v2649
  %v2664 = vpack.c.b16 %v2652, %v2651
  %v2665 = vpack.c.b16 %v2654, %v2653
  %v2666 = vpack.c.b16 %v2656, %v2655
  %v2667 = vpack.c.b16 %v2658, %v2657
  %v2668 = vpack.c.b16 %v2660, %v2659
  %2677 = vmatpush.bf16.msra.mxu0 %v2668
  %2678 = vmatpush.bf16.msra.mxu0 %v2667
  %2679 = vmatpush.bf16.msra.mxu0 %v2666
  %2680 = vmatpush.bf16.msra.mxu0 %v2665
  %2681 = vmatpush.bf16.msra.mxu0 %v2664
  %2682 = vmatpush.bf16.msra.mxu0 %v2663
  %2683 = vmatpush.bf16.msra.mxu0 %v2662
  %2684 = vmatpush.bf16.msra.mxu0 %v2661
  %2685 = vmatmul.bf16.gmra.mxu0 %v2442
  %v2686 = vpop.f32.mrf.mxu0
  %v2687 = vadd.f32 0.0, %v2686
  %v2688 = vpop.f32.mrf.mxu0
  %2689 = vdwg.mxu0
  %v2690 = vadd.f32 %v2612, %v2687
  %v2691 = vtanh.pop %v2690
  %v2692 = vld [vmem:[%s2445 + $0x18] sm:$0xff]
  %v2693 = vld [vmem:[%s2 + $0xc] sm:$0xf]
  %v2694 = vld [vmem:[%s2 + $0x1c] sm:$0xf]
  %v2695 = vld [vmem:[%s2 + $0x2c] sm:$0xf]
  %v2696 = vld [vmem:[%s2 + $0x3c] sm:$0xf]
  %v2697 = vld [vmem:[%s2 + $0x4c] sm:$0xf]
  %v2698 = vld [vmem:[%s2 + $0x5c] sm:$0xf]
  %v2699 = vld [vmem:[%s2 + $0x6c] sm:$0xf]
  %v2700 = vld [vmem:[%s2 + $0x7c] sm:$0xf]
  %v2701 = vld [vmem:[%s2 + $0x8c] sm:$0xf]
  %v2702 = vld [vmem:[%s2 + $0x9c] sm:$0xf]
  %v2703 = vld [vmem:[%s2 + $0xac] sm:$0xf]
  %v2704 = vld [vmem:[%s2 + $0xbc] sm:$0xf]
  %v2705 = vld [vmem:[%s2 + $0xcc] sm:$0xf]
  %v2706 = vld [vmem:[%s2 + $0xdc] sm:$0xf]
  %v2707 = vld [vmem:[%s2 + $0xec] sm:$0xf]
  %v2708 = vld [vmem:[%s2 + $0xfc] sm:$0xf]
  %v2725 = vunpack.c.l.b16 %v2693
  %v2726 = vunpack.c.l.b16 %v2694
  %v2727 = vunpack.c.l.b16 %v2695
  %v2728 = vunpack.c.l.b16 %v2696
  %v2729 = vunpack.c.l.b16 %v2697
  %v2730 = vunpack.c.l.b16 %v2698
  %v2731 = vunpack.c.l.b16 %v2699
  %v2732 = vunpack.c.l.b16 %v2700
  %v2733 = vunpack.c.l.b16 %v2701
  %v2734 = vunpack.c.l.b16 %v2702
  %v2735 = vunpack.c.l.b16 %v2703
  %v2736 = vunpack.c.l.b16 %v2704
  %v2737 = vunpack.c.l.b16 %v2705
  %v2738 = vunpack.c.l.b16 %v2706
  %v2739 = vunpack.c.l.b16 %v2707
  %v2740 = vunpack.c.l.b16 %v2708
  %v2741 = vpack.c.b16 %v2726, %v2725
  %v2742 = vpack.c.b16 %v2728, %v2727
  %v2743 = vpack.c.b16 %v2730, %v2729
  %v2744 = vpack.c.b16 %v2732, %v2731
  %v2745 = vpack.c.b16 %v2734, %v2733
  %v2746 = vpack.c.b16 %v2736, %v2735
  %v2747 = vpack.c.b16 %v2738, %v2737
  %v2748 = vpack.c.b16 %v2740, %v2739
  %2757 = vmatpush.bf16.msra.mxu0 %v2748
  %2758 = vmatpush.bf16.msra.mxu0 %v2747
  %2759 = vmatpush.bf16.msra.mxu0 %v2746
  %2760 = vmatpush.bf16.msra.mxu0 %v2745
  %2761 = vmatpush.bf16.msra.mxu0 %v2744
  %2762 = vmatpush.bf16.msra.mxu0 %v2743
  %2763 = vmatpush.bf16.msra.mxu0 %v2742
  %2764 = vmatpush.bf16.msra.mxu0 %v2741
  %2765 = vmatmul.bf16.gmra.mxu0 %v2442
  %v2766 = vpop.f32.mrf.mxu0
  %v2767 = vadd.f32 0.0, %v2766
  %v2768 = vpop.f32.mrf.mxu0
  %2769 = vdwg.mxu0
  %v2770 = vadd.f32 %v2692, %v2767
  %v2771 = vmul.f32 %v2770, 0.5
  %v2772 = vtanh.pop %v2771
  %v2773 = vmul.f32 %v2772, 0.5
  %v2774 = vadd.f32 %v2773, 0.5
  %v2775 = vmul.f32 %v2611, %v2439
  %v2776 = vmul.f32 %v2528, %v2691
  %v2777 = vadd.f32 %v2775, %v2776
  %v2778 = vtanh.pop %v2777
  %v2779 = vmul.f32 %v2774, %v2778
  %v2780 = vpack.c.bf16 %v2779, %v2779
  %s2781 = scalar_lea.vmem %s6, 24
  %2782 = vst [vmem:[%s2781] sm:$0xf] %v2780
  %s2783 = scalar_lea.vmem [#allocation2], 224
  %v2784 = vld [vmem:[%s2783] sm:$0xff]
  %v2785 = vld [vmem:[%s2] sm:$0xf]
  %v2786 = vld [vmem:[%s2 + $0x10] sm:$0xf]
  %v2787 = vld [vmem:[%s2 + $0x20] sm:$0xf]
  %v2788 = vld [vmem:[%s2 + $0x30] sm:$0xf]
  %v2789 = vld [vmem:[%s2 + $0x40] sm:$0xf]
  %v2790 = vld [vmem:[%s2 + $0x50] sm:$0xf]
  %v2791 = vld [vmem:[%s2 + $0x60] sm:$0xf]
  %v2792 = vld [vmem:[%s2 + $0x70] sm:$0xf]
  %v2793 = vld [vmem:[%s2 + $0x80] sm:$0xf]
  %v2794 = vld [vmem:[%s2 + $0x90] sm:$0xf]
  %v2795 = vld [vmem:[%s2 + $0xa0] sm:$0xf]
  %v2796 = vld [vmem:[%s2 + $0xb0] sm:$0xf]
  %v2797 = vld [vmem:[%s2 + $0xc0] sm:$0xf]
  %v2798 = vld [vmem:[%s2 + $0xd0] sm:$0xf]
  %v2799 = vld [vmem:[%s2 + $0xe0] sm:$0xf]
  %v2800 = vld [vmem:[%s2 + $0xf0] sm:$0xf]
  %v2817 = vunpack.c.l.b16 %v2785
  %v2818 = vunpack.c.l.b16 %v2786
  %v2819 = vunpack.c.l.b16 %v2787
  %v2820 = vunpack.c.l.b16 %v2788
  %v2821 = vunpack.c.l.b16 %v2789
  %v2822 = vunpack.c.l.b16 %v2790
  %v2823 = vunpack.c.l.b16 %v2791
  %v2824 = vunpack.c.l.b16 %v2792
  %v2825 = vunpack.c.l.b16 %v2793
  %v2826 = vunpack.c.l.b16 %v2794
  %v2827 = vunpack.c.l.b16 %v2795
  %v2828 = vunpack.c.l.b16 %v2796
  %v2829 = vunpack.c.l.b16 %v2797
  %v2830 = vunpack.c.l.b16 %v2798
  %v2831 = vunpack.c.l.b16 %v2799
  %v2832 = vunpack.c.l.b16 %v2800
  %v2833 = vpack.c.b16 %v2818, %v2817
  %v2834 = vpack.c.b16 %v2820, %v2819
  %v2835 = vpack.c.b16 %v2822, %v2821
  %v2836 = vpack.c.b16 %v2824, %v2823
  %v2837 = vpack.c.b16 %v2826, %v2825
  %v2838 = vpack.c.b16 %v2828, %v2827
  %v2839 = vpack.c.b16 %v2830, %v2829
  %v2840 = vpack.c.b16 %v2832, %v2831
  %2849 = vmatpush.bf16.msra.mxu0 %v2840
  %2850 = vmatpush.bf16.msra.mxu0 %v2839
  %2851 = vmatpush.bf16.msra.mxu0 %v2838
  %2852 = vmatpush.bf16.msra.mxu0 %v2837
  %2853 = vmatpush.bf16.msra.mxu0 %v2836
  %2854 = vmatpush.bf16.msra.mxu0 %v2835
  %2855 = vmatpush.bf16.msra.mxu0 %v2834
  %2856 = vmatpush.bf16.msra.mxu0 %v2833
  %2857 = vmatmul.bf16.gmra.mxu0 %v2780
  %v2858 = vpop.f32.mrf.mxu0
  %v2859 = vadd.f32 0.0, %v2858
  %v2860 = vpop.f32.mrf.mxu0
  %2861 = vdwg.mxu0
  %v2862 = vadd.f32 %v2784, %v2859
  %v2863 = vmul.f32 %v2862, 0.5
  %v2864 = vtanh.pop %v2863
  %v2865 = vmul.f32 %v2864, 0.5
  %v2866 = vadd.f32 %v2865, 0.5
  %v2867 = vld [vmem:[%s2783 + $0x8] sm:$0xff]
  %v2868 = vld [vmem:[%s2 + $0x4] sm:$0xf]
  %v2869 = vld [vmem:[%s2 + $0x14] sm:$0xf]
  %v2870 = vld [vmem:[%s2 + $0x24] sm:$0xf]
  %v2871 = vld [vmem:[%s2 + $0x34] sm:$0xf]
  %v2872 = vld [vmem:[%s2 + $0x44] sm:$0xf]
  %v2873 = vld [vmem:[%s2 + $0x54] sm:$0xf]
  %v2874 = vld [vmem:[%s2 + $0x64] sm:$0xf]
  %v2875 = vld [vmem:[%s2 + $0x74] sm:$0xf]
  %v2876 = vld [vmem:[%s2 + $0x84] sm:$0xf]
  %v2877 = vld [vmem:[%s2 + $0x94] sm:$0xf]
  %v2878 = vld [vmem:[%s2 + $0xa4] sm:$0xf]
  %v2879 = vld [vmem:[%s2 + $0xb4] sm:$0xf]
  %v2880 = vld [vmem:[%s2 + $0xc4] sm:$0xf]
  %v2881 = vld [vmem:[%s2 + $0xd4] sm:$0xf]
  %v2882 = vld [vmem:[%s2 + $0xe4] sm:$0xf]
  %v2883 = vld [vmem:[%s2 + $0xf4] sm:$0xf]
  %v2900 = vunpack.c.l.b16 %v2868
  %v2901 = vunpack.c.l.b16 %v2869
  %v2902 = vunpack.c.l.b16 %v2870
  %v2903 = vunpack.c.l.b16 %v2871
  %v2904 = vunpack.c.l.b16 %v2872
  %v2905 = vunpack.c.l.b16 %v2873
  %v2906 = vunpack.c.l.b16 %v2874
  %v2907 = vunpack.c.l.b16 %v2875
  %v2908 = vunpack.c.l.b16 %v2876
  %v2909 = vunpack.c.l.b16 %v2877
  %v2910 = vunpack.c.l.b16 %v2878
  %v2911 = vunpack.c.l.b16 %v2879
  %v2912 = vunpack.c.l.b16 %v2880
  %v2913 = vunpack.c.l.b16 %v2881
  %v2914 = vunpack.c.l.b16 %v2882
  %v2915 = vunpack.c.l.b16 %v2883
  %v2916 = vpack.c.b16 %v2901, %v2900
  %v2917 = vpack.c.b16 %v2903, %v2902
  %v2918 = vpack.c.b16 %v2905, %v2904
  %v2919 = vpack.c.b16 %v2907, %v2906
  %v2920 = vpack.c.b16 %v2909, %v2908
  %v2921 = vpack.c.b16 %v2911, %v2910
  %v2922 = vpack.c.b16 %v2913, %v2912
  %v2923 = vpack.c.b16 %v2915, %v2914
  %2932 = vmatpush.bf16.msra.mxu0 %v2923
  %2933 = vmatpush.bf16.msra.mxu0 %v2922
  %2934 = vmatpush.bf16.msra.mxu0 %v2921
  %2935 = vmatpush.bf16.msra.mxu0 %v2920
  %2936 = vmatpush.bf16.msra.mxu0 %v2919
  %2937 = vmatpush.bf16.msra.mxu0 %v2918
  %2938 = vmatpush.bf16.msra.mxu0 %v2917
  %2939 = vmatpush.bf16.msra.mxu0 %v2916
  %2940 = vmatmul.bf16.gmra.mxu0 %v2780
  %v2941 = vpop.f32.mrf.mxu0
  %v2942 = vadd.f32 0.0, %v2941
  %v2943 = vpop.f32.mrf.mxu0
  %2944 = vdwg.mxu0
  %v2945 = vadd.f32 %v2867, %v2942
  %v2946 = vmul.f32 %v2945, 0.5
  %v2947 = vtanh.pop %v2946
  %v2948 = vmul.f32 %v2947, 0.5
  %v2949 = vadd.f32 %v2948, 0.5
  %v2950 = vld [vmem:[%s2783 + $0x10] sm:$0xff]
  %v2951 = vld [vmem:[%s2 + $0x8] sm:$0xf]
  %v2952 = vld [vmem:[%s2 + $0x18] sm:$0xf]
  %v2953 = vld [vmem:[%s2 + $0x28] sm:$0xf]
  %v2954 = vld [vmem:[%s2 + $0x38] sm:$0xf]
  %v2955 = vld [vmem:[%s2 + $0x48] sm:$0xf]
  %v2956 = vld [vmem:[%s2 + $0x58] sm:$0xf]
  %v2957 = vld [vmem:[%s2 + $0x68] sm:$0xf]
  %v2958 = vld [vmem:[%s2 + $0x78] sm:$0xf]
  %v2959 = vld [vmem:[%s2 + $0x88] sm:$0xf]
  %v2960 = vld [vmem:[%s2 + $0x98] sm:$0xf]
  %v2961 = vld [vmem:[%s2 + $0xa8] sm:$0xf]
  %v2962 = vld [vmem:[%s2 + $0xb8] sm:$0xf]
  %v2963 = vld [vmem:[%s2 + $0xc8] sm:$0xf]
  %v2964 = vld [vmem:[%s2 + $0xd8] sm:$0xf]
  %v2965 = vld [vmem:[%s2 + $0xe8] sm:$0xf]
  %v2966 = vld [vmem:[%s2 + $0xf8] sm:$0xf]
  %v2983 = vunpack.c.l.b16 %v2951
  %v2984 = vunpack.c.l.b16 %v2952
  %v2985 = vunpack.c.l.b16 %v2953
  %v2986 = vunpack.c.l.b16 %v2954
  %v2987 = vunpack.c.l.b16 %v2955
  %v2988 = vunpack.c.l.b16 %v2956
  %v2989 = vunpack.c.l.b16 %v2957
  %v2990 = vunpack.c.l.b16 %v2958
  %v2991 = vunpack.c.l.b16 %v2959
  %v2992 = vunpack.c.l.b16 %v2960
  %v2993 = vunpack.c.l.b16 %v2961
  %v2994 = vunpack.c.l.b16 %v2962
  %v2995 = vunpack.c.l.b16 %v2963
  %v2996 = vunpack.c.l.b16 %v2964
  %v2997 = vunpack.c.l.b16 %v2965
  %v2998 = vunpack.c.l.b16 %v2966
  %v2999 = vpack.c.b16 %v2984, %v2983
  %v3000 = vpack.c.b16 %v2986, %v2985
  %v3001 = vpack.c.b16 %v2988, %v2987
  %v3002 = vpack.c.b16 %v2990, %v2989
  %v3003 = vpack.c.b16 %v2992, %v2991
  %v3004 = vpack.c.b16 %v2994, %v2993
  %v3005 = vpack.c.b16 %v2996, %v2995
  %v3006 = vpack.c.b16 %v2998, %v2997
  %3015 = vmatpush.bf16.msra.mxu0 %v3006
  %3016 = vmatpush.bf16.msra.mxu0 %v3005
  %3017 = vmatpush.bf16.msra.mxu0 %v3004
  %3018 = vmatpush.bf16.msra.mxu0 %v3003
  %3019 = vmatpush.bf16.msra.mxu0 %v3002
  %3020 = vmatpush.bf16.msra.mxu0 %v3001
  %3021 = vmatpush.bf16.msra.mxu0 %v3000
  %3022 = vmatpush.bf16.msra.mxu0 %v2999
  %3023 = vmatmul.bf16.gmra.mxu0 %v2780
  %v3024 = vpop.f32.mrf.mxu0
  %v3025 = vadd.f32 0.0, %v3024
  %v3026 = vpop.f32.mrf.mxu0
  %3027 = vdwg.mxu0
  %v3028 = vadd.f32 %v2950, %v3025
  %v3029 = vtanh.pop %v3028
  %v3030 = vld [vmem:[%s2783 + $0x18] sm:$0xff]
  %v3031 = vld [vmem:[%s2 + $0xc] sm:$0xf]
  %v3032 = vld [vmem:[%s2 + $0x1c] sm:$0xf]
  %v3033 = vld [vmem:[%s2 + $0x2c] sm:$0xf]
  %v3034 = vld [vmem:[%s2 + $0x3c] sm:$0xf]
  %v3035 = vld [vmem:[%s2 + $0x4c] sm:$0xf]
  %v3036 = vld [vmem:[%s2 + $0x5c] sm:$0xf]
  %v3037 = vld [vmem:[%s2 + $0x6c] sm:$0xf]
  %v3038 = vld [vmem:[%s2 + $0x7c] sm:$0xf]
  %v3039 = vld [vmem:[%s2 + $0x8c] sm:$0xf]
  %v3040 = vld [vmem:[%s2 + $0x9c] sm:$0xf]
  %v3041 = vld [vmem:[%s2 + $0xac] sm:$0xf]
  %v3042 = vld [vmem:[%s2 + $0xbc] sm:$0xf]
  %v3043 = vld [vmem:[%s2 + $0xcc] sm:$0xf]
  %v3044 = vld [vmem:[%s2 + $0xdc] sm:$0xf]
  %v3045 = vld [vmem:[%s2 + $0xec] sm:$0xf]
  %v3046 = vld [vmem:[%s2 + $0xfc] sm:$0xf]
  %v3063 = vunpack.c.l.b16 %v3031
  %v3064 = vunpack.c.l.b16 %v3032
  %v3065 = vunpack.c.l.b16 %v3033
  %v3066 = vunpack.c.l.b16 %v3034
  %v3067 = vunpack.c.l.b16 %v3035
  %v3068 = vunpack.c.l.b16 %v3036
  %v3069 = vunpack.c.l.b16 %v3037
  %v3070 = vunpack.c.l.b16 %v3038
  %v3071 = vunpack.c.l.b16 %v3039
  %v3072 = vunpack.c.l.b16 %v3040
  %v3073 = vunpack.c.l.b16 %v3041
  %v3074 = vunpack.c.l.b16 %v3042
  %v3075 = vunpack.c.l.b16 %v3043
  %v3076 = vunpack.c.l.b16 %v3044
  %v3077 = vunpack.c.l.b16 %v3045
  %v3078 = vunpack.c.l.b16 %v3046
  %v3079 = vpack.c.b16 %v3064, %v3063
  %v3080 = vpack.c.b16 %v3066, %v3065
  %v3081 = vpack.c.b16 %v3068, %v3067
  %v3082 = vpack.c.b16 %v3070, %v3069
  %v3083 = vpack.c.b16 %v3072, %v3071
  %v3084 = vpack.c.b16 %v3074, %v3073
  %v3085 = vpack.c.b16 %v3076, %v3075
  %v3086 = vpack.c.b16 %v3078, %v3077
  %3095 = vmatpush.bf16.msra.mxu0 %v3086
  %3096 = vmatpush.bf16.msra.mxu0 %v3085
  %3097 = vmatpush.bf16.msra.mxu0 %v3084
  %3098 = vmatpush.bf16.msra.mxu0 %v3083
  %3099 = vmatpush.bf16.msra.mxu0 %v3082
  %3100 = vmatpush.bf16.msra.mxu0 %v3081
  %3101 = vmatpush.bf16.msra.mxu0 %v3080
  %3102 = vmatpush.bf16.msra.mxu0 %v3079
  %3103 = vmatmul.bf16.gmra.mxu0 %v2780
  %v3104 = vpop.f32.mrf.mxu0
  %v3105 = vadd.f32 0.0, %v3104
  %v3106 = vpop.f32.mrf.mxu0
  %3107 = vdwg.mxu0
  %v3108 = vadd.f32 %v3030, %v3105
  %v3109 = vmul.f32 %v3108, 0.5
  %v3110 = vtanh.pop %v3109
  %v3111 = vmul.f32 %v3110, 0.5
  %v3112 = vadd.f32 %v3111, 0.5
  %v3113 = vmul.f32 %v2949, %v2777
  %v3114 = vmul.f32 %v2866, %v3029
  %v3115 = vadd.f32 %v3113, %v3114
  %v3116 = vtanh.pop %v3115
  %v3117 = vmul.f32 %v3112, %v3116
  %v3118 = vpack.c.bf16 %v3117, %v3117
  %s3119 = scalar_lea.vmem %s6, 28
  %3120 = vst [vmem:[%s3119] sm:$0xf] %v3118
  %3121 = vst [vmem:[#allocation3] sm:$0xff] %v3117
  %3122 = vst [vmem:[#allocation4] sm:$0xff] %v3115
  // Predicated region
  $region30: #{torch_lstm_forward.3} parent=0 // pred_check
    %p3123 = pneg %p26
  $region31: #{torch_lstm_forward.3} parent=0 // pred_check_branch
    %3125 = sbr.rel (%p3123) target = $region33
  $region32: #{torch_lstm_forward.3} parent=0 // pred_region
    %3126 = vst [vmem:[%s7] sm:$0xff] %v3117
    %3127 = vst [vmem:[%s8] sm:$0xff] %v3115
  $region33: #{torch_lstm_forward.3} parent=0 // pred_fallthru
    _
  // Predicated region
  $region34: #{torch_lstm_forward.3} parent=0 // pred_check
    _
  $region35: #{torch_lstm_forward.3} parent=0 // pred_check_branch
    %3129 = sbr.rel (0) target = $region37
  $region36: #{torch_lstm_forward.3} parent=0 // pred_region
    _
  $region37: #{torch_lstm_forward.3} parent=0 // pred_fallthru
    _
  // Predicated region
  $region38: #{torch_lstm_forward.3} parent=0 // pred_check
    _
  $region39: #{torch_lstm_forward.3} parent=0 // pred_check_branch
    %3131 = sbr.rel (0) target = $region41
  $region40: #{torch_lstm_forward.3} parent=0 // pred_region
    _
  $region41: #{torch_lstm_forward.3} parent=0 // pred_fallthru
    _
  // Predicated region
  $region42: #{torch_lstm_forward.3} parent=0 // pred_check
    _
  $region43: #{torch_lstm_forward.3} parent=0 // pred_check_branch
    %3133 = sbr.rel (0) target = $region45
  $region44: #{torch_lstm_forward.3} parent=0 // pred_region
    _
  $region45: #{torch_lstm_forward.3} parent=0 // pred_fallthru
    _
  // Predicated region
  $region46: #{torch_lstm_forward.3} parent=0 // pred_check
    _
  $region47: #{torch_lstm_forward.3} parent=0 // pred_check_branch
    %3135 = sbr.rel (0) target = $region49
  $region48: #{torch_lstm_forward.3} parent=0 // pred_region
    _
  $region49: #{torch_lstm_forward.3} parent=0 // pred_fallthru
    _
  // Predicated region
  $region50: #{torch_lstm_forward.3} parent=0 // pred_check
    _
  $region51: #{torch_lstm_forward.3} parent=0 // pred_check_branch
    %3137 = sbr.rel (0) target = $region53
  $region52: #{torch_lstm_forward.3} parent=0 // pred_region
    _
  $region53: #{torch_lstm_forward.3} parent=0 // pred_fallthru
    _
  // Predicated region
  $region54: #{torch_lstm_forward.3} parent=0 // pred_check
    _
  $region55: #{torch_lstm_forward.3} parent=0 // pred_check_branch
    %3139 = sbr.rel (0) target = $region57
  $region56: #{torch_lstm_forward.3} parent=0 // pred_region
    _
  $region57: #{torch_lstm_forward.3} parent=0 // pred_fallthru
    _

</llo_original>
